<compile_context>
chip_gen: v7x
topology: tpu7x:2x2x1
jax: 0.10.0
libtpu: 0.0.40
codegen_flags: <defaults>
</compile_context>

<pallas_src>
import functools

import numpy as np
import jax
import jax.numpy as jnp
from jax.experimental import pallas as pl
from jax.experimental.pallas import tpu as pltpu

EPS = 1e-5


def _round_up(v, m):
    return ((v + m - 1) // m) * m


def lastconv_kernel(x_ref, b1_ref, b2_ref, g1_ref, be1_ref, g2_ref, be2_ref,
                    s_ref, st_ref, o_ref, *, count):
    """Fused DoubleConv forward.

    x_ref  : (N, H, L1p)   bf16 row-packed input (lane = w*Cin+ci), lanes zero-padded
                                to a multiple of 128; NO H halo (handled in-kernel).
    b1_ref : (3, L1p, Lp)  bf16 conv1 band matrices (one per kernel row ky)
    b2_ref : (3, Lp,  Lp)  bf16 conv2 band matrices
    g*/be* : (1, Cout)     f32  BatchNorm affine params
    s_ref  : (Lp, Cout)    f32  lane -> channel selection (per-channel BN sums)
    st_ref : (Cout, Lp)    f32  channel -> lane broadcast (transpose of s_ref)
    o_ref  : (N*H, Lp)     f32  lane-dense output slab
    """
    N, H, L1 = x_ref.shape
    NH, Lp = o_ref.shape

    S = s_ref[...]
    ST = st_ref[...]
    inv_count = 1.0 / count
    hi = jax.lax.Precision.HIGHEST  # keep the tiny BN-stat matmuls effectively exact
    zrow = jnp.zeros((N, 1, Lp), jnp.float32)

    def bn_relu(y, gamma, beta):
        # Single-pass training-mode BatchNorm2d (biased variance) + ReLU, per channel.
        # Glue matmuls are batched: one (2,Lp)@(Lp,Cout) dot and one (2,Cout)@(Cout,Lp).
        stats = jnp.concatenate(
            [jnp.sum(y, axis=0, keepdims=True),
             jnp.sum(y * y, axis=0, keepdims=True)], axis=0)            # (2, Lp)
        ch = jnp.dot(stats, S, precision=hi,
                     preferred_element_type=jnp.float32)                # (2, Cout)
        mean = ch[0:1, :] * inv_count
        var = jnp.maximum(ch[1:2, :] * inv_count - mean * mean, 0.0)    # clamp: no NaN
        scale = gamma * jax.lax.rsqrt(var + EPS)                        # (1, Cout)
        shift = beta - mean * scale                                     # conv bias folds here (==0)
        lane = jnp.dot(jnp.concatenate([scale, shift], axis=0), ST,
                       precision=hi, preferred_element_type=jnp.float32)  # (2, Lp)
        return jnp.maximum(y * lane[0:1, :] + lane[1:2, :], 0.0)

    def conv3x3(x_bf, band_ref):
        # x_bf: (NH, K) bf16 (cast exactly once); band_ref: (3, K, Lp) bf16.
        # The three ky taps reuse the SAME unshifted operand; the 'same' H padding /
        # row shift is applied to the f32 outputs (two cheap sublane-shifted adds),
        # avoiding shifted bf16 input copies and any packed-dtype relayout.
        t0 = jnp.dot(x_bf, band_ref[0],
                     preferred_element_type=jnp.float32).reshape(N, H, Lp)
        t1 = jnp.dot(x_bf, band_ref[1],
                     preferred_element_type=jnp.float32).reshape(N, H, Lp)
        t2 = jnp.dot(x_bf, band_ref[2],
                     preferred_element_type=jnp.float32).reshape(N, H, Lp)
        down = jnp.concatenate([zrow, t0[:, :H - 1, :]], axis=1)        # t0[h-1]
        up = jnp.concatenate([t2[:, 1:, :], zrow], axis=1)              # t2[h+1]
        return (t1 + down + up).reshape(NH, Lp)

    # ---- conv1 (input already bf16; loaded once, no per-ky casts/copies) ----
    acc1 = conv3x3(x_ref[...].reshape(NH, L1), b1_ref)
    a1 = bn_relu(acc1, g1_ref[...], be1_ref[...])                       # (NH, Lp) f32

    # ---- conv2 (single bf16 cast of the activation) ----
    acc2 = conv3x3(a1.astype(jnp.bfloat16), b2_ref)
    o_ref[...] = bn_relu(acc2, g2_ref[...], be2_ref[...])


@jax.jit
def lastconv_forward(x_nchw, w1_oihw, b1, g1, be1, w2_oihw, b2, g2, be2):
    # Conv biases are exactly cancelled by the training-mode BN mean subtraction -> drop
    # them.  (If eval-mode BN with running stats is ever needed, restore the biases.)
    del b1, b2

    N, Cin, H, W = x_nchw.shape
    Cout = w1_oihw.shape[0]
    L1 = W * Cin
    Lout = W * Cout
    L1p = _round_up(L1, 128)          # lane-dense operand width for conv1
    Lp = _round_up(Lout, 128)         # lane-dense activation/output width (here 128)

    # Static shift matrices: E[kx, w_in, w_out] = 1 iff w_in == w_out + kx - 1 (in range).
    E_np = np.zeros((3, W, W), np.float32)
    for kx in range(3):
        for wo in range(W):
            wi = wo + kx - 1
            if 0 <= wi < W:
                E_np[kx, wi, wo] = 1.0
    E = jnp.asarray(E_np)

    def make_band(w_oihw, l_in_pad):
        ci = w_oihw.shape[1]
        K = jnp.transpose(w_oihw, (2, 3, 1, 0)).astype(jnp.float32)    # (ky, kx, ci, co)
        band = jnp.einsum('xab,yxio->yaibo', E, K)                     # (3, W, ci, W, Cout)
        band = band.reshape(3, W * ci, W * Cout)
        band = jnp.pad(band, ((0, 0), (0, l_in_pad - W * ci), (0, Lp - W * Cout)))
        return band.astype(jnp.bfloat16)

    band1 = make_band(w1_oihw, L1p)                                    # (3, L1p, Lp)
    band2 = make_band(w2_oihw, Lp)                                     # (3, Lp,  Lp)

    # Lane -> channel selection for per-channel BN stats (padding lanes contribute 0).
    S_np = np.zeros((Lp, Cout), np.float32)
    S_np[:Lout, :] = np.tile(np.eye(Cout, dtype=np.float32), (W, 1))
    S = jnp.asarray(S_np)
    ST = jnp.asarray(np.ascontiguousarray(S_np.T))

    # Row-packed bf16 input: (N, H, L1p), lane zero-padded; no H halo rows shipped.
    x_rows = jnp.transpose(x_nchw, (0, 2, 3, 1)).reshape(N, H, L1)
    x_rows = jnp.pad(x_rows, ((0, 0), (0, 0), (0, L1p - L1))).astype(jnp.bfloat16)

    def chan(p):
        return p.reshape(1, Cout).astype(jnp.float32)

    # Right-size the VMEM request to the actual buffer footprint (+headroom) instead
    # of asking for 64 MiB (== all of v7x's physical VMEM per TensorCore).
    buf_bytes = (N * H * L1p * 2                # x (bf16)
                 + 3 * L1p * Lp * 2             # band1 (bf16)
                 + 3 * Lp * Lp * 2              # band2 (bf16)
                 + 4 * Cout * 4                 # gamma/beta x2 (f32)
                 + 2 * Lp * Cout * 4            # S, ST (f32)
                 + N * H * Lp * 4)              # output (f32)
    vmem_limit = int(min(32 * 1024 * 1024, max(8 * 1024 * 1024, 4 * buf_bytes)))

    vmem = pl.BlockSpec(memory_space=pltpu.MemorySpace.VMEM)
    out_rows = pl.pallas_call(
        functools.partial(lastconv_kernel, count=float(N * H * W)),
        out_shape=jax.ShapeDtypeStruct((N * H, Lp), jnp.float32),
        in_specs=[vmem] * 9,
        out_specs=vmem,
        compiler_params=pltpu.CompilerParams(vmem_limit_bytes=vmem_limit),
    )(x_rows, band1, band2, chan(g1), chan(be1), chan(g2), chan(be2), S, ST)

    out = out_rows[:, :Lout].reshape(N, H, W, Cout)
    return jnp.transpose(out, (0, 3, 1, 2))                            # back to NCHW


def _reference(x_nchw, w1, b1, g1, be1, w2, b2, g2, be2):
    """Pure-JAX f32 reference (lax.conv) matching PyTorch training-mode semantics."""
    def conv(x, w, b):
        y = jax.lax.conv_general_dilated(
            x, w, window_strides=(1, 1), padding=((1, 1), (1, 1)),
            dimension_numbers=('NCHW', 'OIHW', 'NCHW'))
        return y + b.reshape(1, -1, 1, 1)

    def bn_relu(y, g, be):
        mean = jnp.mean(y, axis=(0, 2, 3), keepdims=True)
        var = jnp.mean((y - mean) ** 2, axis=(0, 2, 3), keepdims=True)
        yn = (y - mean) * jax.lax.rsqrt(var + EPS)
        return jnp.maximum(yn * g.reshape(1, -1, 1, 1) + be.reshape(1, -1, 1, 1), 0.0)

    y = bn_relu(conv(x_nchw, w1, b1), g1, be1)
    return bn_relu(conv(y, w2, b2), g2, be2)


if __name__ == "__main__":
    # small shapes consistent with the module: N=2, in_channels=4, out_channels=8, H=W=16
    N, Cin, Cout, H, W = 2, 4, 8, 16, 16

    key = jax.random.PRNGKey(0)
    k1, k2, k3, k4, k5, k6, k7, k8, kx = jax.random.split(key, 9)

    w1 = jax.random.normal(k1, (Cout, Cin, 3, 3), jnp.float32) * 0.1   # Conv2d weight (OIHW)
    b1 = jax.random.normal(k2, (Cout,), jnp.float32) * 0.1             # Conv2d bias
    g1 = 1.0 + 0.1 * jax.random.normal(k5, (Cout,), jnp.float32)       # BatchNorm2d weight
    be1 = 0.1 * jax.random.normal(k6, (Cout,), jnp.float32)            # BatchNorm2d bias
    w2 = jax.random.normal(k3, (Cout, Cout, 3, 3), jnp.float32) * 0.1
    b2 = jax.random.normal(k4, (Cout,), jnp.float32) * 0.1
    g2 = 1.0 + 0.1 * jax.random.normal(k7, (Cout,), jnp.float32)
    be2 = 0.1 * jax.random.normal(k8, (Cout,), jnp.float32)

    x = jax.random.normal(kx, (N, Cin, H, W), jnp.float32)             # PyTorch NCHW input

    out = lastconv_forward(x, w1, b1, g1, be1, w2, b2, g2, be2)
    out = jax.block_until_ready(out)

    ref = _reference(x, w1, b1, g1, be1, w2, b2, g2, be2)
    assert out.shape == (N, Cout, H, W), out.shape
    err = float(jnp.max(jnp.abs(out - ref)))
    # bf16 MXU operands (f32 accumulation) vs full-f32 reference -> small rounding budget.
    assert err < 5e-2, err

    print("KERNEL_OK")
</pallas_src>

<mosaic_0001>
module attributes {stable_mosaic.version = 11 : i64} {
  func.func @lastconv_kernel(%arg0: memref<2x16x128xbf16, #tpu.memory_space<vmem>>, %arg1: memref<3x128x128xbf16, #tpu.memory_space<vmem>>, %arg2: memref<3x128x128xbf16, #tpu.memory_space<vmem>>, %arg3: memref<1x8xf32, #tpu.memory_space<vmem>>, %arg4: memref<1x8xf32, #tpu.memory_space<vmem>>, %arg5: memref<1x8xf32, #tpu.memory_space<vmem>>, %arg6: memref<1x8xf32, #tpu.memory_space<vmem>>, %arg7: memref<128x8xf32, #tpu.memory_space<vmem>>, %arg8: memref<8x128xf32, #tpu.memory_space<vmem>>, %arg9: memref<32x128xf32, #tpu.memory_space<vmem>>) attributes {dimension_semantics = [], scalar_prefetch = 0 : i64, scratch_operands = 0 : i64, tpu.core_type = #tpu.core_type<tc>} {
    %c0 = arith.constant 0 : index
    %c0_0 = arith.constant 0 : index
    %0 = vector.load %arg7[%c0, %c0_0] : memref<128x8xf32, #tpu.memory_space<vmem>>, vector<128x8xf32>
    %c0_1 = arith.constant 0 : index
    %c0_2 = arith.constant 0 : index
    %1 = vector.load %arg8[%c0_1, %c0_2] : memref<8x128xf32, #tpu.memory_space<vmem>>, vector<8x128xf32>
    %cst = arith.constant 0.000000e+00 : f32
    %2 = vector.broadcast %cst : f32 to vector<2x1x128xf32>
    %c0_3 = arith.constant 0 : index
    %c0_4 = arith.constant 0 : index
    %c0_5 = arith.constant 0 : index
    %3 = vector.load %arg0[%c0_3, %c0_4, %c0_5] : memref<2x16x128xbf16, #tpu.memory_space<vmem>>, vector<2x16x128xbf16>
    %4 = vector.shape_cast %3 : vector<2x16x128xbf16> to vector<32x128xbf16>
    %c0_6 = arith.constant 0 : index
    %c0_7 = arith.constant 0 : index
    %c0_8 = arith.constant 0 : index
    %5 = vector.load %arg1[%c0_6, %c0_7, %c0_8] : memref<3x128x128xbf16, #tpu.memory_space<vmem>>, vector<1x128x128xbf16>
    %6 = vector.shape_cast %5 : vector<1x128x128xbf16> to vector<128x128xbf16>
    %cst_9 = arith.constant dense<0.000000e+00> : vector<32x128xf32>
    %7 = tpu.matmul %4, %6, %cst_9 {dimension_numbers = #tpu.dot_dimension_numbers<[1], [0], [0], [1], [0, 0, 1, 1], [], []>} : vector<32x128xbf16>, vector<128x128xbf16>, vector<32x128xf32> -> vector<32x128xf32>
    %8 = vector.shape_cast %7 : vector<32x128xf32> to vector<2x16x128xf32>
    %c1 = arith.constant 1 : index
    %c0_10 = arith.constant 0 : index
    %c0_11 = arith.constant 0 : index
    %9 = vector.load %arg1[%c1, %c0_10, %c0_11] : memref<3x128x128xbf16, #tpu.memory_space<vmem>>, vector<1x128x128xbf16>
    %10 = vector.shape_cast %9 : vector<1x128x128xbf16> to vector<128x128xbf16>
    %cst_12 = arith.constant dense<0.000000e+00> : vector<32x128xf32>
    %11 = tpu.matmul %4, %10, %cst_12 {dimension_numbers = #tpu.dot_dimension_numbers<[1], [0], [0], [1], [0, 0, 1, 1], [], []>} : vector<32x128xbf16>, vector<128x128xbf16>, vector<32x128xf32> -> vector<32x128xf32>
    %12 = vector.shape_cast %11 : vector<32x128xf32> to vector<2x16x128xf32>
    %c2 = arith.constant 2 : index
    %c0_13 = arith.constant 0 : index
    %c0_14 = arith.constant 0 : index
    %13 = vector.load %arg1[%c2, %c0_13, %c0_14] : memref<3x128x128xbf16, #tpu.memory_space<vmem>>, vector<1x128x128xbf16>
    %14 = vector.shape_cast %13 : vector<1x128x128xbf16> to vector<128x128xbf16>
    %cst_15 = arith.constant dense<0.000000e+00> : vector<32x128xf32>
    %15 = tpu.matmul %4, %14, %cst_15 {dimension_numbers = #tpu.dot_dimension_numbers<[1], [0], [0], [1], [0, 0, 1, 1], [], []>} : vector<32x128xbf16>, vector<128x128xbf16>, vector<32x128xf32> -> vector<32x128xf32>
    %16 = vector.shape_cast %15 : vector<32x128xf32> to vector<2x16x128xf32>
    %17 = vector.extract_strided_slice %8 {offsets = [0, 0, 0], sizes = [2, 15, 128], strides = [1, 1, 1]} : vector<2x16x128xf32> to vector<2x15x128xf32>
    %18 = tpu.concatenate %2, %17 in 1 : vector<2x1x128xf32>, vector<2x15x128xf32> -> vector<2x16x128xf32>
    %19 = vector.extract_strided_slice %16 {offsets = [0, 1, 0], sizes = [2, 15, 128], strides = [1, 1, 1]} : vector<2x16x128xf32> to vector<2x15x128xf32>
    %20 = tpu.concatenate %19, %2 in 1 : vector<2x15x128xf32>, vector<2x1x128xf32> -> vector<2x16x128xf32>
    %21 = arith.addf %12, %18 : vector<2x16x128xf32>
    %22 = arith.addf %21, %20 : vector<2x16x128xf32>
    %23 = vector.shape_cast %22 : vector<2x16x128xf32> to vector<32x128xf32>
    %c0_16 = arith.constant 0 : index
    %c0_17 = arith.constant 0 : index
    %24 = vector.load %arg3[%c0_16, %c0_17] : memref<1x8xf32, #tpu.memory_space<vmem>>, vector<1x8xf32>
    %c0_18 = arith.constant 0 : index
    %c0_19 = arith.constant 0 : index
    %25 = vector.load %arg4[%c0_18, %c0_19] : memref<1x8xf32, #tpu.memory_space<vmem>>, vector<1x8xf32>
    %cst_20 = arith.constant dense<0.000000e+00> : vector<128xf32>
    %26 = vector.multi_reduction <add>, %23, %cst_20 [0] : vector<32x128xf32> to vector<128xf32>
    %27 = vector.shape_cast %26 : vector<128xf32> to vector<1x128xf32>
    %28 = arith.mulf %23, %23 : vector<32x128xf32>
    %cst_21 = arith.constant dense<0.000000e+00> : vector<128xf32>
    %29 = vector.multi_reduction <add>, %28, %cst_21 [0] : vector<32x128xf32> to vector<128xf32>
    %30 = vector.shape_cast %29 : vector<128xf32> to vector<1x128xf32>
    %31 = tpu.concatenate %27, %30 in 0 : vector<1x128xf32>, vector<1x128xf32> -> vector<2x128xf32>
    %cst_22 = arith.constant dense<0.000000e+00> : vector<2x8xf32>
    %32 = tpu.matmul %31, %0, %cst_22 {dimension_numbers = #tpu.dot_dimension_numbers<[1], [0], [0], [1], [0, 0, 1, 1], [], []>, precision = #tpu.contract_precision<fp32>} : vector<2x128xf32>, vector<128x8xf32>, vector<2x8xf32> -> vector<2x8xf32>
    %33 = vector.extract_strided_slice %32 {offsets = [0, 0], sizes = [1, 8], strides = [1, 1]} : vector<2x8xf32> to vector<1x8xf32>
    %cst_23 = arith.constant 0.001953125 : f32
    %34 = vector.broadcast %cst_23 : f32 to vector<1x8xf32>
    %35 = arith.mulf %33, %34 : vector<1x8xf32>
    %36 = vector.extract_strided_slice %32 {offsets = [1, 0], sizes = [1, 8], strides = [1, 1]} : vector<2x8xf32> to vector<1x8xf32>
    %cst_24 = arith.constant 0.001953125 : f32
    %37 = vector.broadcast %cst_24 : f32 to vector<1x8xf32>
    %38 = arith.mulf %36, %37 : vector<1x8xf32>
    %39 = arith.mulf %35, %35 : vector<1x8xf32>
    %40 = arith.subf %38, %39 : vector<1x8xf32>
    %cst_25 = arith.constant 0.000000e+00 : f32
    %41 = vector.broadcast %cst_25 : f32 to vector<1x8xf32>
    %42 = arith.maximumf %40, %41 : vector<1x8xf32>
    %cst_26 = arith.constant 9.99999974E-6 : f32
    %43 = vector.broadcast %cst_26 : f32 to vector<1x8xf32>
    %44 = arith.addf %42, %43 : vector<1x8xf32>
    %45 = math.rsqrt %44 : vector<1x8xf32>
    %46 = arith.mulf %24, %45 : vector<1x8xf32>
    %47 = arith.mulf %35, %46 : vector<1x8xf32>
    %48 = arith.subf %25, %47 : vector<1x8xf32>
    %49 = tpu.concatenate %46, %48 in 0 : vector<1x8xf32>, vector<1x8xf32> -> vector<2x8xf32>
    %cst_27 = arith.constant dense<0.000000e+00> : vector<2x128xf32>
    %50 = tpu.matmul %49, %1, %cst_27 {dimension_numbers = #tpu.dot_dimension_numbers<[1], [0], [0], [1], [0, 0, 1, 1], [], []>, precision = #tpu.contract_precision<fp32>} : vector<2x8xf32>, vector<8x128xf32>, vector<2x128xf32> -> vector<2x128xf32>
    %51 = vector.extract_strided_slice %50 {offsets = [0, 0], sizes = [1, 128], strides = [1, 1]} : vector<2x128xf32> to vector<1x128xf32>
    %52 = vector.broadcast %51 : vector<1x128xf32> to vector<32x128xf32>
    %53 = arith.mulf %23, %52 : vector<32x128xf32>
    %54 = vector.extract_strided_slice %50 {offsets = [1, 0], sizes = [1, 128], strides = [1, 1]} : vector<2x128xf32> to vector<1x128xf32>
    %55 = vector.broadcast %54 : vector<1x128xf32> to vector<32x128xf32>
    %56 = arith.addf %53, %55 : vector<32x128xf32>
    %cst_28 = arith.constant 0.000000e+00 : f32
    %57 = vector.broadcast %cst_28 : f32 to vector<32x128xf32>
    %58 = arith.maximumf %56, %57 : vector<32x128xf32>
    %59 = arith.truncf %58 : vector<32x128xf32> to vector<32x128xbf16>
    %c0_29 = arith.constant 0 : index
    %c0_30 = arith.constant 0 : index
    %c0_31 = arith.constant 0 : index
    %60 = vector.load %arg2[%c0_29, %c0_30, %c0_31] : memref<3x128x128xbf16, #tpu.memory_space<vmem>>, vector<1x128x128xbf16>
    %61 = vector.shape_cast %60 : vector<1x128x128xbf16> to vector<128x128xbf16>
    %cst_32 = arith.constant dense<0.000000e+00> : vector<32x128xf32>
    %62 = tpu.matmul %59, %61, %cst_32 {dimension_numbers = #tpu.dot_dimension_numbers<[1], [0], [0], [1], [0, 0, 1, 1], [], []>} : vector<32x128xbf16>, vector<128x128xbf16>, vector<32x128xf32> -> vector<32x128xf32>
    %63 = vector.shape_cast %62 : vector<32x128xf32> to vector<2x16x128xf32>
    %c1_33 = arith.constant 1 : index
    %c0_34 = arith.constant 0 : index
    %c0_35 = arith.constant 0 : index
    %64 = vector.load %arg2[%c1_33, %c0_34, %c0_35] : memref<3x128x128xbf16, #tpu.memory_space<vmem>>, vector<1x128x128xbf16>
    %65 = vector.shape_cast %64 : vector<1x128x128xbf16> to vector<128x128xbf16>
    %cst_36 = arith.constant dense<0.000000e+00> : vector<32x128xf32>
    %66 = tpu.matmul %59, %65, %cst_36 {dimension_numbers = #tpu.dot_dimension_numbers<[1], [0], [0], [1], [0, 0, 1, 1], [], []>} : vector<32x128xbf16>, vector<128x128xbf16>, vector<32x128xf32> -> vector<32x128xf32>
    %67 = vector.shape_cast %66 : vector<32x128xf32> to vector<2x16x128xf32>
    %c2_37 = arith.constant 2 : index
    %c0_38 = arith.constant 0 : index
    %c0_39 = arith.constant 0 : index
    %68 = vector.load %arg2[%c2_37, %c0_38, %c0_39] : memref<3x128x128xbf16, #tpu.memory_space<vmem>>, vector<1x128x128xbf16>
    %69 = vector.shape_cast %68 : vector<1x128x128xbf16> to vector<128x128xbf16>
    %cst_40 = arith.constant dense<0.000000e+00> : vector<32x128xf32>
    %70 = tpu.matmul %59, %69, %cst_40 {dimension_numbers = #tpu.dot_dimension_numbers<[1], [0], [0], [1], [0, 0, 1, 1], [], []>} : vector<32x128xbf16>, vector<128x128xbf16>, vector<32x128xf32> -> vector<32x128xf32>
    %71 = vector.shape_cast %70 : vector<32x128xf32> to vector<2x16x128xf32>
    %72 = vector.extract_strided_slice %63 {offsets = [0, 0, 0], sizes = [2, 15, 128], strides = [1, 1, 1]} : vector<2x16x128xf32> to vector<2x15x128xf32>
    %73 = tpu.concatenate %2, %72 in 1 : vector<2x1x128xf32>, vector<2x15x128xf32> -> vector<2x16x128xf32>
    %74 = vector.extract_strided_slice %71 {offsets = [0, 1, 0], sizes = [2, 15, 128], strides = [1, 1, 1]} : vector<2x16x128xf32> to vector<2x15x128xf32>
    %75 = tpu.concatenate %74, %2 in 1 : vector<2x15x128xf32>, vector<2x1x128xf32> -> vector<2x16x128xf32>
    %76 = arith.addf %67, %73 : vector<2x16x128xf32>
    %77 = arith.addf %76, %75 : vector<2x16x128xf32>
    %78 = vector.shape_cast %77 : vector<2x16x128xf32> to vector<32x128xf32>
    %c0_41 = arith.constant 0 : index
    %c0_42 = arith.constant 0 : index
    %79 = vector.load %arg5[%c0_41, %c0_42] : memref<1x8xf32, #tpu.memory_space<vmem>>, vector<1x8xf32>
    %c0_43 = arith.constant 0 : index
    %c0_44 = arith.constant 0 : index
    %80 = vector.load %arg6[%c0_43, %c0_44] : memref<1x8xf32, #tpu.memory_space<vmem>>, vector<1x8xf32>
    %cst_45 = arith.constant dense<0.000000e+00> : vector<128xf32>
    %81 = vector.multi_reduction <add>, %78, %cst_45 [0] : vector<32x128xf32> to vector<128xf32>
    %82 = vector.shape_cast %81 : vector<128xf32> to vector<1x128xf32>
    %83 = arith.mulf %78, %78 : vector<32x128xf32>
    %cst_46 = arith.constant dense<0.000000e+00> : vector<128xf32>
    %84 = vector.multi_reduction <add>, %83, %cst_46 [0] : vector<32x128xf32> to vector<128xf32>
    %85 = vector.shape_cast %84 : vector<128xf32> to vector<1x128xf32>
    %86 = tpu.concatenate %82, %85 in 0 : vector<1x128xf32>, vector<1x128xf32> -> vector<2x128xf32>
    %cst_47 = arith.constant dense<0.000000e+00> : vector<2x8xf32>
    %87 = tpu.matmul %86, %0, %cst_47 {dimension_numbers = #tpu.dot_dimension_numbers<[1], [0], [0], [1], [0, 0, 1, 1], [], []>, precision = #tpu.contract_precision<fp32>} : vector<2x128xf32>, vector<128x8xf32>, vector<2x8xf32> -> vector<2x8xf32>
    %88 = vector.extract_strided_slice %87 {offsets = [0, 0], sizes = [1, 8], strides = [1, 1]} : vector<2x8xf32> to vector<1x8xf32>
    %cst_48 = arith.constant 0.001953125 : f32
    %89 = vector.broadcast %cst_48 : f32 to vector<1x8xf32>
    %90 = arith.mulf %88, %89 : vector<1x8xf32>
    %91 = vector.extract_strided_slice %87 {offsets = [1, 0], sizes = [1, 8], strides = [1, 1]} : vector<2x8xf32> to vector<1x8xf32>
    %cst_49 = arith.constant 0.001953125 : f32
    %92 = vector.broadcast %cst_49 : f32 to vector<1x8xf32>
    %93 = arith.mulf %91, %92 : vector<1x8xf32>
    %94 = arith.mulf %90, %90 : vector<1x8xf32>
    %95 = arith.subf %93, %94 : vector<1x8xf32>
    %cst_50 = arith.constant 0.000000e+00 : f32
    %96 = vector.broadcast %cst_50 : f32 to vector<1x8xf32>
    %97 = arith.maximumf %95, %96 : vector<1x8xf32>
    %cst_51 = arith.constant 9.99999974E-6 : f32
    %98 = vector.broadcast %cst_51 : f32 to vector<1x8xf32>
    %99 = arith.addf %97, %98 : vector<1x8xf32>
    %100 = math.rsqrt %99 : vector<1x8xf32>
    %101 = arith.mulf %79, %100 : vector<1x8xf32>
    %102 = arith.mulf %90, %101 : vector<1x8xf32>
    %103 = arith.subf %80, %102 : vector<1x8xf32>
    %104 = tpu.concatenate %101, %103 in 0 : vector<1x8xf32>, vector<1x8xf32> -> vector<2x8xf32>
    %cst_52 = arith.constant dense<0.000000e+00> : vector<2x128xf32>
    %105 = tpu.matmul %104, %1, %cst_52 {dimension_numbers = #tpu.dot_dimension_numbers<[1], [0], [0], [1], [0, 0, 1, 1], [], []>, precision = #tpu.contract_precision<fp32>} : vector<2x8xf32>, vector<8x128xf32>, vector<2x128xf32> -> vector<2x128xf32>
    %106 = vector.extract_strided_slice %105 {offsets = [0, 0], sizes = [1, 128], strides = [1, 1]} : vector<2x128xf32> to vector<1x128xf32>
    %107 = vector.broadcast %106 : vector<1x128xf32> to vector<32x128xf32>
    %108 = arith.mulf %78, %107 : vector<32x128xf32>
    %109 = vector.extract_strided_slice %105 {offsets = [1, 0], sizes = [1, 128], strides = [1, 1]} : vector<2x128xf32> to vector<1x128xf32>
    %110 = vector.broadcast %109 : vector<1x128xf32> to vector<32x128xf32>
    %111 = arith.addf %108, %110 : vector<32x128xf32>
    %cst_53 = arith.constant 0.000000e+00 : f32
    %112 = vector.broadcast %cst_53 : f32 to vector<32x128xf32>
    %113 = arith.maximumf %111, %112 : vector<32x128xf32>
    %c0_54 = arith.constant 0 : index
    %c0_55 = arith.constant 0 : index
    %114 = vector.load %arg9[%c0_54, %c0_55] : memref<32x128xf32, #tpu.memory_space<vmem>>, vector<32x128xf32>
    tpu.vector_store %arg9[%c0_54, %c0_55], %113 {strides = array<i32>} : memref<32x128xf32, #tpu.memory_space<vmem>>, vector<32x128xf32>,
    return
  }
}

</mosaic_0001>

<llo_original>
// kernel: lastconv_forward.1
$region0: #{lastconv_forward.1}
  #allocation0 [shape = 'u32[]', space=smem, size = 0x4, offset = 0x4, fixed_abs, tag = 'smem constant byte address 0x4 - core index']
  #allocation1 [shape = 'u32[144,128]{1,0:T(1,128)}', space=vmem, size = 0x12000, scoped, tag = 'internal scratch']
  %s0 = inlined_call_operand.vmem [shape: bf16[2,16,128], index: 0, kind: input, shape index: {}]
  %s1 = inlined_call_operand.vmem [shape: bf16[3,128,128], index: 1, kind: input, shape index: {}]
  %s2 = inlined_call_operand.vmem [shape: bf16[3,128,128], index: 2, kind: input, shape index: {}]
  %s3 = inlined_call_operand.vmem [shape: f32[1,8], index: 3, kind: input, shape index: {}]
  %s4 = inlined_call_operand.vmem [shape: f32[1,8], index: 4, kind: input, shape index: {}]
  %s5 = inlined_call_operand.vmem [shape: f32[1,8], index: 5, kind: input, shape index: {}]
  %s6 = inlined_call_operand.vmem [shape: f32[1,8], index: 6, kind: input, shape index: {}]
  %s7 = inlined_call_operand.vmem [shape: f32[128,8], index: 7, kind: input, shape index: {}]
  %s8 = inlined_call_operand.vmem [shape: f32[8,128], index: 8, kind: input, shape index: {}]
  %s9 = inlined_call_operand.vmem [shape: f32[32,128], index: 9, kind: output, shape index: {}]
  %s10 = sld [smem:[#allocation0]]
  $region46: #{lastconv_forward.1} parent=0
    _
  %s12 = ssub.s32 1, %s10
  %s13 = scalar_select 0, %s12, %s10
  // Predicated region
  $region2: #{lastconv_forward.1} parent=0 // pred_check
    _
  $region3: #{lastconv_forward.1} parent=0 // pred_check_branch
    %15 = sbr.rel (0) target = $region5
  $region4: #{lastconv_forward.1} parent=0 // pred_region
    _
  $region5: #{lastconv_forward.1} parent=0 // pred_fallthru
    _
  // Predicated region
  $region6: #{lastconv_forward.1} parent=0 // pred_check
    _
  $region7: #{lastconv_forward.1} parent=0 // pred_check_branch
    %17 = sbr.rel (0) target = $region9
  $region8: #{lastconv_forward.1} parent=0 // pred_region
    _
  $region9: #{lastconv_forward.1} parent=0 // pred_fallthru
    _
  // Predicated region
  $region10: #{lastconv_forward.1} parent=0 // pred_check
    _
  $region11: #{lastconv_forward.1} parent=0 // pred_check_branch
    %19 = sbr.rel (0) target = $region13
  $region12: #{lastconv_forward.1} parent=0 // pred_region
    _
  $region13: #{lastconv_forward.1} parent=0 // pred_fallthru
    _
  // Predicated region
  $region14: #{lastconv_forward.1} parent=0 // pred_check
    _
  $region15: #{lastconv_forward.1} parent=0 // pred_check_branch
    %21 = sbr.rel (0) target = $region17
  $region16: #{lastconv_forward.1} parent=0 // pred_region
    _
  $region17: #{lastconv_forward.1} parent=0 // pred_fallthru
    _
  // Predicated region
  $region18: #{lastconv_forward.1} parent=0 // pred_check
    _
  $region19: #{lastconv_forward.1} parent=0 // pred_check_branch
    %23 = sbr.rel (0) target = $region21
  $region20: #{lastconv_forward.1} parent=0 // pred_region
    _
  $region21: #{lastconv_forward.1} parent=0 // pred_fallthru
    _
  // Predicated region
  $region22: #{lastconv_forward.1} parent=0 // pred_check
    _
  $region23: #{lastconv_forward.1} parent=0 // pred_check_branch
    %25 = sbr.rel (0) target = $region25
  $region24: #{lastconv_forward.1} parent=0 // pred_region
    _
  $region25: #{lastconv_forward.1} parent=0 // pred_fallthru
    _
  // Predicated region
  $region26: #{lastconv_forward.1} parent=0 // pred_check
    _
  $region27: #{lastconv_forward.1} parent=0 // pred_check_branch
    %27 = sbr.rel (0) target = $region29
  $region28: #{lastconv_forward.1} parent=0 // pred_region
    _
  $region29: #{lastconv_forward.1} parent=0 // pred_fallthru
    _
  // Predicated region
  $region30: #{lastconv_forward.1} parent=0 // pred_check
    _
  $region31: #{lastconv_forward.1} parent=0 // pred_check_branch
    %29 = sbr.rel (0) target = $region33
  $region32: #{lastconv_forward.1} parent=0 // pred_region
    _
  $region33: #{lastconv_forward.1} parent=0 // pred_fallthru
    _
  // Predicated region
  $region34: #{lastconv_forward.1} parent=0 // pred_check
    _
  $region35: #{lastconv_forward.1} parent=0 // pred_check_branch
    %31 = sbr.rel (0) target = $region37
  $region36: #{lastconv_forward.1} parent=0 // pred_region
    _
  $region37: #{lastconv_forward.1} parent=0 // pred_fallthru
    _
  %v33 = vld [vmem:[%s7] sm:$0xff]
  %v34 = vld [vmem:[%s7 + $0x8] sm:$0xff]
  %v35 = vld [vmem:[%s7 + $0x10] sm:$0xff]
  %v36 = vld [vmem:[%s7 + $0x18] sm:$0xff]
  %v37 = vld [vmem:[%s7 + $0x20] sm:$0xff]
  %v38 = vld [vmem:[%s7 + $0x28] sm:$0xff]
  %v39 = vld [vmem:[%s7 + $0x30] sm:$0xff]
  %v40 = vld [vmem:[%s7 + $0x38] sm:$0xff]
  %v41 = vld [vmem:[%s7 + $0x40] sm:$0xff]
  %v42 = vld [vmem:[%s7 + $0x48] sm:$0xff]
  %v43 = vld [vmem:[%s7 + $0x50] sm:$0xff]
  %v44 = vld [vmem:[%s7 + $0x58] sm:$0xff]
  %v45 = vld [vmem:[%s7 + $0x60] sm:$0xff]
  %v46 = vld [vmem:[%s7 + $0x68] sm:$0xff]
  %v47 = vld [vmem:[%s7 + $0x70] sm:$0xff]
  %v48 = vld [vmem:[%s7 + $0x78] sm:$0xff]
  %v49 = vld [vmem:[%s8] sm:$0xff]
  %v50 = vld [vmem:[%s0] sm:$0xf]
  %v51 = vld [vmem:[%s0 + $0x4] sm:$0xf]
  %v52 = vld [vmem:[%s0 + $0x8] sm:$0xf]
  %v53 = vld [vmem:[%s0 + $0xc] sm:$0xf]
  %v54 = vld [vmem:[%s1] sm:$0xf]
  %v55 = vld [vmem:[%s1 + $0x4] sm:$0xf]
  %v56 = vld [vmem:[%s1 + $0x8] sm:$0xf]
  %v57 = vld [vmem:[%s1 + $0xc] sm:$0xf]
  %v58 = vld [vmem:[%s1 + $0x10] sm:$0xf]
  %v59 = vld [vmem:[%s1 + $0x14] sm:$0xf]
  %v60 = vld [vmem:[%s1 + $0x18] sm:$0xf]
  %v61 = vld [vmem:[%s1 + $0x1c] sm:$0xf]
  %v62 = vld [vmem:[%s1 + $0x20] sm:$0xf]
  %v63 = vld [vmem:[%s1 + $0x24] sm:$0xf]
  %v64 = vld [vmem:[%s1 + $0x28] sm:$0xf]
  %v65 = vld [vmem:[%s1 + $0x2c] sm:$0xf]
  %v66 = vld [vmem:[%s1 + $0x30] sm:$0xf]
  %v67 = vld [vmem:[%s1 + $0x34] sm:$0xf]
  %v68 = vld [vmem:[%s1 + $0x38] sm:$0xf]
  %v69 = vld [vmem:[%s1 + $0x3c] sm:$0xf]
  %v74 = vunpack.c.l.b16 %v50
  %v75 = vunpack.c.l.b16 %v51
  %v76 = vunpack.c.l.b16 %v52
  %v77 = vunpack.c.l.b16 %v53
  %v78 = vpack.c.b16 %v75, %v74
  %v79 = vpack.c.b16 %v77, %v76
  %v98 = vunpack.c.l.b16 %v54
  %v99 = vunpack.c.l.b16 %v55
  %v100 = vunpack.c.l.b16 %v56
  %v101 = vunpack.c.l.b16 %v57
  %v102 = vunpack.c.l.b16 %v58
  %v103 = vunpack.c.l.b16 %v59
  %v104 = vunpack.c.l.b16 %v60
  %v105 = vunpack.c.l.b16 %v61
  %v106 = vunpack.c.l.b16 %v62
  %v107 = vunpack.c.l.b16 %v63
  %v108 = vunpack.c.l.b16 %v64
  %v109 = vunpack.c.l.b16 %v65
  %v110 = vunpack.c.l.b16 %v66
  %v111 = vunpack.c.l.b16 %v67
  %v112 = vunpack.c.l.b16 %v68
  %v113 = vunpack.c.l.b16 %v69
  %v114 = vpack.c.b16 %v99, %v98
  %v115 = vpack.c.b16 %v101, %v100
  %v116 = vpack.c.b16 %v103, %v102
  %v117 = vpack.c.b16 %v105, %v104
  %v118 = vpack.c.b16 %v107, %v106
  %v119 = vpack.c.b16 %v109, %v108
  %v120 = vpack.c.b16 %v111, %v110
  %v121 = vpack.c.b16 %v113, %v112
  %130 = vmatprep.subr.bf16.mxu0 0
  %131 = vmatpush1.bf16.msra.mxu0 %v114
  %132 = vmatprep.subr.bf16.mxu0 0
  %133 = vmatpush1.bf16.msra.mxu0 %v115
  %134 = vmatprep.subr.bf16.mxu0 0
  %135 = vmatpush1.bf16.msra.mxu0 %v116
  %136 = vmatprep.subr.bf16.mxu0 0
  %137 = vmatpush1.bf16.msra.mxu0 %v117
  %138 = vmatprep.subr.bf16.mxu0 0
  %139 = vmatpush1.bf16.msra.mxu0 %v118
  %140 = vmatprep.subr.bf16.mxu0 0
  %141 = vmatpush1.bf16.msra.mxu0 %v119
  %142 = vmatprep.subr.bf16.mxu0 0
  %143 = vmatpush1.bf16.msra.mxu0 %v120
  %144 = vmatprep.subr.bf16.mxu0 0
  %145 = vmatpush1.bf16.msra.mxu0 %v121
  %146 = vmatprep.subr.bf16.mxu0 0
  %147 = vmatpush1.bf16.msra.mxu0 0
  %148 = vmatprep.subr.bf16.mxu0 0
  %149 = vmatpush1.bf16.msra.mxu0 0
  %150 = vmatprep.subr.bf16.mxu0 0
  %151 = vmatpush1.bf16.msra.mxu0 0
  %152 = vmatprep.subr.bf16.mxu0 0
  %153 = vmatpush1.bf16.msra.mxu0 0
  %154 = vmatprep.subr.bf16.mxu0 0
  %155 = vmatpush1.bf16.msra.mxu0 0
  %156 = vmatprep.subr.bf16.mxu0 0
  %157 = vmatpush1.bf16.msra.mxu0 0
  %158 = vmatprep.subr.bf16.mxu0 0
  %159 = vmatpush1.bf16.msra.mxu0 0
  %160 = vmatprep.subr.bf16.mxu0 0
  %161 = vmatpush1.bf16.msra.mxu0 0
  %162 = vmatprep.mubr.bf16.mxu0 0
  %163 = vmatmul.mubr.bf16.gmra.mrb[0].mxu0 %v78
  %v164 = vpop.f32.mrb[0].mxu0
  %v165 = vadd.f32 0.0, %v164
  %v166 = vpop.f32.mrb[0].mxu0
  %v167 = vpop.f32.mrb[0].mxu0
  %v168 = vadd.f32 0.0, %v167
  %v169 = vpop.f32.mrb[0].mxu0
  %170 = vmatprep.mubr.bf16.mxu0 0
  %171 = vmatmul.mubr.bf16.gmra.mrb[0].mxu0 %v79
  %v172 = vpop.f32.mrb[0].mxu0
  %v173 = vadd.f32 0.0, %v172
  %v174 = vpop.f32.mrb[0].mxu0
  %v175 = vpop.f32.mrb[0].mxu0
  %v176 = vadd.f32 0.0, %v175
  %v177 = vpop.f32.mrb[0].mxu0
  %178 = vdwg.mxu0
  %s179 = scalar_lea.vmem %s1, 64
  %v180 = vld [vmem:[%s179] sm:$0xf]
  %v181 = vld [vmem:[%s179 + $0x4] sm:$0xf]
  %v182 = vld [vmem:[%s179 + $0x8] sm:$0xf]
  %v183 = vld [vmem:[%s179 + $0xc] sm:$0xf]
  %v184 = vld [vmem:[%s179 + $0x10] sm:$0xf]
  %v185 = vld [vmem:[%s179 + $0x14] sm:$0xf]
  %v186 = vld [vmem:[%s179 + $0x18] sm:$0xf]
  %v187 = vld [vmem:[%s179 + $0x1c] sm:$0xf]
  %v188 = vld [vmem:[%s179 + $0x20] sm:$0xf]
  %v189 = vld [vmem:[%s179 + $0x24] sm:$0xf]
  %v190 = vld [vmem:[%s179 + $0x28] sm:$0xf]
  %v191 = vld [vmem:[%s179 + $0x2c] sm:$0xf]
  %v192 = vld [vmem:[%s179 + $0x30] sm:$0xf]
  %v193 = vld [vmem:[%s179 + $0x34] sm:$0xf]
  %v194 = vld [vmem:[%s179 + $0x38] sm:$0xf]
  %v195 = vld [vmem:[%s179 + $0x3c] sm:$0xf]
  %v212 = vunpack.c.l.b16 %v180
  %v213 = vunpack.c.l.b16 %v181
  %v214 = vunpack.c.l.b16 %v182
  %v215 = vunpack.c.l.b16 %v183
  %v216 = vunpack.c.l.b16 %v184
  %v217 = vunpack.c.l.b16 %v185
  %v218 = vunpack.c.l.b16 %v186
  %v219 = vunpack.c.l.b16 %v187
  %v220 = vunpack.c.l.b16 %v188
  %v221 = vunpack.c.l.b16 %v189
  %v222 = vunpack.c.l.b16 %v190
  %v223 = vunpack.c.l.b16 %v191
  %v224 = vunpack.c.l.b16 %v192
  %v225 = vunpack.c.l.b16 %v193
  %v226 = vunpack.c.l.b16 %v194
  %v227 = vunpack.c.l.b16 %v195
  %v228 = vpack.c.b16 %v213, %v212
  %v229 = vpack.c.b16 %v215, %v214
  %v230 = vpack.c.b16 %v217, %v216
  %v231 = vpack.c.b16 %v219, %v218
  %v232 = vpack.c.b16 %v221, %v220
  %v233 = vpack.c.b16 %v223, %v222
  %v234 = vpack.c.b16 %v225, %v224
  %v235 = vpack.c.b16 %v227, %v226
  %244 = vmatprep.subr.bf16.mxu0 0
  %245 = vmatpush1.bf16.msra.mxu0 %v228
  %246 = vmatprep.subr.bf16.mxu0 0
  %247 = vmatpush1.bf16.msra.mxu0 %v229
  %248 = vmatprep.subr.bf16.mxu0 0
  %249 = vmatpush1.bf16.msra.mxu0 %v230
  %250 = vmatprep.subr.bf16.mxu0 0
  %251 = vmatpush1.bf16.msra.mxu0 %v231
  %252 = vmatprep.subr.bf16.mxu0 0
  %253 = vmatpush1.bf16.msra.mxu0 %v232
  %254 = vmatprep.subr.bf16.mxu0 0
  %255 = vmatpush1.bf16.msra.mxu0 %v233
  %256 = vmatprep.subr.bf16.mxu0 0
  %257 = vmatpush1.bf16.msra.mxu0 %v234
  %258 = vmatprep.subr.bf16.mxu0 0
  %259 = vmatpush1.bf16.msra.mxu0 %v235
  %260 = vmatprep.subr.bf16.mxu0 0
  %261 = vmatpush1.bf16.msra.mxu0 0
  %262 = vmatprep.subr.bf16.mxu0 0
  %263 = vmatpush1.bf16.msra.mxu0 0
  %264 = vmatprep.subr.bf16.mxu0 0
  %265 = vmatpush1.bf16.msra.mxu0 0
  %266 = vmatprep.subr.bf16.mxu0 0
  %267 = vmatpush1.bf16.msra.mxu0 0
  %268 = vmatprep.subr.bf16.mxu0 0
  %269 = vmatpush1.bf16.msra.mxu0 0
  %270 = vmatprep.subr.bf16.mxu0 0
  %271 = vmatpush1.bf16.msra.mxu0 0
  %272 = vmatprep.subr.bf16.mxu0 0
  %273 = vmatpush1.bf16.msra.mxu0 0
  %274 = vmatprep.subr.bf16.mxu0 0
  %275 = vmatpush1.bf16.msra.mxu0 0
  %276 = vmatprep.mubr.bf16.mxu0 0
  %277 = vmatmul.mubr.bf16.gmra.mrb[0].mxu0 %v78
  %v278 = vpop.f32.mrb[0].mxu0
  %v279 = vadd.f32 0.0, %v278
  %v280 = vpop.f32.mrb[0].mxu0
  %v281 = vpop.f32.mrb[0].mxu0
  %v282 = vadd.f32 0.0, %v281
  %v283 = vpop.f32.mrb[0].mxu0
  %284 = vmatprep.mubr.bf16.mxu0 0
  %285 = vmatmul.mubr.bf16.gmra.mrb[0].mxu0 %v79
  %v286 = vpop.f32.mrb[0].mxu0
  %v287 = vadd.f32 0.0, %v286
  %v288 = vpop.f32.mrb[0].mxu0
  %v289 = vpop.f32.mrb[0].mxu0
  %v290 = vadd.f32 0.0, %v289
  %v291 = vpop.f32.mrb[0].mxu0
  %292 = vdwg.mxu0
  %s293 = scalar_lea.vmem %s1, 128
  %v294 = vld [vmem:[%s293] sm:$0xf]
  %v295 = vld [vmem:[%s293 + $0x4] sm:$0xf]
  %v296 = vld [vmem:[%s293 + $0x8] sm:$0xf]
  %v297 = vld [vmem:[%s293 + $0xc] sm:$0xf]
  %v298 = vld [vmem:[%s293 + $0x10] sm:$0xf]
  %v299 = vld [vmem:[%s293 + $0x14] sm:$0xf]
  %v300 = vld [vmem:[%s293 + $0x18] sm:$0xf]
  %v301 = vld [vmem:[%s293 + $0x1c] sm:$0xf]
  %v302 = vld [vmem:[%s293 + $0x20] sm:$0xf]
  %v303 = vld [vmem:[%s293 + $0x24] sm:$0xf]
  %v304 = vld [vmem:[%s293 + $0x28] sm:$0xf]
  %v305 = vld [vmem:[%s293 + $0x2c] sm:$0xf]
  %v306 = vld [vmem:[%s293 + $0x30] sm:$0xf]
  %v307 = vld [vmem:[%s293 + $0x34] sm:$0xf]
  %v308 = vld [vmem:[%s293 + $0x38] sm:$0xf]
  %v309 = vld [vmem:[%s293 + $0x3c] sm:$0xf]
  %v326 = vunpack.c.l.b16 %v294
  %v327 = vunpack.c.l.b16 %v295
  %v328 = vunpack.c.l.b16 %v296
  %v329 = vunpack.c.l.b16 %v297
  %v330 = vunpack.c.l.b16 %v298
  %v331 = vunpack.c.l.b16 %v299
  %v332 = vunpack.c.l.b16 %v300
  %v333 = vunpack.c.l.b16 %v301
  %v334 = vunpack.c.l.b16 %v302
  %v335 = vunpack.c.l.b16 %v303
  %v336 = vunpack.c.l.b16 %v304
  %v337 = vunpack.c.l.b16 %v305
  %v338 = vunpack.c.l.b16 %v306
  %v339 = vunpack.c.l.b16 %v307
  %v340 = vunpack.c.l.b16 %v308
  %v341 = vunpack.c.l.b16 %v309
  %v342 = vpack.c.b16 %v327, %v326
  %v343 = vpack.c.b16 %v329, %v328
  %v344 = vpack.c.b16 %v331, %v330
  %v345 = vpack.c.b16 %v333, %v332
  %v346 = vpack.c.b16 %v335, %v334
  %v347 = vpack.c.b16 %v337, %v336
  %v348 = vpack.c.b16 %v339, %v338
  %v349 = vpack.c.b16 %v341, %v340
  %358 = vmatprep.subr.bf16.mxu0 0
  %359 = vmatpush1.bf16.msra.mxu0 %v342
  %360 = vmatprep.subr.bf16.mxu0 0
  %361 = vmatpush1.bf16.msra.mxu0 %v343
  %362 = vmatprep.subr.bf16.mxu0 0
  %363 = vmatpush1.bf16.msra.mxu0 %v344
  %364 = vmatprep.subr.bf16.mxu0 0
  %365 = vmatpush1.bf16.msra.mxu0 %v345
  %366 = vmatprep.subr.bf16.mxu0 0
  %367 = vmatpush1.bf16.msra.mxu0 %v346
  %368 = vmatprep.subr.bf16.mxu0 0
  %369 = vmatpush1.bf16.msra.mxu0 %v347
  %370 = vmatprep.subr.bf16.mxu0 0
  %371 = vmatpush1.bf16.msra.mxu0 %v348
  %372 = vmatprep.subr.bf16.mxu0 0
  %373 = vmatpush1.bf16.msra.mxu0 %v349
  %374 = vmatprep.subr.bf16.mxu0 0
  %375 = vmatpush1.bf16.msra.mxu0 0
  %376 = vmatprep.subr.bf16.mxu0 0
  %377 = vmatpush1.bf16.msra.mxu0 0
  %378 = vmatprep.subr.bf16.mxu0 0
  %379 = vmatpush1.bf16.msra.mxu0 0
  %380 = vmatprep.subr.bf16.mxu0 0
  %381 = vmatpush1.bf16.msra.mxu0 0
  %382 = vmatprep.subr.bf16.mxu0 0
  %383 = vmatpush1.bf16.msra.mxu0 0
  %384 = vmatprep.subr.bf16.mxu0 0
  %385 = vmatpush1.bf16.msra.mxu0 0
  %386 = vmatprep.subr.bf16.mxu0 0
  %387 = vmatpush1.bf16.msra.mxu0 0
  %388 = vmatprep.subr.bf16.mxu0 0
  %389 = vmatpush1.bf16.msra.mxu0 0
  %390 = vmatprep.mubr.bf16.mxu0 0
  %391 = vmatmul.mubr.bf16.gmra.mrb[0].mxu0 %v78
  %v392 = vpop.f32.mrb[0].mxu0
  %v393 = vadd.f32 0.0, %v392
  %v394 = vpop.f32.mrb[0].mxu0
  %v395 = vpop.f32.mrb[0].mxu0
  %v396 = vadd.f32 0.0, %v395
  %v397 = vpop.f32.mrb[0].mxu0
  %398 = vmatprep.mubr.bf16.mxu0 0
  %399 = vmatmul.mubr.bf16.gmra.mrb[0].mxu0 %v79
  %v400 = vpop.f32.mrb[0].mxu0
  %v401 = vadd.f32 0.0, %v400
  %v402 = vpop.f32.mrb[0].mxu0
  %v403 = vpop.f32.mrb[0].mxu0
  %v404 = vadd.f32 0.0, %v403
  %v405 = vpop.f32.mrb[0].mxu0
  %406 = vdwg.mxu0
  %vm411 = vcmask 1040384
  %v412 = vrot.slane %v165, 7
  %v413 = vrot.slane %v168, 7
  %v414 = vsel %vm411, %v412, %v413
  %v415 = vrot.slane %v173, 7
  %v416 = vrot.slane %v176, 7
  %v417 = vsel %vm411, %v415, %v416
  %v422 = vsel %vm411, 0.0, %v412
  %v423 = vsel %vm411, 0.0, %v415
  %vm428 = vcmask 1046528
  %v429 = vrot.slane %v393, 1
  %v430 = vrot.slane %v396, 1
  %v431 = vsel %vm428, %v429, %v430
  %v432 = vrot.slane %v401, 1
  %v433 = vrot.slane %v404, 1
  %v434 = vsel %vm428, %v432, %v433
  %v439 = vsel %vm428, %v430, 0.0
  %v440 = vsel %vm428, %v433, 0.0
  %v441 = vadd.f32 %v279, %v422
  %v442 = vadd.f32 %v282, %v414
  %v443 = vadd.f32 %v287, %v423
  %v444 = vadd.f32 %v290, %v417
  %v445 = vadd.f32 %v441, %v431
  %v446 = vadd.f32 %v442, %v439
  %v447 = vadd.f32 %v443, %v434
  %v448 = vadd.f32 %v444, %v440
  %v449 = vld [vmem:[%s3] sm:$0x1]
  %v450 = vld [vmem:[%s4] sm:$0x1]
  %v451 = vadd.f32 %v445, %v446
  %v452 = vadd.f32 %v451, %v447
  %v453 = vadd.f32 %v452, %v448
  %v454 = vrot.slane %v453, 4
  %v455 = vadd.f32 %v453, %v454
  %v456 = vrot.slane %v455, 2
  %v457 = vadd.f32 %v455, %v456
  %v458 = vrot.slane %v457, 1
  %v459 = vadd.f32 %v457, %v458
  %v460 = vmul.f32 %v445, %v445
  %v461 = vmul.f32 %v446, %v446
  %v462 = vmul.f32 %v447, %v447
  %v463 = vmul.f32 %v448, %v448
  %v464 = vadd.f32 %v460, %v461
  %v465 = vadd.f32 %v464, %v462
  %v466 = vadd.f32 %v465, %v463
  %v467 = vrot.slane %v466, 4
  %v468 = vadd.f32 %v466, %v467
  %v469 = vrot.slane %v468, 2
  %v470 = vadd.f32 %v468, %v469
  %v471 = vrot.slane %v470, 1
  %v472 = vadd.f32 %v470, %v471
  %v473 = vsel %vm411, %v459, %v472
  %474 = vmatprep.subr.mxu0 0.0
  %v475 = vand.u32 %v33, 4294901760
  %476 = vmatpush1.msra.mxu0 %v475
  %477 = vmatprep.subr.mxu0 0.0
  %v478 = vand.u32 %v34, 4294901760
  %479 = vmatpush1.msra.mxu0 %v478
  %480 = vmatprep.subr.mxu0 0.0
  %v481 = vand.u32 %v35, 4294901760
  %482 = vmatpush1.msra.mxu0 %v481
  %483 = vmatprep.subr.mxu0 0.0
  %v484 = vand.u32 %v36, 4294901760
  %485 = vmatpush1.msra.mxu0 %v484
  %486 = vmatprep.subr.mxu0 0.0
  %v487 = vand.u32 %v37, 4294901760
  %488 = vmatpush1.msra.mxu0 %v487
  %489 = vmatprep.subr.mxu0 0.0
  %v490 = vand.u32 %v38, 4294901760
  %491 = vmatpush1.msra.mxu0 %v490
  %492 = vmatprep.subr.mxu0 0.0
  %v493 = vand.u32 %v39, 4294901760
  %494 = vmatpush1.msra.mxu0 %v493
  %495 = vmatprep.subr.mxu0 0.0
  %v496 = vand.u32 %v40, 4294901760
  %497 = vmatpush1.msra.mxu0 %v496
  %498 = vmatprep.subr.mxu0 0.0
  %v499 = vand.u32 %v41, 4294901760
  %500 = vmatpush1.msra.mxu0 %v499
  %501 = vmatprep.subr.mxu0 0.0
  %v502 = vand.u32 %v42, 4294901760
  %503 = vmatpush1.msra.mxu0 %v502
  %504 = vmatprep.subr.mxu0 0.0
  %v505 = vand.u32 %v43, 4294901760
  %506 = vmatpush1.msra.mxu0 %v505
  %507 = vmatprep.subr.mxu0 0.0
  %v508 = vand.u32 %v44, 4294901760
  %509 = vmatpush1.msra.mxu0 %v508
  %510 = vmatprep.subr.mxu0 0.0
  %v511 = vand.u32 %v45, 4294901760
  %512 = vmatpush1.msra.mxu0 %v511
  %513 = vmatprep.subr.mxu0 0.0
  %v514 = vand.u32 %v46, 4294901760
  %515 = vmatpush1.msra.mxu0 %v514
  %516 = vmatprep.subr.mxu0 0.0
  %v517 = vand.u32 %v47, 4294901760
  %518 = vmatpush1.msra.mxu0 %v517
  %519 = vmatprep.subr.mxu0 0.0
  %v520 = vand.u32 %v48, 4294901760
  %521 = vmatpush1.msra.mxu0 %v520
  %522 = vmatprep.subr.mxu0 0.0
  %523 = vmatpush1.msra.mxu0 0.0
  %524 = vmatprep.subr.mxu0 0.0
  %525 = vmatpush1.msra.mxu0 0.0
  %526 = vmatprep.subr.mxu0 0.0
  %527 = vmatpush1.msra.mxu0 0.0
  %528 = vmatprep.subr.mxu0 0.0
  %529 = vmatpush1.msra.mxu0 0.0
  %530 = vmatprep.subr.mxu0 0.0
  %531 = vmatpush1.msra.mxu0 0.0
  %532 = vmatprep.subr.mxu0 0.0
  %533 = vmatpush1.msra.mxu0 0.0
  %534 = vmatprep.subr.mxu0 0.0
  %535 = vmatpush1.msra.mxu0 0.0
  %536 = vmatprep.subr.mxu0 0.0
  %537 = vmatpush1.msra.mxu0 0.0
  %538 = vmatprep.subr.mxu0 0.0
  %539 = vmatpush1.msra.mxu0 0.0
  %540 = vmatprep.subr.mxu0 0.0
  %541 = vmatpush1.msra.mxu0 0.0
  %542 = vmatprep.subr.mxu0 0.0
  %543 = vmatpush1.msra.mxu0 0.0
  %544 = vmatprep.subr.mxu0 0.0
  %545 = vmatpush1.msra.mxu0 0.0
  %546 = vmatprep.subr.mxu0 0.0
  %547 = vmatpush1.msra.mxu0 0.0
  %548 = vmatprep.subr.mxu0 0.0
  %549 = vmatpush1.msra.mxu0 0.0
  %550 = vmatprep.subr.mxu0 0.0
  %551 = vmatpush1.msra.mxu0 0.0
  %552 = vmatprep.subr.mxu0 0.0
  %553 = vmatpush1.msra.mxu0 0.0
  %554 = vmatprep.mubr.f32.mxu0 0.0
  %v555 = vand.u32 %v473, 4294901760
  %v556 = vsub.f32 %v473, %v555
  %v557 = vand.u32 %v556, 4294901760
  %v558 = vsub.f32 %v556, %v557
  %v559 = vand.u32 %v558, 4294901760
  %560 = vmatmul.mubr.f32.gmra.mrb[0].mxu0 %v559
  %v561 = vpop.f32.mrb[0].mxu0
  %v562 = vadd.f32 0.0, %v561
  %v563 = vpop.f32.mrb[0].mxu0
  %564 = vdwg.mxu0
  %565 = vmatprep.subr.mxu0 0.0
  %v566 = vand.u32 %v33, 4294901760
  %v567 = vsub.f32 %v33, %v566
  %v568 = vand.u32 %v567, 4294901760
  %v569 = vsub.f32 %v567, %v568
  %v570 = vand.u32 %v569, 4294901760
  %571 = vmatpush1.msra.mxu0 %v570
  %572 = vmatprep.subr.mxu0 0.0
  %v573 = vand.u32 %v34, 4294901760
  %v574 = vsub.f32 %v34, %v573
  %v575 = vand.u32 %v574, 4294901760
  %v576 = vsub.f32 %v574, %v575
  %v577 = vand.u32 %v576, 4294901760
  %578 = vmatpush1.msra.mxu0 %v577
  %579 = vmatprep.subr.mxu0 0.0
  %v580 = vand.u32 %v35, 4294901760
  %v581 = vsub.f32 %v35, %v580
  %v582 = vand.u32 %v581, 4294901760
  %v583 = vsub.f32 %v581, %v582
  %v584 = vand.u32 %v583, 4294901760
  %585 = vmatpush1.msra.mxu0 %v584
  %586 = vmatprep.subr.mxu0 0.0
  %v587 = vand.u32 %v36, 4294901760
  %v588 = vsub.f32 %v36, %v587
  %v589 = vand.u32 %v588, 4294901760
  %v590 = vsub.f32 %v588, %v589
  %v591 = vand.u32 %v590, 4294901760
  %592 = vmatpush1.msra.mxu0 %v591
  %593 = vmatprep.subr.mxu0 0.0
  %v594 = vand.u32 %v37, 4294901760
  %v595 = vsub.f32 %v37, %v594
  %v596 = vand.u32 %v595, 4294901760
  %v597 = vsub.f32 %v595, %v596
  %v598 = vand.u32 %v597, 4294901760
  %599 = vmatpush1.msra.mxu0 %v598
  %600 = vmatprep.subr.mxu0 0.0
  %v601 = vand.u32 %v38, 4294901760
  %v602 = vsub.f32 %v38, %v601
  %v603 = vand.u32 %v602, 4294901760
  %v604 = vsub.f32 %v602, %v603
  %v605 = vand.u32 %v604, 4294901760
  %606 = vmatpush1.msra.mxu0 %v605
  %607 = vmatprep.subr.mxu0 0.0
  %v608 = vand.u32 %v39, 4294901760
  %v609 = vsub.f32 %v39, %v608
  %v610 = vand.u32 %v609, 4294901760
  %v611 = vsub.f32 %v609, %v610
  %v612 = vand.u32 %v611, 4294901760
  %613 = vmatpush1.msra.mxu0 %v612
  %614 = vmatprep.subr.mxu0 0.0
  %v615 = vand.u32 %v40, 4294901760
  %v616 = vsub.f32 %v40, %v615
  %v617 = vand.u32 %v616, 4294901760
  %v618 = vsub.f32 %v616, %v617
  %v619 = vand.u32 %v618, 4294901760
  %620 = vmatpush1.msra.mxu0 %v619
  %621 = vmatprep.subr.mxu0 0.0
  %v622 = vand.u32 %v41, 4294901760
  %v623 = vsub.f32 %v41, %v622
  %v624 = vand.u32 %v623, 4294901760
  %v625 = vsub.f32 %v623, %v624
  %v626 = vand.u32 %v625, 4294901760
  %627 = vmatpush1.msra.mxu0 %v626
  %628 = vmatprep.subr.mxu0 0.0
  %v629 = vand.u32 %v42, 4294901760
  %v630 = vsub.f32 %v42, %v629
  %v631 = vand.u32 %v630, 4294901760
  %v632 = vsub.f32 %v630, %v631
  %v633 = vand.u32 %v632, 4294901760
  %634 = vmatpush1.msra.mxu0 %v633
  %635 = vmatprep.subr.mxu0 0.0
  %v636 = vand.u32 %v43, 4294901760
  %v637 = vsub.f32 %v43, %v636
  %v638 = vand.u32 %v637, 4294901760
  %v639 = vsub.f32 %v637, %v638
  %v640 = vand.u32 %v639, 4294901760
  %641 = vmatpush1.msra.mxu0 %v640
  %642 = vmatprep.subr.mxu0 0.0
  %v643 = vand.u32 %v44, 4294901760
  %v644 = vsub.f32 %v44, %v643
  %v645 = vand.u32 %v644, 4294901760
  %v646 = vsub.f32 %v644, %v645
  %v647 = vand.u32 %v646, 4294901760
  %648 = vmatpush1.msra.mxu0 %v647
  %649 = vmatprep.subr.mxu0 0.0
  %v650 = vand.u32 %v45, 4294901760
  %v651 = vsub.f32 %v45, %v650
  %v652 = vand.u32 %v651, 4294901760
  %v653 = vsub.f32 %v651, %v652
  %v654 = vand.u32 %v653, 4294901760
  %655 = vmatpush1.msra.mxu0 %v654
  %656 = vmatprep.subr.mxu0 0.0
  %v657 = vand.u32 %v46, 4294901760
  %v658 = vsub.f32 %v46, %v657
  %v659 = vand.u32 %v658, 4294901760
  %v660 = vsub.f32 %v658, %v659
  %v661 = vand.u32 %v660, 4294901760
  %662 = vmatpush1.msra.mxu0 %v661
  %663 = vmatprep.subr.mxu0 0.0
  %v664 = vand.u32 %v47, 4294901760
  %v665 = vsub.f32 %v47, %v664
  %v666 = vand.u32 %v665, 4294901760
  %v667 = vsub.f32 %v665, %v666
  %v668 = vand.u32 %v667, 4294901760
  %669 = vmatpush1.msra.mxu0 %v668
  %670 = vmatprep.subr.mxu0 0.0
  %v671 = vand.u32 %v48, 4294901760
  %v672 = vsub.f32 %v48, %v671
  %v673 = vand.u32 %v672, 4294901760
  %v674 = vsub.f32 %v672, %v673
  %v675 = vand.u32 %v674, 4294901760
  %676 = vmatpush1.msra.mxu0 %v675
  %677 = vmatprep.subr.mxu0 0.0
  %678 = vmatpush1.msra.mxu0 0.0
  %679 = vmatprep.subr.mxu0 0.0
  %680 = vmatpush1.msra.mxu0 0.0
  %681 = vmatprep.subr.mxu0 0.0
  %682 = vmatpush1.msra.mxu0 0.0
  %683 = vmatprep.subr.mxu0 0.0
  %684 = vmatpush1.msra.mxu0 0.0
  %685 = vmatprep.subr.mxu0 0.0
  %686 = vmatpush1.msra.mxu0 0.0
  %687 = vmatprep.subr.mxu0 0.0
  %688 = vmatpush1.msra.mxu0 0.0
  %689 = vmatprep.subr.mxu0 0.0
  %690 = vmatpush1.msra.mxu0 0.0
  %691 = vmatprep.subr.mxu0 0.0
  %692 = vmatpush1.msra.mxu0 0.0
  %693 = vmatprep.subr.mxu0 0.0
  %694 = vmatpush1.msra.mxu0 0.0
  %695 = vmatprep.subr.mxu0 0.0
  %696 = vmatpush1.msra.mxu0 0.0
  %697 = vmatprep.subr.mxu0 0.0
  %698 = vmatpush1.msra.mxu0 0.0
  %699 = vmatprep.subr.mxu0 0.0
  %700 = vmatpush1.msra.mxu0 0.0
  %701 = vmatprep.subr.mxu0 0.0
  %702 = vmatpush1.msra.mxu0 0.0
  %703 = vmatprep.subr.mxu0 0.0
  %704 = vmatpush1.msra.mxu0 0.0
  %705 = vmatprep.subr.mxu0 0.0
  %706 = vmatpush1.msra.mxu0 0.0
  %707 = vmatprep.subr.mxu0 0.0
  %708 = vmatpush1.msra.mxu0 0.0
  %709 = vmatprep.mubr.f32.mxu0 0.0
  %v710 = vand.u32 %v473, 4294901760
  %711 = vmatmul.mubr.f32.gmra.mrb[0].mxu0 %v710
  %v712 = vpop.f32.mrb[0].mxu0
  %v713 = vadd.f32 %v562, %v712
  %v714 = vpop.f32.mrb[0].mxu0
  %715 = vdwg.mxu0
  %716 = vmatprep.subr.mxu0 0.0
  %v717 = vand.u32 %v33, 4294901760
  %v718 = vsub.f32 %v33, %v717
  %719 = vmatpush1.msra.mxu0 %v718
  %720 = vmatprep.subr.mxu0 0.0
  %v721 = vand.u32 %v34, 4294901760
  %v722 = vsub.f32 %v34, %v721
  %723 = vmatpush1.msra.mxu0 %v722
  %724 = vmatprep.subr.mxu0 0.0
  %v725 = vand.u32 %v35, 4294901760
  %v726 = vsub.f32 %v35, %v725
  %727 = vmatpush1.msra.mxu0 %v726
  %728 = vmatprep.subr.mxu0 0.0
  %v729 = vand.u32 %v36, 4294901760
  %v730 = vsub.f32 %v36, %v729
  %731 = vmatpush1.msra.mxu0 %v730
  %732 = vmatprep.subr.mxu0 0.0
  %v733 = vand.u32 %v37, 4294901760
  %v734 = vsub.f32 %v37, %v733
  %735 = vmatpush1.msra.mxu0 %v734
  %736 = vmatprep.subr.mxu0 0.0
  %v737 = vand.u32 %v38, 4294901760
  %v738 = vsub.f32 %v38, %v737
  %739 = vmatpush1.msra.mxu0 %v738
  %740 = vmatprep.subr.mxu0 0.0
  %v741 = vand.u32 %v39, 4294901760
  %v742 = vsub.f32 %v39, %v741
  %743 = vmatpush1.msra.mxu0 %v742
  %744 = vmatprep.subr.mxu0 0.0
  %v745 = vand.u32 %v40, 4294901760
  %v746 = vsub.f32 %v40, %v745
  %747 = vmatpush1.msra.mxu0 %v746
  %748 = vmatprep.subr.mxu0 0.0
  %v749 = vand.u32 %v41, 4294901760
  %v750 = vsub.f32 %v41, %v749
  %751 = vmatpush1.msra.mxu0 %v750
  %752 = vmatprep.subr.mxu0 0.0
  %v753 = vand.u32 %v42, 4294901760
  %v754 = vsub.f32 %v42, %v753
  %755 = vmatpush1.msra.mxu0 %v754
  %756 = vmatprep.subr.mxu0 0.0
  %v757 = vand.u32 %v43, 4294901760
  %v758 = vsub.f32 %v43, %v757
  %759 = vmatpush1.msra.mxu0 %v758
  %760 = vmatprep.subr.mxu0 0.0
  %v761 = vand.u32 %v44, 4294901760
  %v762 = vsub.f32 %v44, %v761
  %763 = vmatpush1.msra.mxu0 %v762
  %764 = vmatprep.subr.mxu0 0.0
  %v765 = vand.u32 %v45, 4294901760
  %v766 = vsub.f32 %v45, %v765
  %767 = vmatpush1.msra.mxu0 %v766
  %768 = vmatprep.subr.mxu0 0.0
  %v769 = vand.u32 %v46, 4294901760
  %v770 = vsub.f32 %v46, %v769
  %771 = vmatpush1.msra.mxu0 %v770
  %772 = vmatprep.subr.mxu0 0.0
  %v773 = vand.u32 %v47, 4294901760
  %v774 = vsub.f32 %v47, %v773
  %775 = vmatpush1.msra.mxu0 %v774
  %776 = vmatprep.subr.mxu0 0.0
  %v777 = vand.u32 %v48, 4294901760
  %v778 = vsub.f32 %v48, %v777
  %779 = vmatpush1.msra.mxu0 %v778
  %780 = vmatprep.subr.mxu0 0.0
  %781 = vmatpush1.msra.mxu0 0.0
  %782 = vmatprep.subr.mxu0 0.0
  %783 = vmatpush1.msra.mxu0 0.0
  %784 = vmatprep.subr.mxu0 0.0
  %785 = vmatpush1.msra.mxu0 0.0
  %786 = vmatprep.subr.mxu0 0.0
  %787 = vmatpush1.msra.mxu0 0.0
  %788 = vmatprep.subr.mxu0 0.0
  %789 = vmatpush1.msra.mxu0 0.0
  %790 = vmatprep.subr.mxu0 0.0
  %791 = vmatpush1.msra.mxu0 0.0
  %792 = vmatprep.subr.mxu0 0.0
  %793 = vmatpush1.msra.mxu0 0.0
  %794 = vmatprep.subr.mxu0 0.0
  %795 = vmatpush1.msra.mxu0 0.0
  %796 = vmatprep.subr.mxu0 0.0
  %797 = vmatpush1.msra.mxu0 0.0
  %798 = vmatprep.subr.mxu0 0.0
  %799 = vmatpush1.msra.mxu0 0.0
  %800 = vmatprep.subr.mxu0 0.0
  %801 = vmatpush1.msra.mxu0 0.0
  %802 = vmatprep.subr.mxu0 0.0
  %803 = vmatpush1.msra.mxu0 0.0
  %804 = vmatprep.subr.mxu0 0.0
  %805 = vmatpush1.msra.mxu0 0.0
  %806 = vmatprep.subr.mxu0 0.0
  %807 = vmatpush1.msra.mxu0 0.0
  %808 = vmatprep.subr.mxu0 0.0
  %809 = vmatpush1.msra.mxu0 0.0
  %810 = vmatprep.subr.mxu0 0.0
  %811 = vmatpush1.msra.mxu0 0.0
  %812 = vmatprep.mubr.f32.mxu0 0.0
  %v813 = vand.u32 %v473, 4294901760
  %v814 = vsub.f32 %v473, %v813
  %815 = vmatmul.mubr.f32.gmra.mrb[0].mxu0 %v814
  %v816 = vpop.f32.mrb[0].mxu0
  %v817 = vadd.f32 %v713, %v816
  %v818 = vpop.f32.mrb[0].mxu0
  %819 = vdwg.mxu0
  %820 = vmatprep.subr.mxu0 0.0
  %v821 = vand.u32 %v33, 4294901760
  %822 = vmatpush1.msra.mxu0 %v821
  %823 = vmatprep.subr.mxu0 0.0
  %v824 = vand.u32 %v34, 4294901760
  %825 = vmatpush1.msra.mxu0 %v824
  %826 = vmatprep.subr.mxu0 0.0
  %v827 = vand.u32 %v35, 4294901760
  %828 = vmatpush1.msra.mxu0 %v827
  %829 = vmatprep.subr.mxu0 0.0
  %v830 = vand.u32 %v36, 4294901760
  %831 = vmatpush1.msra.mxu0 %v830
  %832 = vmatprep.subr.mxu0 0.0
  %v833 = vand.u32 %v37, 4294901760
  %834 = vmatpush1.msra.mxu0 %v833
  %835 = vmatprep.subr.mxu0 0.0
  %v836 = vand.u32 %v38, 4294901760
  %837 = vmatpush1.msra.mxu0 %v836
  %838 = vmatprep.subr.mxu0 0.0
  %v839 = vand.u32 %v39, 4294901760
  %840 = vmatpush1.msra.mxu0 %v839
  %841 = vmatprep.subr.mxu0 0.0
  %v842 = vand.u32 %v40, 4294901760
  %843 = vmatpush1.msra.mxu0 %v842
  %844 = vmatprep.subr.mxu0 0.0
  %v845 = vand.u32 %v41, 4294901760
  %846 = vmatpush1.msra.mxu0 %v845
  %847 = vmatprep.subr.mxu0 0.0
  %v848 = vand.u32 %v42, 4294901760
  %849 = vmatpush1.msra.mxu0 %v848
  %850 = vmatprep.subr.mxu0 0.0
  %v851 = vand.u32 %v43, 4294901760
  %852 = vmatpush1.msra.mxu0 %v851
  %853 = vmatprep.subr.mxu0 0.0
  %v854 = vand.u32 %v44, 4294901760
  %855 = vmatpush1.msra.mxu0 %v854
  %856 = vmatprep.subr.mxu0 0.0
  %v857 = vand.u32 %v45, 4294901760
  %858 = vmatpush1.msra.mxu0 %v857
  %859 = vmatprep.subr.mxu0 0.0
  %v860 = vand.u32 %v46, 4294901760
  %861 = vmatpush1.msra.mxu0 %v860
  %862 = vmatprep.subr.mxu0 0.0
  %v863 = vand.u32 %v47, 4294901760
  %864 = vmatpush1.msra.mxu0 %v863
  %865 = vmatprep.subr.mxu0 0.0
  %v866 = vand.u32 %v48, 4294901760
  %867 = vmatpush1.msra.mxu0 %v866
  %868 = vmatprep.subr.mxu0 0.0
  %869 = vmatpush1.msra.mxu0 0.0
  %870 = vmatprep.subr.mxu0 0.0
  %871 = vmatpush1.msra.mxu0 0.0
  %872 = vmatprep.subr.mxu0 0.0
  %873 = vmatpush1.msra.mxu0 0.0
  %874 = vmatprep.subr.mxu0 0.0
  %875 = vmatpush1.msra.mxu0 0.0
  %876 = vmatprep.subr.mxu0 0.0
  %877 = vmatpush1.msra.mxu0 0.0
  %878 = vmatprep.subr.mxu0 0.0
  %879 = vmatpush1.msra.mxu0 0.0
  %880 = vmatprep.subr.mxu0 0.0
  %881 = vmatpush1.msra.mxu0 0.0
  %882 = vmatprep.subr.mxu0 0.0
  %883 = vmatpush1.msra.mxu0 0.0
  %884 = vmatprep.subr.mxu0 0.0
  %885 = vmatpush1.msra.mxu0 0.0
  %886 = vmatprep.subr.mxu0 0.0
  %887 = vmatpush1.msra.mxu0 0.0
  %888 = vmatprep.subr.mxu0 0.0
  %889 = vmatpush1.msra.mxu0 0.0
  %890 = vmatprep.subr.mxu0 0.0
  %891 = vmatpush1.msra.mxu0 0.0
  %892 = vmatprep.subr.mxu0 0.0
  %893 = vmatpush1.msra.mxu0 0.0
  %894 = vmatprep.subr.mxu0 0.0
  %895 = vmatpush1.msra.mxu0 0.0
  %896 = vmatprep.subr.mxu0 0.0
  %897 = vmatpush1.msra.mxu0 0.0
  %898 = vmatprep.subr.mxu0 0.0
  %899 = vmatpush1.msra.mxu0 0.0
  %900 = vmatprep.mubr.f32.mxu0 0.0
  %v901 = vand.u32 %v473, 4294901760
  %v902 = vsub.f32 %v473, %v901
  %v903 = vand.u32 %v902, 4294901760
  %904 = vmatmul.mubr.f32.gmra.mrb[0].mxu0 %v903
  %v905 = vpop.f32.mrb[0].mxu0
  %v906 = vadd.f32 %v817, %v905
  %v907 = vpop.f32.mrb[0].mxu0
  %908 = vdwg.mxu0
  %909 = vmatprep.subr.mxu0 0.0
  %v910 = vand.u32 %v33, 4294901760
  %v911 = vsub.f32 %v33, %v910
  %v912 = vand.u32 %v911, 4294901760
  %913 = vmatpush1.msra.mxu0 %v912
  %914 = vmatprep.subr.mxu0 0.0
  %v915 = vand.u32 %v34, 4294901760
  %v916 = vsub.f32 %v34, %v915
  %v917 = vand.u32 %v916, 4294901760
  %918 = vmatpush1.msra.mxu0 %v917
  %919 = vmatprep.subr.mxu0 0.0
  %v920 = vand.u32 %v35, 4294901760
  %v921 = vsub.f32 %v35, %v920
  %v922 = vand.u32 %v921, 4294901760
  %923 = vmatpush1.msra.mxu0 %v922
  %924 = vmatprep.subr.mxu0 0.0
  %v925 = vand.u32 %v36, 4294901760
  %v926 = vsub.f32 %v36, %v925
  %v927 = vand.u32 %v926, 4294901760
  %928 = vmatpush1.msra.mxu0 %v927
  %929 = vmatprep.subr.mxu0 0.0
  %v930 = vand.u32 %v37, 4294901760
  %v931 = vsub.f32 %v37, %v930
  %v932 = vand.u32 %v931, 4294901760
  %933 = vmatpush1.msra.mxu0 %v932
  %934 = vmatprep.subr.mxu0 0.0
  %v935 = vand.u32 %v38, 4294901760
  %v936 = vsub.f32 %v38, %v935
  %v937 = vand.u32 %v936, 4294901760
  %938 = vmatpush1.msra.mxu0 %v937
  %939 = vmatprep.subr.mxu0 0.0
  %v940 = vand.u32 %v39, 4294901760
  %v941 = vsub.f32 %v39, %v940
  %v942 = vand.u32 %v941, 4294901760
  %943 = vmatpush1.msra.mxu0 %v942
  %944 = vmatprep.subr.mxu0 0.0
  %v945 = vand.u32 %v40, 4294901760
  %v946 = vsub.f32 %v40, %v945
  %v947 = vand.u32 %v946, 4294901760
  %948 = vmatpush1.msra.mxu0 %v947
  %949 = vmatprep.subr.mxu0 0.0
  %v950 = vand.u32 %v41, 4294901760
  %v951 = vsub.f32 %v41, %v950
  %v952 = vand.u32 %v951, 4294901760
  %953 = vmatpush1.msra.mxu0 %v952
  %954 = vmatprep.subr.mxu0 0.0
  %v955 = vand.u32 %v42, 4294901760
  %v956 = vsub.f32 %v42, %v955
  %v957 = vand.u32 %v956, 4294901760
  %958 = vmatpush1.msra.mxu0 %v957
  %959 = vmatprep.subr.mxu0 0.0
  %v960 = vand.u32 %v43, 4294901760
  %v961 = vsub.f32 %v43, %v960
  %v962 = vand.u32 %v961, 4294901760
  %963 = vmatpush1.msra.mxu0 %v962
  %964 = vmatprep.subr.mxu0 0.0
  %v965 = vand.u32 %v44, 4294901760
  %v966 = vsub.f32 %v44, %v965
  %v967 = vand.u32 %v966, 4294901760
  %968 = vmatpush1.msra.mxu0 %v967
  %969 = vmatprep.subr.mxu0 0.0
  %v970 = vand.u32 %v45, 4294901760
  %v971 = vsub.f32 %v45, %v970
  %v972 = vand.u32 %v971, 4294901760
  %973 = vmatpush1.msra.mxu0 %v972
  %974 = vmatprep.subr.mxu0 0.0
  %v975 = vand.u32 %v46, 4294901760
  %v976 = vsub.f32 %v46, %v975
  %v977 = vand.u32 %v976, 4294901760
  %978 = vmatpush1.msra.mxu0 %v977
  %979 = vmatprep.subr.mxu0 0.0
  %v980 = vand.u32 %v47, 4294901760
  %v981 = vsub.f32 %v47, %v980
  %v982 = vand.u32 %v981, 4294901760
  %983 = vmatpush1.msra.mxu0 %v982
  %984 = vmatprep.subr.mxu0 0.0
  %v985 = vand.u32 %v48, 4294901760
  %v986 = vsub.f32 %v48, %v985
  %v987 = vand.u32 %v986, 4294901760
  %988 = vmatpush1.msra.mxu0 %v987
  %989 = vmatprep.subr.mxu0 0.0
  %990 = vmatpush1.msra.mxu0 0.0
  %991 = vmatprep.subr.mxu0 0.0
  %992 = vmatpush1.msra.mxu0 0.0
  %993 = vmatprep.subr.mxu0 0.0
  %994 = vmatpush1.msra.mxu0 0.0
  %995 = vmatprep.subr.mxu0 0.0
  %996 = vmatpush1.msra.mxu0 0.0
  %997 = vmatprep.subr.mxu0 0.0
  %998 = vmatpush1.msra.mxu0 0.0
  %999 = vmatprep.subr.mxu0 0.0
  %1000 = vmatpush1.msra.mxu0 0.0
  %1001 = vmatprep.subr.mxu0 0.0
  %1002 = vmatpush1.msra.mxu0 0.0
  %1003 = vmatprep.subr.mxu0 0.0
  %1004 = vmatpush1.msra.mxu0 0.0
  %1005 = vmatprep.subr.mxu0 0.0
  %1006 = vmatpush1.msra.mxu0 0.0
  %1007 = vmatprep.subr.mxu0 0.0
  %1008 = vmatpush1.msra.mxu0 0.0
  %1009 = vmatprep.subr.mxu0 0.0
  %1010 = vmatpush1.msra.mxu0 0.0
  %1011 = vmatprep.subr.mxu0 0.0
  %1012 = vmatpush1.msra.mxu0 0.0
  %1013 = vmatprep.subr.mxu0 0.0
  %1014 = vmatpush1.msra.mxu0 0.0
  %1015 = vmatprep.subr.mxu0 0.0
  %1016 = vmatpush1.msra.mxu0 0.0
  %1017 = vmatprep.subr.mxu0 0.0
  %1018 = vmatpush1.msra.mxu0 0.0
  %1019 = vmatprep.subr.mxu0 0.0
  %1020 = vmatpush1.msra.mxu0 0.0
  %1021 = vmatprep.mubr.f32.mxu0 0.0
  %v1022 = vand.u32 %v473, 4294901760
  %1023 = vmatmul.mubr.f32.gmra.mrb[0].mxu0 %v1022
  %v1024 = vpop.f32.mrb[0].mxu0
  %v1025 = vadd.f32 %v906, %v1024
  %v1026 = vpop.f32.mrb[0].mxu0
  %1027 = vdwg.mxu0
  %1028 = vmatprep.subr.mxu0 0.0
  %v1029 = vand.u32 %v33, 4294901760
  %1030 = vmatpush1.msra.mxu0 %v1029
  %1031 = vmatprep.subr.mxu0 0.0
  %v1032 = vand.u32 %v34, 4294901760
  %1033 = vmatpush1.msra.mxu0 %v1032
  %1034 = vmatprep.subr.mxu0 0.0
  %v1035 = vand.u32 %v35, 4294901760
  %1036 = vmatpush1.msra.mxu0 %v1035
  %1037 = vmatprep.subr.mxu0 0.0
  %v1038 = vand.u32 %v36, 4294901760
  %1039 = vmatpush1.msra.mxu0 %v1038
  %1040 = vmatprep.subr.mxu0 0.0
  %v1041 = vand.u32 %v37, 4294901760
  %1042 = vmatpush1.msra.mxu0 %v1041
  %1043 = vmatprep.subr.mxu0 0.0
  %v1044 = vand.u32 %v38, 4294901760
  %1045 = vmatpush1.msra.mxu0 %v1044
  %1046 = vmatprep.subr.mxu0 0.0
  %v1047 = vand.u32 %v39, 4294901760
  %1048 = vmatpush1.msra.mxu0 %v1047
  %1049 = vmatprep.subr.mxu0 0.0
  %v1050 = vand.u32 %v40, 4294901760
  %1051 = vmatpush1.msra.mxu0 %v1050
  %1052 = vmatprep.subr.mxu0 0.0
  %v1053 = vand.u32 %v41, 4294901760
  %1054 = vmatpush1.msra.mxu0 %v1053
  %1055 = vmatprep.subr.mxu0 0.0
  %v1056 = vand.u32 %v42, 4294901760
  %1057 = vmatpush1.msra.mxu0 %v1056
  %1058 = vmatprep.subr.mxu0 0.0
  %v1059 = vand.u32 %v43, 4294901760
  %1060 = vmatpush1.msra.mxu0 %v1059
  %1061 = vmatprep.subr.mxu0 0.0
  %v1062 = vand.u32 %v44, 4294901760
  %1063 = vmatpush1.msra.mxu0 %v1062
  %1064 = vmatprep.subr.mxu0 0.0
  %v1065 = vand.u32 %v45, 4294901760
  %1066 = vmatpush1.msra.mxu0 %v1065
  %1067 = vmatprep.subr.mxu0 0.0
  %v1068 = vand.u32 %v46, 4294901760
  %1069 = vmatpush1.msra.mxu0 %v1068
  %1070 = vmatprep.subr.mxu0 0.0
  %v1071 = vand.u32 %v47, 4294901760
  %1072 = vmatpush1.msra.mxu0 %v1071
  %1073 = vmatprep.subr.mxu0 0.0
  %v1074 = vand.u32 %v48, 4294901760
  %1075 = vmatpush1.msra.mxu0 %v1074
  %1076 = vmatprep.subr.mxu0 0.0
  %1077 = vmatpush1.msra.mxu0 0.0
  %1078 = vmatprep.subr.mxu0 0.0
  %1079 = vmatpush1.msra.mxu0 0.0
  %1080 = vmatprep.subr.mxu0 0.0
  %1081 = vmatpush1.msra.mxu0 0.0
  %1082 = vmatprep.subr.mxu0 0.0
  %1083 = vmatpush1.msra.mxu0 0.0
  %1084 = vmatprep.subr.mxu0 0.0
  %1085 = vmatpush1.msra.mxu0 0.0
  %1086 = vmatprep.subr.mxu0 0.0
  %1087 = vmatpush1.msra.mxu0 0.0
  %1088 = vmatprep.subr.mxu0 0.0
  %1089 = vmatpush1.msra.mxu0 0.0
  %1090 = vmatprep.subr.mxu0 0.0
  %1091 = vmatpush1.msra.mxu0 0.0
  %1092 = vmatprep.subr.mxu0 0.0
  %1093 = vmatpush1.msra.mxu0 0.0
  %1094 = vmatprep.subr.mxu0 0.0
  %1095 = vmatpush1.msra.mxu0 0.0
  %1096 = vmatprep.subr.mxu0 0.0
  %1097 = vmatpush1.msra.mxu0 0.0
  %1098 = vmatprep.subr.mxu0 0.0
  %1099 = vmatpush1.msra.mxu0 0.0
  %1100 = vmatprep.subr.mxu0 0.0
  %1101 = vmatpush1.msra.mxu0 0.0
  %1102 = vmatprep.subr.mxu0 0.0
  %1103 = vmatpush1.msra.mxu0 0.0
  %1104 = vmatprep.subr.mxu0 0.0
  %1105 = vmatpush1.msra.mxu0 0.0
  %1106 = vmatprep.subr.mxu0 0.0
  %1107 = vmatpush1.msra.mxu0 0.0
  %1108 = vmatprep.mubr.f32.mxu0 0.0
  %v1109 = vand.u32 %v473, 4294901760
  %1110 = vmatmul.mubr.f32.gmra.mrb[0].mxu0 %v1109
  %v1111 = vpop.f32.mrb[0].mxu0
  %v1112 = vadd.f32 %v1025, %v1111
  %v1113 = vpop.f32.mrb[0].mxu0
  %1114 = vdwg.mxu0
  %v1115 = vmul.f32 %v1112, 0.001953125
  %v1116 = vmul.f32 %v1115, %v1115
  %v1118 = vrot.slane %v1116, 7
  %v1120 = vsub.f32 %v1115, %v1118
  %v1121 = vmax.f32 %v1120, 0.0
  %v1122 = vadd.f32 %v1121, 1e-05
  %v1123 = vrsqrt.pop %v1122
  %v1126 = vunpack.c.l.s4 1966171168
  %v1127 = vunpack.c.0.s8 %v1126
  %v1128 = vlaneseq
  %v1129 = vshrl.u32 %v1128, 7
  %v1130 = vsub.s32 %v1127, %v1129
  %v1131 = vrot.slane %v1123, %v1130
  %v1132 = vcombine.high %v1131, %v1131
  %v1134 = vunpack.c.l.s4 1966171168
  %v1135 = vunpack.c.0.s8 %v1134
  %v1136 = vlaneseq
  %v1137 = vshrl.u32 %v1136, 7
  %v1138 = vsub.s32 %v1135, %v1137
  %v1139 = vrot.slane %v1132, %v1138
  %v1141 = vmul.f32 %v449, %v1139
  %v1142 = vmul.f32 %v1115, %v1141
  %v1143 = vsub.f32 %v450, %v1142
  %v1145 = vlaneseq
  %v1146 = vshrl.u32 %v1145, 7
  %v1147 = vsub.s32 0, %v1146
  %v1148 = vrot.slane %v1143, %v1147
  %v1150 = vsel %vm411, %v1141, %v1148
  %vm1151 = vcmask 64512
  %v1153 = vsel %vm1151, %v1150, 0
  %1155 = vmatprep.subr.mxu0 0.0
  %v1156 = vand.u32 %v49, 4294901760
  %1157 = vmatpush1.msra.mxu0 %v1156
  %1158 = vmatprep.subr.mxu0 0.0
  %1159 = vmatpush1.msra.mxu0 0.0
  %1160 = vmatprep.subr.mxu0 0.0
  %1161 = vmatpush1.msra.mxu0 0.0
  %1162 = vmatprep.subr.mxu0 0.0
  %1163 = vmatpush1.msra.mxu0 0.0
  %1164 = vmatprep.subr.mxu0 0.0
  %1165 = vmatpush1.msra.mxu0 0.0
  %1166 = vmatprep.subr.mxu0 0.0
  %1167 = vmatpush1.msra.mxu0 0.0
  %1168 = vmatprep.subr.mxu0 0.0
  %1169 = vmatpush1.msra.mxu0 0.0
  %1170 = vmatprep.subr.mxu0 0.0
  %1171 = vmatpush1.msra.mxu0 0.0
  %1172 = vmatprep.subr.mxu0 0.0
  %1173 = vmatpush1.msra.mxu0 0.0
  %1174 = vmatprep.subr.mxu0 0.0
  %1175 = vmatpush1.msra.mxu0 0.0
  %1176 = vmatprep.subr.mxu0 0.0
  %1177 = vmatpush1.msra.mxu0 0.0
  %1178 = vmatprep.subr.mxu0 0.0
  %1179 = vmatpush1.msra.mxu0 0.0
  %1180 = vmatprep.subr.mxu0 0.0
  %1181 = vmatpush1.msra.mxu0 0.0
  %1182 = vmatprep.subr.mxu0 0.0
  %1183 = vmatpush1.msra.mxu0 0.0
  %1184 = vmatprep.subr.mxu0 0.0
  %1185 = vmatpush1.msra.mxu0 0.0
  %1186 = vmatprep.subr.mxu0 0.0
  %1187 = vmatpush1.msra.mxu0 0.0
  %1188 = vmatprep.subr.mxu0 0.0
  %1189 = vmatpush1.msra.mxu0 0.0
  %1190 = vmatprep.subr.mxu0 0.0
  %1191 = vmatpush1.msra.mxu0 0.0
  %1192 = vmatprep.subr.mxu0 0.0
  %1193 = vmatpush1.msra.mxu0 0.0
  %1194 = vmatprep.subr.mxu0 0.0
  %1195 = vmatpush1.msra.mxu0 0.0
  %1196 = vmatprep.subr.mxu0 0.0
  %1197 = vmatpush1.msra.mxu0 0.0
  %1198 = vmatprep.subr.mxu0 0.0
  %1199 = vmatpush1.msra.mxu0 0.0
  %1200 = vmatprep.subr.mxu0 0.0
  %1201 = vmatpush1.msra.mxu0 0.0
  %1202 = vmatprep.subr.mxu0 0.0
  %1203 = vmatpush1.msra.mxu0 0.0
  %1204 = vmatprep.subr.mxu0 0.0
  %1205 = vmatpush1.msra.mxu0 0.0
  %1206 = vmatprep.subr.mxu0 0.0
  %1207 = vmatpush1.msra.mxu0 0.0
  %1208 = vmatprep.subr.mxu0 0.0
  %1209 = vmatpush1.msra.mxu0 0.0
  %1210 = vmatprep.subr.mxu0 0.0
  %1211 = vmatpush1.msra.mxu0 0.0
  %1212 = vmatprep.subr.mxu0 0.0
  %1213 = vmatpush1.msra.mxu0 0.0
  %1214 = vmatprep.subr.mxu0 0.0
  %1215 = vmatpush1.msra.mxu0 0.0
  %1216 = vmatprep.subr.mxu0 0.0
  %1217 = vmatpush1.msra.mxu0 0.0
  %1218 = vmatprep.subr.mxu0 0.0
  %1219 = vmatpush1.msra.mxu0 0.0
  %1220 = vmatprep.mubr.f32.mxu0 0.0
  %v1221 = vand.u32 %v1153, 4294901760
  %v1222 = vsub.f32 %v1153, %v1221
  %v1223 = vand.u32 %v1222, 4294901760
  %v1224 = vsub.f32 %v1222, %v1223
  %v1225 = vand.u32 %v1224, 4294901760
  %1226 = vmatmul.mubr.f32.gmra.mrb[0].mxu0 %v1225
  %v1227 = vpop.f32.mrb[0].mxu0
  %v1228 = vadd.f32 0.0, %v1227
  %v1229 = vpop.f32.mrb[0].mxu0
  %1230 = vdwg.mxu0
  %1231 = vmatprep.subr.mxu0 0.0
  %v1232 = vand.u32 %v49, 4294901760
  %v1233 = vsub.f32 %v49, %v1232
  %v1234 = vand.u32 %v1233, 4294901760
  %v1235 = vsub.f32 %v1233, %v1234
  %v1236 = vand.u32 %v1235, 4294901760
  %1237 = vmatpush1.msra.mxu0 %v1236
  %1238 = vmatprep.subr.mxu0 0.0
  %1239 = vmatpush1.msra.mxu0 0.0
  %1240 = vmatprep.subr.mxu0 0.0
  %1241 = vmatpush1.msra.mxu0 0.0
  %1242 = vmatprep.subr.mxu0 0.0
  %1243 = vmatpush1.msra.mxu0 0.0
  %1244 = vmatprep.subr.mxu0 0.0
  %1245 = vmatpush1.msra.mxu0 0.0
  %1246 = vmatprep.subr.mxu0 0.0
  %1247 = vmatpush1.msra.mxu0 0.0
  %1248 = vmatprep.subr.mxu0 0.0
  %1249 = vmatpush1.msra.mxu0 0.0
  %1250 = vmatprep.subr.mxu0 0.0
  %1251 = vmatpush1.msra.mxu0 0.0
  %1252 = vmatprep.subr.mxu0 0.0
  %1253 = vmatpush1.msra.mxu0 0.0
  %1254 = vmatprep.subr.mxu0 0.0
  %1255 = vmatpush1.msra.mxu0 0.0
  %1256 = vmatprep.subr.mxu0 0.0
  %1257 = vmatpush1.msra.mxu0 0.0
  %1258 = vmatprep.subr.mxu0 0.0
  %1259 = vmatpush1.msra.mxu0 0.0
  %1260 = vmatprep.subr.mxu0 0.0
  %1261 = vmatpush1.msra.mxu0 0.0
  %1262 = vmatprep.subr.mxu0 0.0
  %1263 = vmatpush1.msra.mxu0 0.0
  %1264 = vmatprep.subr.mxu0 0.0
  %1265 = vmatpush1.msra.mxu0 0.0
  %1266 = vmatprep.subr.mxu0 0.0
  %1267 = vmatpush1.msra.mxu0 0.0
  %1268 = vmatprep.subr.mxu0 0.0
  %1269 = vmatpush1.msra.mxu0 0.0
  %1270 = vmatprep.subr.mxu0 0.0
  %1271 = vmatpush1.msra.mxu0 0.0
  %1272 = vmatprep.subr.mxu0 0.0
  %1273 = vmatpush1.msra.mxu0 0.0
  %1274 = vmatprep.subr.mxu0 0.0
  %1275 = vmatpush1.msra.mxu0 0.0
  %1276 = vmatprep.subr.mxu0 0.0
  %1277 = vmatpush1.msra.mxu0 0.0
  %1278 = vmatprep.subr.mxu0 0.0
  %1279 = vmatpush1.msra.mxu0 0.0
  %1280 = vmatprep.subr.mxu0 0.0
  %1281 = vmatpush1.msra.mxu0 0.0
  %1282 = vmatprep.subr.mxu0 0.0
  %1283 = vmatpush1.msra.mxu0 0.0
  %1284 = vmatprep.subr.mxu0 0.0
  %1285 = vmatpush1.msra.mxu0 0.0
  %1286 = vmatprep.subr.mxu0 0.0
  %1287 = vmatpush1.msra.mxu0 0.0
  %1288 = vmatprep.subr.mxu0 0.0
  %1289 = vmatpush1.msra.mxu0 0.0
  %1290 = vmatprep.subr.mxu0 0.0
  %1291 = vmatpush1.msra.mxu0 0.0
  %1292 = vmatprep.subr.mxu0 0.0
  %1293 = vmatpush1.msra.mxu0 0.0
  %1294 = vmatprep.subr.mxu0 0.0
  %1295 = vmatpush1.msra.mxu0 0.0
  %1296 = vmatprep.subr.mxu0 0.0
  %1297 = vmatpush1.msra.mxu0 0.0
  %1298 = vmatprep.subr.mxu0 0.0
  %1299 = vmatpush1.msra.mxu0 0.0
  %1300 = vmatprep.mubr.f32.mxu0 0.0
  %v1301 = vand.u32 %v1153, 4294901760
  %1302 = vmatmul.mubr.f32.gmra.mrb[0].mxu0 %v1301
  %v1303 = vpop.f32.mrb[0].mxu0
  %v1304 = vadd.f32 %v1228, %v1303
  %v1305 = vpop.f32.mrb[0].mxu0
  %1306 = vdwg.mxu0
  %1307 = vmatprep.subr.mxu0 0.0
  %v1308 = vand.u32 %v49, 4294901760
  %v1309 = vsub.f32 %v49, %v1308
  %1310 = vmatpush1.msra.mxu0 %v1309
  %1311 = vmatprep.subr.mxu0 0.0
  %1312 = vmatpush1.msra.mxu0 0.0
  %1313 = vmatprep.subr.mxu0 0.0
  %1314 = vmatpush1.msra.mxu0 0.0
  %1315 = vmatprep.subr.mxu0 0.0
  %1316 = vmatpush1.msra.mxu0 0.0
  %1317 = vmatprep.subr.mxu0 0.0
  %1318 = vmatpush1.msra.mxu0 0.0
  %1319 = vmatprep.subr.mxu0 0.0
  %1320 = vmatpush1.msra.mxu0 0.0
  %1321 = vmatprep.subr.mxu0 0.0
  %1322 = vmatpush1.msra.mxu0 0.0
  %1323 = vmatprep.subr.mxu0 0.0
  %1324 = vmatpush1.msra.mxu0 0.0
  %1325 = vmatprep.subr.mxu0 0.0
  %1326 = vmatpush1.msra.mxu0 0.0
  %1327 = vmatprep.subr.mxu0 0.0
  %1328 = vmatpush1.msra.mxu0 0.0
  %1329 = vmatprep.subr.mxu0 0.0
  %1330 = vmatpush1.msra.mxu0 0.0
  %1331 = vmatprep.subr.mxu0 0.0
  %1332 = vmatpush1.msra.mxu0 0.0
  %1333 = vmatprep.subr.mxu0 0.0
  %1334 = vmatpush1.msra.mxu0 0.0
  %1335 = vmatprep.subr.mxu0 0.0
  %1336 = vmatpush1.msra.mxu0 0.0
  %1337 = vmatprep.subr.mxu0 0.0
  %1338 = vmatpush1.msra.mxu0 0.0
  %1339 = vmatprep.subr.mxu0 0.0
  %1340 = vmatpush1.msra.mxu0 0.0
  %1341 = vmatprep.subr.mxu0 0.0
  %1342 = vmatpush1.msra.mxu0 0.0
  %1343 = vmatprep.subr.mxu0 0.0
  %1344 = vmatpush1.msra.mxu0 0.0
  %1345 = vmatprep.subr.mxu0 0.0
  %1346 = vmatpush1.msra.mxu0 0.0
  %1347 = vmatprep.subr.mxu0 0.0
  %1348 = vmatpush1.msra.mxu0 0.0
  %1349 = vmatprep.subr.mxu0 0.0
  %1350 = vmatpush1.msra.mxu0 0.0
  %1351 = vmatprep.subr.mxu0 0.0
  %1352 = vmatpush1.msra.mxu0 0.0
  %1353 = vmatprep.subr.mxu0 0.0
  %1354 = vmatpush1.msra.mxu0 0.0
  %1355 = vmatprep.subr.mxu0 0.0
  %1356 = vmatpush1.msra.mxu0 0.0
  %1357 = vmatprep.subr.mxu0 0.0
  %1358 = vmatpush1.msra.mxu0 0.0
  %1359 = vmatprep.subr.mxu0 0.0
  %1360 = vmatpush1.msra.mxu0 0.0
  %1361 = vmatprep.subr.mxu0 0.0
  %1362 = vmatpush1.msra.mxu0 0.0
  %1363 = vmatprep.subr.mxu0 0.0
  %1364 = vmatpush1.msra.mxu0 0.0
  %1365 = vmatprep.subr.mxu0 0.0
  %1366 = vmatpush1.msra.mxu0 0.0
  %1367 = vmatprep.subr.mxu0 0.0
  %1368 = vmatpush1.msra.mxu0 0.0
  %1369 = vmatprep.subr.mxu0 0.0
  %1370 = vmatpush1.msra.mxu0 0.0
  %1371 = vmatprep.subr.mxu0 0.0
  %1372 = vmatpush1.msra.mxu0 0.0
  %1373 = vmatprep.mubr.f32.mxu0 0.0
  %v1374 = vand.u32 %v1153, 4294901760
  %v1375 = vsub.f32 %v1153, %v1374
  %1376 = vmatmul.mubr.f32.gmra.mrb[0].mxu0 %v1375
  %v1377 = vpop.f32.mrb[0].mxu0
  %v1378 = vadd.f32 %v1304, %v1377
  %v1379 = vpop.f32.mrb[0].mxu0
  %1380 = vdwg.mxu0
  %1381 = vmatprep.subr.mxu0 0.0
  %v1382 = vand.u32 %v49, 4294901760
  %1383 = vmatpush1.msra.mxu0 %v1382
  %1384 = vmatprep.subr.mxu0 0.0
  %1385 = vmatpush1.msra.mxu0 0.0
  %1386 = vmatprep.subr.mxu0 0.0
  %1387 = vmatpush1.msra.mxu0 0.0
  %1388 = vmatprep.subr.mxu0 0.0
  %1389 = vmatpush1.msra.mxu0 0.0
  %1390 = vmatprep.subr.mxu0 0.0
  %1391 = vmatpush1.msra.mxu0 0.0
  %1392 = vmatprep.subr.mxu0 0.0
  %1393 = vmatpush1.msra.mxu0 0.0
  %1394 = vmatprep.subr.mxu0 0.0
  %1395 = vmatpush1.msra.mxu0 0.0
  %1396 = vmatprep.subr.mxu0 0.0
  %1397 = vmatpush1.msra.mxu0 0.0
  %1398 = vmatprep.subr.mxu0 0.0
  %1399 = vmatpush1.msra.mxu0 0.0
  %1400 = vmatprep.subr.mxu0 0.0
  %1401 = vmatpush1.msra.mxu0 0.0
  %1402 = vmatprep.subr.mxu0 0.0
  %1403 = vmatpush1.msra.mxu0 0.0
  %1404 = vmatprep.subr.mxu0 0.0
  %1405 = vmatpush1.msra.mxu0 0.0
  %1406 = vmatprep.subr.mxu0 0.0
  %1407 = vmatpush1.msra.mxu0 0.0
  %1408 = vmatprep.subr.mxu0 0.0
  %1409 = vmatpush1.msra.mxu0 0.0
  %1410 = vmatprep.subr.mxu0 0.0
  %1411 = vmatpush1.msra.mxu0 0.0
  %1412 = vmatprep.subr.mxu0 0.0
  %1413 = vmatpush1.msra.mxu0 0.0
  %1414 = vmatprep.subr.mxu0 0.0
  %1415 = vmatpush1.msra.mxu0 0.0
  %1416 = vmatprep.subr.mxu0 0.0
  %1417 = vmatpush1.msra.mxu0 0.0
  %1418 = vmatprep.subr.mxu0 0.0
  %1419 = vmatpush1.msra.mxu0 0.0
  %1420 = vmatprep.subr.mxu0 0.0
  %1421 = vmatpush1.msra.mxu0 0.0
  %1422 = vmatprep.subr.mxu0 0.0
  %1423 = vmatpush1.msra.mxu0 0.0
  %1424 = vmatprep.subr.mxu0 0.0
  %1425 = vmatpush1.msra.mxu0 0.0
  %1426 = vmatprep.subr.mxu0 0.0
  %1427 = vmatpush1.msra.mxu0 0.0
  %1428 = vmatprep.subr.mxu0 0.0
  %1429 = vmatpush1.msra.mxu0 0.0
  %1430 = vmatprep.subr.mxu0 0.0
  %1431 = vmatpush1.msra.mxu0 0.0
  %1432 = vmatprep.subr.mxu0 0.0
  %1433 = vmatpush1.msra.mxu0 0.0
  %1434 = vmatprep.subr.mxu0 0.0
  %1435 = vmatpush1.msra.mxu0 0.0
  %1436 = vmatprep.subr.mxu0 0.0
  %1437 = vmatpush1.msra.mxu0 0.0
  %1438 = vmatprep.subr.mxu0 0.0
  %1439 = vmatpush1.msra.mxu0 0.0
  %1440 = vmatprep.subr.mxu0 0.0
  %1441 = vmatpush1.msra.mxu0 0.0
  %1442 = vmatprep.subr.mxu0 0.0
  %1443 = vmatpush1.msra.mxu0 0.0
  %1444 = vmatprep.subr.mxu0 0.0
  %1445 = vmatpush1.msra.mxu0 0.0
  %1446 = vmatprep.mubr.f32.mxu0 0.0
  %v1447 = vand.u32 %v1153, 4294901760
  %v1448 = vsub.f32 %v1153, %v1447
  %v1449 = vand.u32 %v1448, 4294901760
  %1450 = vmatmul.mubr.f32.gmra.mrb[0].mxu0 %v1449
  %v1451 = vpop.f32.mrb[0].mxu0
  %v1452 = vadd.f32 %v1378, %v1451
  %v1453 = vpop.f32.mrb[0].mxu0
  %1454 = vdwg.mxu0
  %1455 = vmatprep.subr.mxu0 0.0
  %v1456 = vand.u32 %v49, 4294901760
  %v1457 = vsub.f32 %v49, %v1456
  %v1458 = vand.u32 %v1457, 4294901760
  %1459 = vmatpush1.msra.mxu0 %v1458
  %1460 = vmatprep.subr.mxu0 0.0
  %1461 = vmatpush1.msra.mxu0 0.0
  %1462 = vmatprep.subr.mxu0 0.0
  %1463 = vmatpush1.msra.mxu0 0.0
  %1464 = vmatprep.subr.mxu0 0.0
  %1465 = vmatpush1.msra.mxu0 0.0
  %1466 = vmatprep.subr.mxu0 0.0
  %1467 = vmatpush1.msra.mxu0 0.0
  %1468 = vmatprep.subr.mxu0 0.0
  %1469 = vmatpush1.msra.mxu0 0.0
  %1470 = vmatprep.subr.mxu0 0.0
  %1471 = vmatpush1.msra.mxu0 0.0
  %1472 = vmatprep.subr.mxu0 0.0
  %1473 = vmatpush1.msra.mxu0 0.0
  %1474 = vmatprep.subr.mxu0 0.0
  %1475 = vmatpush1.msra.mxu0 0.0
  %1476 = vmatprep.subr.mxu0 0.0
  %1477 = vmatpush1.msra.mxu0 0.0
  %1478 = vmatprep.subr.mxu0 0.0
  %1479 = vmatpush1.msra.mxu0 0.0
  %1480 = vmatprep.subr.mxu0 0.0
  %1481 = vmatpush1.msra.mxu0 0.0
  %1482 = vmatprep.subr.mxu0 0.0
  %1483 = vmatpush1.msra.mxu0 0.0
  %1484 = vmatprep.subr.mxu0 0.0
  %1485 = vmatpush1.msra.mxu0 0.0
  %1486 = vmatprep.subr.mxu0 0.0
  %1487 = vmatpush1.msra.mxu0 0.0
  %1488 = vmatprep.subr.mxu0 0.0
  %1489 = vmatpush1.msra.mxu0 0.0
  %1490 = vmatprep.subr.mxu0 0.0
  %1491 = vmatpush1.msra.mxu0 0.0
  %1492 = vmatprep.subr.mxu0 0.0
  %1493 = vmatpush1.msra.mxu0 0.0
  %1494 = vmatprep.subr.mxu0 0.0
  %1495 = vmatpush1.msra.mxu0 0.0
  %1496 = vmatprep.subr.mxu0 0.0
  %1497 = vmatpush1.msra.mxu0 0.0
  %1498 = vmatprep.subr.mxu0 0.0
  %1499 = vmatpush1.msra.mxu0 0.0
  %1500 = vmatprep.subr.mxu0 0.0
  %1501 = vmatpush1.msra.mxu0 0.0
  %1502 = vmatprep.subr.mxu0 0.0
  %1503 = vmatpush1.msra.mxu0 0.0
  %1504 = vmatprep.subr.mxu0 0.0
  %1505 = vmatpush1.msra.mxu0 0.0
  %1506 = vmatprep.subr.mxu0 0.0
  %1507 = vmatpush1.msra.mxu0 0.0
  %1508 = vmatprep.subr.mxu0 0.0
  %1509 = vmatpush1.msra.mxu0 0.0
  %1510 = vmatprep.subr.mxu0 0.0
  %1511 = vmatpush1.msra.mxu0 0.0
  %1512 = vmatprep.subr.mxu0 0.0
  %1513 = vmatpush1.msra.mxu0 0.0
  %1514 = vmatprep.subr.mxu0 0.0
  %1515 = vmatpush1.msra.mxu0 0.0
  %1516 = vmatprep.subr.mxu0 0.0
  %1517 = vmatpush1.msra.mxu0 0.0
  %1518 = vmatprep.subr.mxu0 0.0
  %1519 = vmatpush1.msra.mxu0 0.0
  %1520 = vmatprep.subr.mxu0 0.0
  %1521 = vmatpush1.msra.mxu0 0.0
  %1522 = vmatprep.mubr.f32.mxu0 0.0
  %v1523 = vand.u32 %v1153, 4294901760
  %1524 = vmatmul.mubr.f32.gmra.mrb[0].mxu0 %v1523
  %v1525 = vpop.f32.mrb[0].mxu0
  %v1526 = vadd.f32 %v1452, %v1525
  %v1527 = vpop.f32.mrb[0].mxu0
  %1528 = vdwg.mxu0
  %1529 = vmatprep.subr.mxu0 0.0
  %v1530 = vand.u32 %v49, 4294901760
  %1531 = vmatpush1.msra.mxu0 %v1530
  %1532 = vmatprep.subr.mxu0 0.0
  %1533 = vmatpush1.msra.mxu0 0.0
  %1534 = vmatprep.subr.mxu0 0.0
  %1535 = vmatpush1.msra.mxu0 0.0
  %1536 = vmatprep.subr.mxu0 0.0
  %1537 = vmatpush1.msra.mxu0 0.0
  %1538 = vmatprep.subr.mxu0 0.0
  %1539 = vmatpush1.msra.mxu0 0.0
  %1540 = vmatprep.subr.mxu0 0.0
  %1541 = vmatpush1.msra.mxu0 0.0
  %1542 = vmatprep.subr.mxu0 0.0
  %1543 = vmatpush1.msra.mxu0 0.0
  %1544 = vmatprep.subr.mxu0 0.0
  %1545 = vmatpush1.msra.mxu0 0.0
  %1546 = vmatprep.subr.mxu0 0.0
  %1547 = vmatpush1.msra.mxu0 0.0
  %1548 = vmatprep.subr.mxu0 0.0
  %1549 = vmatpush1.msra.mxu0 0.0
  %1550 = vmatprep.subr.mxu0 0.0
  %1551 = vmatpush1.msra.mxu0 0.0
  %1552 = vmatprep.subr.mxu0 0.0
  %1553 = vmatpush1.msra.mxu0 0.0
  %1554 = vmatprep.subr.mxu0 0.0
  %1555 = vmatpush1.msra.mxu0 0.0
  %1556 = vmatprep.subr.mxu0 0.0
  %1557 = vmatpush1.msra.mxu0 0.0
  %1558 = vmatprep.subr.mxu0 0.0
  %1559 = vmatpush1.msra.mxu0 0.0
  %1560 = vmatprep.subr.mxu0 0.0
  %1561 = vmatpush1.msra.mxu0 0.0
  %1562 = vmatprep.subr.mxu0 0.0
  %1563 = vmatpush1.msra.mxu0 0.0
  %1564 = vmatprep.subr.mxu0 0.0
  %1565 = vmatpush1.msra.mxu0 0.0
  %1566 = vmatprep.subr.mxu0 0.0
  %1567 = vmatpush1.msra.mxu0 0.0
  %1568 = vmatprep.subr.mxu0 0.0
  %1569 = vmatpush1.msra.mxu0 0.0
  %1570 = vmatprep.subr.mxu0 0.0
  %1571 = vmatpush1.msra.mxu0 0.0
  %1572 = vmatprep.subr.mxu0 0.0
  %1573 = vmatpush1.msra.mxu0 0.0
  %1574 = vmatprep.subr.mxu0 0.0
  %1575 = vmatpush1.msra.mxu0 0.0
  %1576 = vmatprep.subr.mxu0 0.0
  %1577 = vmatpush1.msra.mxu0 0.0
  %1578 = vmatprep.subr.mxu0 0.0
  %1579 = vmatpush1.msra.mxu0 0.0
  %1580 = vmatprep.subr.mxu0 0.0
  %1581 = vmatpush1.msra.mxu0 0.0
  %1582 = vmatprep.subr.mxu0 0.0
  %1583 = vmatpush1.msra.mxu0 0.0
  %1584 = vmatprep.subr.mxu0 0.0
  %1585 = vmatpush1.msra.mxu0 0.0
  %1586 = vmatprep.subr.mxu0 0.0
  %1587 = vmatpush1.msra.mxu0 0.0
  %1588 = vmatprep.subr.mxu0 0.0
  %1589 = vmatpush1.msra.mxu0 0.0
  %1590 = vmatprep.subr.mxu0 0.0
  %1591 = vmatpush1.msra.mxu0 0.0
  %1592 = vmatprep.subr.mxu0 0.0
  %1593 = vmatpush1.msra.mxu0 0.0
  %1594 = vmatprep.mubr.f32.mxu0 0.0
  %v1595 = vand.u32 %v1153, 4294901760
  %1596 = vmatmul.mubr.f32.gmra.mrb[0].mxu0 %v1595
  %v1597 = vpop.f32.mrb[0].mxu0
  %v1598 = vadd.f32 %v1526, %v1597
  %v1599 = vpop.f32.mrb[0].mxu0
  %1600 = vdwg.mxu0
  %v1601 = vlaneseq
  %v1602 = vshrl.u32 %v1601, 7
  %v1603 = vsub.s32 0, %v1602
  %v1604 = vrot.slane %v1598, %v1603
  %v1605 = vmul.f32 %v445, %v1604
  %v1606 = vmul.f32 %v446, %v1604
  %v1607 = vmul.f32 %v447, %v1604
  %v1608 = vmul.f32 %v448, %v1604
  %v1609 = vlaneseq
  %v1610 = vshrl.u32 %v1609, 7
  %v1611 = vsub.s32 1, %v1610
  %v1612 = vrot.slane %v1598, %v1611
  %v1613 = vadd.f32 %v1605, %v1612
  %v1614 = vadd.f32 %v1606, %v1612
  %v1615 = vadd.f32 %v1607, %v1612
  %v1616 = vadd.f32 %v1608, %v1612
  %v1617 = vmax.f32 %v1613, 0.0
  %v1618 = vmax.f32 %v1614, 0.0
  %v1619 = vmax.f32 %v1615, 0.0
  %v1620 = vmax.f32 %v1616, 0.0
  %v1621 = vpack.c.bf16 %v1618, %v1617
  %v1622 = vpack.c.bf16 %v1620, %v1619
  %v1623 = vld [vmem:[%s2] sm:$0xf]
  %v1624 = vld [vmem:[%s2 + $0x4] sm:$0xf]
  %v1625 = vld [vmem:[%s2 + $0x8] sm:$0xf]
  %v1626 = vld [vmem:[%s2 + $0xc] sm:$0xf]
  %v1627 = vld [vmem:[%s2 + $0x10] sm:$0xf]
  %v1628 = vld [vmem:[%s2 + $0x14] sm:$0xf]
  %v1629 = vld [vmem:[%s2 + $0x18] sm:$0xf]
  %v1630 = vld [vmem:[%s2 + $0x1c] sm:$0xf]
  %v1631 = vld [vmem:[%s2 + $0x20] sm:$0xf]
  %v1632 = vld [vmem:[%s2 + $0x24] sm:$0xf]
  %v1633 = vld [vmem:[%s2 + $0x28] sm:$0xf]
  %v1634 = vld [vmem:[%s2 + $0x2c] sm:$0xf]
  %v1635 = vld [vmem:[%s2 + $0x30] sm:$0xf]
  %v1636 = vld [vmem:[%s2 + $0x34] sm:$0xf]
  %v1637 = vld [vmem:[%s2 + $0x38] sm:$0xf]
  %v1638 = vld [vmem:[%s2 + $0x3c] sm:$0xf]
  %v1655 = vunpack.c.l.b16 %v1623
  %v1656 = vunpack.c.l.b16 %v1624
  %v1657 = vunpack.c.l.b16 %v1625
  %v1658 = vunpack.c.l.b16 %v1626
  %v1659 = vunpack.c.l.b16 %v1627
  %v1660 = vunpack.c.l.b16 %v1628
  %v1661 = vunpack.c.l.b16 %v1629
  %v1662 = vunpack.c.l.b16 %v1630
  %v1663 = vunpack.c.l.b16 %v1631
  %v1664 = vunpack.c.l.b16 %v1632
  %v1665 = vunpack.c.l.b16 %v1633
  %v1666 = vunpack.c.l.b16 %v1634
  %v1667 = vunpack.c.l.b16 %v1635
  %v1668 = vunpack.c.l.b16 %v1636
  %v1669 = vunpack.c.l.b16 %v1637
  %v1670 = vunpack.c.l.b16 %v1638
  %v1671 = vpack.c.b16 %v1656, %v1655
  %v1672 = vpack.c.b16 %v1658, %v1657
  %v1673 = vpack.c.b16 %v1660, %v1659
  %v1674 = vpack.c.b16 %v1662, %v1661
  %v1675 = vpack.c.b16 %v1664, %v1663
  %v1676 = vpack.c.b16 %v1666, %v1665
  %v1677 = vpack.c.b16 %v1668, %v1667
  %v1678 = vpack.c.b16 %v1670, %v1669
  %1687 = vmatprep.subr.bf16.mxu0 0
  %1688 = vmatpush1.bf16.msra.mxu0 %v1671
  %1689 = vmatprep.subr.bf16.mxu0 0
  %1690 = vmatpush1.bf16.msra.mxu0 %v1672
  %1691 = vmatprep.subr.bf16.mxu0 0
  %1692 = vmatpush1.bf16.msra.mxu0 %v1673
  %1693 = vmatprep.subr.bf16.mxu0 0
  %1694 = vmatpush1.bf16.msra.mxu0 %v1674
  %1695 = vmatprep.subr.bf16.mxu0 0
  %1696 = vmatpush1.bf16.msra.mxu0 %v1675
  %1697 = vmatprep.subr.bf16.mxu0 0
  %1698 = vmatpush1.bf16.msra.mxu0 %v1676
  %1699 = vmatprep.subr.bf16.mxu0 0
  %1700 = vmatpush1.bf16.msra.mxu0 %v1677
  %1701 = vmatprep.subr.bf16.mxu0 0
  %1702 = vmatpush1.bf16.msra.mxu0 %v1678
  %1703 = vmatprep.subr.bf16.mxu0 0
  %1704 = vmatpush1.bf16.msra.mxu0 0
  %1705 = vmatprep.subr.bf16.mxu0 0
  %1706 = vmatpush1.bf16.msra.mxu0 0
  %1707 = vmatprep.subr.bf16.mxu0 0
  %1708 = vmatpush1.bf16.msra.mxu0 0
  %1709 = vmatprep.subr.bf16.mxu0 0
  %1710 = vmatpush1.bf16.msra.mxu0 0
  %1711 = vmatprep.subr.bf16.mxu0 0
  %1712 = vmatpush1.bf16.msra.mxu0 0
  %1713 = vmatprep.subr.bf16.mxu0 0
  %1714 = vmatpush1.bf16.msra.mxu0 0
  %1715 = vmatprep.subr.bf16.mxu0 0
  %1716 = vmatpush1.bf16.msra.mxu0 0
  %1717 = vmatprep.subr.bf16.mxu0 0
  %1718 = vmatpush1.bf16.msra.mxu0 0
  %1719 = vmatprep.mubr.bf16.mxu0 0
  %1720 = vmatmul.mubr.bf16.gmra.mrb[0].mxu0 %v1621
  %v1721 = vpop.f32.mrb[0].mxu0
  %v1722 = vadd.f32 0.0, %v1721
  %v1723 = vpop.f32.mrb[0].mxu0
  %v1724 = vpop.f32.mrb[0].mxu0
  %v1725 = vadd.f32 0.0, %v1724
  %v1726 = vpop.f32.mrb[0].mxu0
  %1727 = vmatprep.mubr.bf16.mxu0 0
  %1728 = vmatmul.mubr.bf16.gmra.mrb[0].mxu0 %v1622
  %v1729 = vpop.f32.mrb[0].mxu0
  %v1730 = vadd.f32 0.0, %v1729
  %v1731 = vpop.f32.mrb[0].mxu0
  %v1732 = vpop.f32.mrb[0].mxu0
  %v1733 = vadd.f32 0.0, %v1732
  %v1734 = vpop.f32.mrb[0].mxu0
  %1735 = vdwg.mxu0
  %s1736 = scalar_lea.vmem %s2, 64
  %v1737 = vld [vmem:[%s1736] sm:$0xf]
  %v1738 = vld [vmem:[%s1736 + $0x4] sm:$0xf]
  %v1739 = vld [vmem:[%s1736 + $0x8] sm:$0xf]
  %v1740 = vld [vmem:[%s1736 + $0xc] sm:$0xf]
  %v1741 = vld [vmem:[%s1736 + $0x10] sm:$0xf]
  %v1742 = vld [vmem:[%s1736 + $0x14] sm:$0xf]
  %v1743 = vld [vmem:[%s1736 + $0x18] sm:$0xf]
  %v1744 = vld [vmem:[%s1736 + $0x1c] sm:$0xf]
  %v1745 = vld [vmem:[%s1736 + $0x20] sm:$0xf]
  %v1746 = vld [vmem:[%s1736 + $0x24] sm:$0xf]
  %v1747 = vld [vmem:[%s1736 + $0x28] sm:$0xf]
  %v1748 = vld [vmem:[%s1736 + $0x2c] sm:$0xf]
  %v1749 = vld [vmem:[%s1736 + $0x30] sm:$0xf]
  %v1750 = vld [vmem:[%s1736 + $0x34] sm:$0xf]
  %v1751 = vld [vmem:[%s1736 + $0x38] sm:$0xf]
  %v1752 = vld [vmem:[%s1736 + $0x3c] sm:$0xf]
  %v1769 = vunpack.c.l.b16 %v1737
  %v1770 = vunpack.c.l.b16 %v1738
  %v1771 = vunpack.c.l.b16 %v1739
  %v1772 = vunpack.c.l.b16 %v1740
  %v1773 = vunpack.c.l.b16 %v1741
  %v1774 = vunpack.c.l.b16 %v1742
  %v1775 = vunpack.c.l.b16 %v1743
  %v1776 = vunpack.c.l.b16 %v1744
  %v1777 = vunpack.c.l.b16 %v1745
  %v1778 = vunpack.c.l.b16 %v1746
  %v1779 = vunpack.c.l.b16 %v1747
  %v1780 = vunpack.c.l.b16 %v1748
  %v1781 = vunpack.c.l.b16 %v1749
  %v1782 = vunpack.c.l.b16 %v1750
  %v1783 = vunpack.c.l.b16 %v1751
  %v1784 = vunpack.c.l.b16 %v1752
  %v1785 = vpack.c.b16 %v1770, %v1769
  %v1786 = vpack.c.b16 %v1772, %v1771
  %v1787 = vpack.c.b16 %v1774, %v1773
  %v1788 = vpack.c.b16 %v1776, %v1775
  %v1789 = vpack.c.b16 %v1778, %v1777
  %v1790 = vpack.c.b16 %v1780, %v1779
  %v1791 = vpack.c.b16 %v1782, %v1781
  %v1792 = vpack.c.b16 %v1784, %v1783
  %1801 = vmatprep.subr.bf16.mxu0 0
  %1802 = vmatpush1.bf16.msra.mxu0 %v1785
  %1803 = vmatprep.subr.bf16.mxu0 0
  %1804 = vmatpush1.bf16.msra.mxu0 %v1786
  %1805 = vmatprep.subr.bf16.mxu0 0
  %1806 = vmatpush1.bf16.msra.mxu0 %v1787
  %1807 = vmatprep.subr.bf16.mxu0 0
  %1808 = vmatpush1.bf16.msra.mxu0 %v1788
  %1809 = vmatprep.subr.bf16.mxu0 0
  %1810 = vmatpush1.bf16.msra.mxu0 %v1789
  %1811 = vmatprep.subr.bf16.mxu0 0
  %1812 = vmatpush1.bf16.msra.mxu0 %v1790
  %1813 = vmatprep.subr.bf16.mxu0 0
  %1814 = vmatpush1.bf16.msra.mxu0 %v1791
  %1815 = vmatprep.subr.bf16.mxu0 0
  %1816 = vmatpush1.bf16.msra.mxu0 %v1792
  %1817 = vmatprep.subr.bf16.mxu0 0
  %1818 = vmatpush1.bf16.msra.mxu0 0
  %1819 = vmatprep.subr.bf16.mxu0 0
  %1820 = vmatpush1.bf16.msra.mxu0 0
  %1821 = vmatprep.subr.bf16.mxu0 0
  %1822 = vmatpush1.bf16.msra.mxu0 0
  %1823 = vmatprep.subr.bf16.mxu0 0
  %1824 = vmatpush1.bf16.msra.mxu0 0
  %1825 = vmatprep.subr.bf16.mxu0 0
  %1826 = vmatpush1.bf16.msra.mxu0 0
  %1827 = vmatprep.subr.bf16.mxu0 0
  %1828 = vmatpush1.bf16.msra.mxu0 0
  %1829 = vmatprep.subr.bf16.mxu0 0
  %1830 = vmatpush1.bf16.msra.mxu0 0
  %1831 = vmatprep.subr.bf16.mxu0 0
  %1832 = vmatpush1.bf16.msra.mxu0 0
  %1833 = vmatprep.mubr.bf16.mxu0 0
  %1834 = vmatmul.mubr.bf16.gmra.mrb[0].mxu0 %v1621
  %v1835 = vpop.f32.mrb[0].mxu0
  %v1836 = vadd.f32 0.0, %v1835
  %v1837 = vpop.f32.mrb[0].mxu0
  %v1838 = vpop.f32.mrb[0].mxu0
  %v1839 = vadd.f32 0.0, %v1838
  %v1840 = vpop.f32.mrb[0].mxu0
  %1841 = vmatprep.mubr.bf16.mxu0 0
  %1842 = vmatmul.mubr.bf16.gmra.mrb[0].mxu0 %v1622
  %v1843 = vpop.f32.mrb[0].mxu0
  %v1844 = vadd.f32 0.0, %v1843
  %v1845 = vpop.f32.mrb[0].mxu0
  %v1846 = vpop.f32.mrb[0].mxu0
  %v1847 = vadd.f32 0.0, %v1846
  %v1848 = vpop.f32.mrb[0].mxu0
  %1849 = vdwg.mxu0
  %s1850 = scalar_lea.vmem %s2, 128
  %v1851 = vld [vmem:[%s1850] sm:$0xf]
  %v1852 = vld [vmem:[%s1850 + $0x4] sm:$0xf]
  %v1853 = vld [vmem:[%s1850 + $0x8] sm:$0xf]
  %v1854 = vld [vmem:[%s1850 + $0xc] sm:$0xf]
  %v1855 = vld [vmem:[%s1850 + $0x10] sm:$0xf]
  %v1856 = vld [vmem:[%s1850 + $0x14] sm:$0xf]
  %v1857 = vld [vmem:[%s1850 + $0x18] sm:$0xf]
  %v1858 = vld [vmem:[%s1850 + $0x1c] sm:$0xf]
  %v1859 = vld [vmem:[%s1850 + $0x20] sm:$0xf]
  %v1860 = vld [vmem:[%s1850 + $0x24] sm:$0xf]
  %v1861 = vld [vmem:[%s1850 + $0x28] sm:$0xf]
  %v1862 = vld [vmem:[%s1850 + $0x2c] sm:$0xf]
  %v1863 = vld [vmem:[%s1850 + $0x30] sm:$0xf]
  %v1864 = vld [vmem:[%s1850 + $0x34] sm:$0xf]
  %v1865 = vld [vmem:[%s1850 + $0x38] sm:$0xf]
  %v1866 = vld [vmem:[%s1850 + $0x3c] sm:$0xf]
  %v1883 = vunpack.c.l.b16 %v1851
  %v1884 = vunpack.c.l.b16 %v1852
  %v1885 = vunpack.c.l.b16 %v1853
  %v1886 = vunpack.c.l.b16 %v1854
  %v1887 = vunpack.c.l.b16 %v1855
  %v1888 = vunpack.c.l.b16 %v1856
  %v1889 = vunpack.c.l.b16 %v1857
  %v1890 = vunpack.c.l.b16 %v1858
  %v1891 = vunpack.c.l.b16 %v1859
  %v1892 = vunpack.c.l.b16 %v1860
  %v1893 = vunpack.c.l.b16 %v1861
  %v1894 = vunpack.c.l.b16 %v1862
  %v1895 = vunpack.c.l.b16 %v1863
  %v1896 = vunpack.c.l.b16 %v1864
  %v1897 = vunpack.c.l.b16 %v1865
  %v1898 = vunpack.c.l.b16 %v1866
  %v1899 = vpack.c.b16 %v1884, %v1883
  %v1900 = vpack.c.b16 %v1886, %v1885
  %v1901 = vpack.c.b16 %v1888, %v1887
  %v1902 = vpack.c.b16 %v1890, %v1889
  %v1903 = vpack.c.b16 %v1892, %v1891
  %v1904 = vpack.c.b16 %v1894, %v1893
  %v1905 = vpack.c.b16 %v1896, %v1895
  %v1906 = vpack.c.b16 %v1898, %v1897
  %1915 = vmatprep.subr.bf16.mxu0 0
  %1916 = vmatpush1.bf16.msra.mxu0 %v1899
  %1917 = vmatprep.subr.bf16.mxu0 0
  %1918 = vmatpush1.bf16.msra.mxu0 %v1900
  %1919 = vmatprep.subr.bf16.mxu0 0
  %1920 = vmatpush1.bf16.msra.mxu0 %v1901
  %1921 = vmatprep.subr.bf16.mxu0 0
  %1922 = vmatpush1.bf16.msra.mxu0 %v1902
  %1923 = vmatprep.subr.bf16.mxu0 0
  %1924 = vmatpush1.bf16.msra.mxu0 %v1903
  %1925 = vmatprep.subr.bf16.mxu0 0
  %1926 = vmatpush1.bf16.msra.mxu0 %v1904
  %1927 = vmatprep.subr.bf16.mxu0 0
  %1928 = vmatpush1.bf16.msra.mxu0 %v1905
  %1929 = vmatprep.subr.bf16.mxu0 0
  %1930 = vmatpush1.bf16.msra.mxu0 %v1906
  %1931 = vmatprep.subr.bf16.mxu0 0
  %1932 = vmatpush1.bf16.msra.mxu0 0
  %1933 = vmatprep.subr.bf16.mxu0 0
  %1934 = vmatpush1.bf16.msra.mxu0 0
  %1935 = vmatprep.subr.bf16.mxu0 0
  %1936 = vmatpush1.bf16.msra.mxu0 0
  %1937 = vmatprep.subr.bf16.mxu0 0
  %1938 = vmatpush1.bf16.msra.mxu0 0
  %1939 = vmatprep.subr.bf16.mxu0 0
  %1940 = vmatpush1.bf16.msra.mxu0 0
  %1941 = vmatprep.subr.bf16.mxu0 0
  %1942 = vmatpush1.bf16.msra.mxu0 0
  %1943 = vmatprep.subr.bf16.mxu0 0
  %1944 = vmatpush1.bf16.msra.mxu0 0
  %1945 = vmatprep.subr.bf16.mxu0 0
  %1946 = vmatpush1.bf16.msra.mxu0 0
  %1947 = vmatprep.mubr.bf16.mxu0 0
  %1948 = vmatmul.mubr.bf16.gmra.mrb[0].mxu0 %v1621
  %v1949 = vpop.f32.mrb[0].mxu0
  %v1950 = vadd.f32 0.0, %v1949
  %v1951 = vpop.f32.mrb[0].mxu0
  %v1952 = vpop.f32.mrb[0].mxu0
  %v1953 = vadd.f32 0.0, %v1952
  %v1954 = vpop.f32.mrb[0].mxu0
  %1955 = vmatprep.mubr.bf16.mxu0 0
  %1956 = vmatmul.mubr.bf16.gmra.mrb[0].mxu0 %v1622
  %v1957 = vpop.f32.mrb[0].mxu0
  %v1958 = vadd.f32 0.0, %v1957
  %v1959 = vpop.f32.mrb[0].mxu0
  %v1960 = vpop.f32.mrb[0].mxu0
  %v1961 = vadd.f32 0.0, %v1960
  %v1962 = vpop.f32.mrb[0].mxu0
  %1963 = vdwg.mxu0
  %v1968 = vrot.slane %v1722, 7
  %v1969 = vrot.slane %v1725, 7
  %v1970 = vsel %vm411, %v1968, %v1969
  %v1971 = vrot.slane %v1730, 7
  %v1972 = vrot.slane %v1733, 7
  %v1973 = vsel %vm411, %v1971, %v1972
  %v1978 = vsel %vm411, 0.0, %v1968
  %v1979 = vsel %vm411, 0.0, %v1971
  %v1984 = vrot.slane %v1950, 1
  %v1985 = vrot.slane %v1953, 1
  %v1986 = vsel %vm428, %v1984, %v1985
  %v1987 = vrot.slane %v1958, 1
  %v1988 = vrot.slane %v1961, 1
  %v1989 = vsel %vm428, %v1987, %v1988
  %v1994 = vsel %vm428, %v1985, 0.0
  %v1995 = vsel %vm428, %v1988, 0.0
  %v1996 = vadd.f32 %v1836, %v1978
  %v1997 = vadd.f32 %v1839, %v1970
  %v1998 = vadd.f32 %v1844, %v1979
  %v1999 = vadd.f32 %v1847, %v1973
  %v2000 = vadd.f32 %v1996, %v1986
  %v2001 = vadd.f32 %v1997, %v1994
  %v2002 = vadd.f32 %v1998, %v1989
  %v2003 = vadd.f32 %v1999, %v1995
  %v2004 = vld [vmem:[%s5] sm:$0x1]
  %v2005 = vld [vmem:[%s6] sm:$0x1]
  %v2006 = vadd.f32 %v2000, %v2001
  %v2007 = vadd.f32 %v2006, %v2002
  %v2008 = vadd.f32 %v2007, %v2003
  %v2009 = vrot.slane %v2008, 4
  %v2010 = vadd.f32 %v2008, %v2009
  %v2011 = vrot.slane %v2010, 2
  %v2012 = vadd.f32 %v2010, %v2011
  %v2013 = vrot.slane %v2012, 1
  %v2014 = vadd.f32 %v2012, %v2013
  %v2015 = vmul.f32 %v2000, %v2000
  %v2016 = vmul.f32 %v2001, %v2001
  %v2017 = vmul.f32 %v2002, %v2002
  %v2018 = vmul.f32 %v2003, %v2003
  %v2019 = vadd.f32 %v2015, %v2016
  %v2020 = vadd.f32 %v2019, %v2017
  %v2021 = vadd.f32 %v2020, %v2018
  %v2022 = vrot.slane %v2021, 4
  %v2023 = vadd.f32 %v2021, %v2022
  %v2024 = vrot.slane %v2023, 2
  %v2025 = vadd.f32 %v2023, %v2024
  %v2026 = vrot.slane %v2025, 1
  %v2027 = vadd.f32 %v2025, %v2026
  %v2028 = vsel %vm411, %v2014, %v2027
  %2029 = vmatprep.subr.mxu0 0.0
  %v2030 = vand.u32 %v33, 4294901760
  %2031 = vmatpush1.msra.mxu0 %v2030
  %2032 = vmatprep.subr.mxu0 0.0
  %v2033 = vand.u32 %v34, 4294901760
  %2034 = vmatpush1.msra.mxu0 %v2033
  %2035 = vmatprep.subr.mxu0 0.0
  %v2036 = vand.u32 %v35, 4294901760
  %2037 = vmatpush1.msra.mxu0 %v2036
  %2038 = vmatprep.subr.mxu0 0.0
  %v2039 = vand.u32 %v36, 4294901760
  %2040 = vmatpush1.msra.mxu0 %v2039
  %2041 = vmatprep.subr.mxu0 0.0
  %v2042 = vand.u32 %v37, 4294901760
  %2043 = vmatpush1.msra.mxu0 %v2042
  %2044 = vmatprep.subr.mxu0 0.0
  %v2045 = vand.u32 %v38, 4294901760
  %2046 = vmatpush1.msra.mxu0 %v2045
  %2047 = vmatprep.subr.mxu0 0.0
  %v2048 = vand.u32 %v39, 4294901760
  %2049 = vmatpush1.msra.mxu0 %v2048
  %2050 = vmatprep.subr.mxu0 0.0
  %v2051 = vand.u32 %v40, 4294901760
  %2052 = vmatpush1.msra.mxu0 %v2051
  %2053 = vmatprep.subr.mxu0 0.0
  %v2054 = vand.u32 %v41, 4294901760
  %2055 = vmatpush1.msra.mxu0 %v2054
  %2056 = vmatprep.subr.mxu0 0.0
  %v2057 = vand.u32 %v42, 4294901760
  %2058 = vmatpush1.msra.mxu0 %v2057
  %2059 = vmatprep.subr.mxu0 0.0
  %v2060 = vand.u32 %v43, 4294901760
  %2061 = vmatpush1.msra.mxu0 %v2060
  %2062 = vmatprep.subr.mxu0 0.0
  %v2063 = vand.u32 %v44, 4294901760
  %2064 = vmatpush1.msra.mxu0 %v2063
  %2065 = vmatprep.subr.mxu0 0.0
  %v2066 = vand.u32 %v45, 4294901760
  %2067 = vmatpush1.msra.mxu0 %v2066
  %2068 = vmatprep.subr.mxu0 0.0
  %v2069 = vand.u32 %v46, 4294901760
  %2070 = vmatpush1.msra.mxu0 %v2069
  %2071 = vmatprep.subr.mxu0 0.0
  %v2072 = vand.u32 %v47, 4294901760
  %2073 = vmatpush1.msra.mxu0 %v2072
  %2074 = vmatprep.subr.mxu0 0.0
  %v2075 = vand.u32 %v48, 4294901760
  %2076 = vmatpush1.msra.mxu0 %v2075
  %2077 = vmatprep.subr.mxu0 0.0
  %2078 = vmatpush1.msra.mxu0 0.0
  %2079 = vmatprep.subr.mxu0 0.0
  %2080 = vmatpush1.msra.mxu0 0.0
  %2081 = vmatprep.subr.mxu0 0.0
  %2082 = vmatpush1.msra.mxu0 0.0
  %2083 = vmatprep.subr.mxu0 0.0
  %2084 = vmatpush1.msra.mxu0 0.0
  %2085 = vmatprep.subr.mxu0 0.0
  %2086 = vmatpush1.msra.mxu0 0.0
  %2087 = vmatprep.subr.mxu0 0.0
  %2088 = vmatpush1.msra.mxu0 0.0
  %2089 = vmatprep.subr.mxu0 0.0
  %2090 = vmatpush1.msra.mxu0 0.0
  %2091 = vmatprep.subr.mxu0 0.0
  %2092 = vmatpush1.msra.mxu0 0.0
  %2093 = vmatprep.subr.mxu0 0.0
  %2094 = vmatpush1.msra.mxu0 0.0
  %2095 = vmatprep.subr.mxu0 0.0
  %2096 = vmatpush1.msra.mxu0 0.0
  %2097 = vmatprep.subr.mxu0 0.0
  %2098 = vmatpush1.msra.mxu0 0.0
  %2099 = vmatprep.subr.mxu0 0.0
  %2100 = vmatpush1.msra.mxu0 0.0
  %2101 = vmatprep.subr.mxu0 0.0
  %2102 = vmatpush1.msra.mxu0 0.0
  %2103 = vmatprep.subr.mxu0 0.0
  %2104 = vmatpush1.msra.mxu0 0.0
  %2105 = vmatprep.subr.mxu0 0.0
  %2106 = vmatpush1.msra.mxu0 0.0
  %2107 = vmatprep.subr.mxu0 0.0
  %2108 = vmatpush1.msra.mxu0 0.0
  %2109 = vmatprep.mubr.f32.mxu0 0.0
  %v2110 = vand.u32 %v2028, 4294901760
  %v2111 = vsub.f32 %v2028, %v2110
  %v2112 = vand.u32 %v2111, 4294901760
  %v2113 = vsub.f32 %v2111, %v2112
  %v2114 = vand.u32 %v2113, 4294901760
  %2115 = vmatmul.mubr.f32.gmra.mrb[0].mxu0 %v2114
  %v2116 = vpop.f32.mrb[0].mxu0
  %v2117 = vadd.f32 0.0, %v2116
  %v2118 = vpop.f32.mrb[0].mxu0
  %2119 = vdwg.mxu0
  %2120 = vmatprep.subr.mxu0 0.0
  %v2121 = vand.u32 %v33, 4294901760
  %v2122 = vsub.f32 %v33, %v2121
  %v2123 = vand.u32 %v2122, 4294901760
  %v2124 = vsub.f32 %v2122, %v2123
  %v2125 = vand.u32 %v2124, 4294901760
  %2126 = vmatpush1.msra.mxu0 %v2125
  %2127 = vmatprep.subr.mxu0 0.0
  %v2128 = vand.u32 %v34, 4294901760
  %v2129 = vsub.f32 %v34, %v2128
  %v2130 = vand.u32 %v2129, 4294901760
  %v2131 = vsub.f32 %v2129, %v2130
  %v2132 = vand.u32 %v2131, 4294901760
  %2133 = vmatpush1.msra.mxu0 %v2132
  %2134 = vmatprep.subr.mxu0 0.0
  %v2135 = vand.u32 %v35, 4294901760
  %v2136 = vsub.f32 %v35, %v2135
  %v2137 = vand.u32 %v2136, 4294901760
  %v2138 = vsub.f32 %v2136, %v2137
  %v2139 = vand.u32 %v2138, 4294901760
  %2140 = vmatpush1.msra.mxu0 %v2139
  %2141 = vmatprep.subr.mxu0 0.0
  %v2142 = vand.u32 %v36, 4294901760
  %v2143 = vsub.f32 %v36, %v2142
  %v2144 = vand.u32 %v2143, 4294901760
  %v2145 = vsub.f32 %v2143, %v2144
  %v2146 = vand.u32 %v2145, 4294901760
  %2147 = vmatpush1.msra.mxu0 %v2146
  %2148 = vmatprep.subr.mxu0 0.0
  %v2149 = vand.u32 %v37, 4294901760
  %v2150 = vsub.f32 %v37, %v2149
  %v2151 = vand.u32 %v2150, 4294901760
  %v2152 = vsub.f32 %v2150, %v2151
  %v2153 = vand.u32 %v2152, 4294901760
  %2154 = vmatpush1.msra.mxu0 %v2153
  %2155 = vmatprep.subr.mxu0 0.0
  %v2156 = vand.u32 %v38, 4294901760
  %v2157 = vsub.f32 %v38, %v2156
  %v2158 = vand.u32 %v2157, 4294901760
  %v2159 = vsub.f32 %v2157, %v2158
  %v2160 = vand.u32 %v2159, 4294901760
  %2161 = vmatpush1.msra.mxu0 %v2160
  %2162 = vmatprep.subr.mxu0 0.0
  %v2163 = vand.u32 %v39, 4294901760
  %v2164 = vsub.f32 %v39, %v2163
  %v2165 = vand.u32 %v2164, 4294901760
  %v2166 = vsub.f32 %v2164, %v2165
  %v2167 = vand.u32 %v2166, 4294901760
  %2168 = vmatpush1.msra.mxu0 %v2167
  %2169 = vmatprep.subr.mxu0 0.0
  %v2170 = vand.u32 %v40, 4294901760
  %v2171 = vsub.f32 %v40, %v2170
  %v2172 = vand.u32 %v2171, 4294901760
  %v2173 = vsub.f32 %v2171, %v2172
  %v2174 = vand.u32 %v2173, 4294901760
  %2175 = vmatpush1.msra.mxu0 %v2174
  %2176 = vmatprep.subr.mxu0 0.0
  %v2177 = vand.u32 %v41, 4294901760
  %v2178 = vsub.f32 %v41, %v2177
  %v2179 = vand.u32 %v2178, 4294901760
  %v2180 = vsub.f32 %v2178, %v2179
  %v2181 = vand.u32 %v2180, 4294901760
  %2182 = vmatpush1.msra.mxu0 %v2181
  %2183 = vmatprep.subr.mxu0 0.0
  %v2184 = vand.u32 %v42, 4294901760
  %v2185 = vsub.f32 %v42, %v2184
  %v2186 = vand.u32 %v2185, 4294901760
  %v2187 = vsub.f32 %v2185, %v2186
  %v2188 = vand.u32 %v2187, 4294901760
  %2189 = vmatpush1.msra.mxu0 %v2188
  %2190 = vmatprep.subr.mxu0 0.0
  %v2191 = vand.u32 %v43, 4294901760
  %v2192 = vsub.f32 %v43, %v2191
  %v2193 = vand.u32 %v2192, 4294901760
  %v2194 = vsub.f32 %v2192, %v2193
  %v2195 = vand.u32 %v2194, 4294901760
  %2196 = vmatpush1.msra.mxu0 %v2195
  %2197 = vmatprep.subr.mxu0 0.0
  %v2198 = vand.u32 %v44, 4294901760
  %v2199 = vsub.f32 %v44, %v2198
  %v2200 = vand.u32 %v2199, 4294901760
  %v2201 = vsub.f32 %v2199, %v2200
  %v2202 = vand.u32 %v2201, 4294901760
  %2203 = vmatpush1.msra.mxu0 %v2202
  %2204 = vmatprep.subr.mxu0 0.0
  %v2205 = vand.u32 %v45, 4294901760
  %v2206 = vsub.f32 %v45, %v2205
  %v2207 = vand.u32 %v2206, 4294901760
  %v2208 = vsub.f32 %v2206, %v2207
  %v2209 = vand.u32 %v2208, 4294901760
  %2210 = vmatpush1.msra.mxu0 %v2209
  %2211 = vmatprep.subr.mxu0 0.0
  %v2212 = vand.u32 %v46, 4294901760
  %v2213 = vsub.f32 %v46, %v2212
  %v2214 = vand.u32 %v2213, 4294901760
  %v2215 = vsub.f32 %v2213, %v2214
  %v2216 = vand.u32 %v2215, 4294901760
  %2217 = vmatpush1.msra.mxu0 %v2216
  %2218 = vmatprep.subr.mxu0 0.0
  %v2219 = vand.u32 %v47, 4294901760
  %v2220 = vsub.f32 %v47, %v2219
  %v2221 = vand.u32 %v2220, 4294901760
  %v2222 = vsub.f32 %v2220, %v2221
  %v2223 = vand.u32 %v2222, 4294901760
  %2224 = vmatpush1.msra.mxu0 %v2223
  %2225 = vmatprep.subr.mxu0 0.0
  %v2226 = vand.u32 %v48, 4294901760
  %v2227 = vsub.f32 %v48, %v2226
  %v2228 = vand.u32 %v2227, 4294901760
  %v2229 = vsub.f32 %v2227, %v2228
  %v2230 = vand.u32 %v2229, 4294901760
  %2231 = vmatpush1.msra.mxu0 %v2230
  %2232 = vmatprep.subr.mxu0 0.0
  %2233 = vmatpush1.msra.mxu0 0.0
  %2234 = vmatprep.subr.mxu0 0.0
  %2235 = vmatpush1.msra.mxu0 0.0
  %2236 = vmatprep.subr.mxu0 0.0
  %2237 = vmatpush1.msra.mxu0 0.0
  %2238 = vmatprep.subr.mxu0 0.0
  %2239 = vmatpush1.msra.mxu0 0.0
  %2240 = vmatprep.subr.mxu0 0.0
  %2241 = vmatpush1.msra.mxu0 0.0
  %2242 = vmatprep.subr.mxu0 0.0
  %2243 = vmatpush1.msra.mxu0 0.0
  %2244 = vmatprep.subr.mxu0 0.0
  %2245 = vmatpush1.msra.mxu0 0.0
  %2246 = vmatprep.subr.mxu0 0.0
  %2247 = vmatpush1.msra.mxu0 0.0
  %2248 = vmatprep.subr.mxu0 0.0
  %2249 = vmatpush1.msra.mxu0 0.0
  %2250 = vmatprep.subr.mxu0 0.0
  %2251 = vmatpush1.msra.mxu0 0.0
  %2252 = vmatprep.subr.mxu0 0.0
  %2253 = vmatpush1.msra.mxu0 0.0
  %2254 = vmatprep.subr.mxu0 0.0
  %2255 = vmatpush1.msra.mxu0 0.0
  %2256 = vmatprep.subr.mxu0 0.0
  %2257 = vmatpush1.msra.mxu0 0.0
  %2258 = vmatprep.subr.mxu0 0.0
  %2259 = vmatpush1.msra.mxu0 0.0
  %2260 = vmatprep.subr.mxu0 0.0
  %2261 = vmatpush1.msra.mxu0 0.0
  %2262 = vmatprep.subr.mxu0 0.0
  %2263 = vmatpush1.msra.mxu0 0.0
  %2264 = vmatprep.mubr.f32.mxu0 0.0
  %v2265 = vand.u32 %v2028, 4294901760
  %2266 = vmatmul.mubr.f32.gmra.mrb[0].mxu0 %v2265
  %v2267 = vpop.f32.mrb[0].mxu0
  %v2268 = vadd.f32 %v2117, %v2267
  %v2269 = vpop.f32.mrb[0].mxu0
  %2270 = vdwg.mxu0
  %2271 = vmatprep.subr.mxu0 0.0
  %v2272 = vand.u32 %v33, 4294901760
  %v2273 = vsub.f32 %v33, %v2272
  %2274 = vmatpush1.msra.mxu0 %v2273
  %2275 = vmatprep.subr.mxu0 0.0
  %v2276 = vand.u32 %v34, 4294901760
  %v2277 = vsub.f32 %v34, %v2276
  %2278 = vmatpush1.msra.mxu0 %v2277
  %2279 = vmatprep.subr.mxu0 0.0
  %v2280 = vand.u32 %v35, 4294901760
  %v2281 = vsub.f32 %v35, %v2280
  %2282 = vmatpush1.msra.mxu0 %v2281
  %2283 = vmatprep.subr.mxu0 0.0
  %v2284 = vand.u32 %v36, 4294901760
  %v2285 = vsub.f32 %v36, %v2284
  %2286 = vmatpush1.msra.mxu0 %v2285
  %2287 = vmatprep.subr.mxu0 0.0
  %v2288 = vand.u32 %v37, 4294901760
  %v2289 = vsub.f32 %v37, %v2288
  %2290 = vmatpush1.msra.mxu0 %v2289
  %2291 = vmatprep.subr.mxu0 0.0
  %v2292 = vand.u32 %v38, 4294901760
  %v2293 = vsub.f32 %v38, %v2292
  %2294 = vmatpush1.msra.mxu0 %v2293
  %2295 = vmatprep.subr.mxu0 0.0
  %v2296 = vand.u32 %v39, 4294901760
  %v2297 = vsub.f32 %v39, %v2296
  %2298 = vmatpush1.msra.mxu0 %v2297
  %2299 = vmatprep.subr.mxu0 0.0
  %v2300 = vand.u32 %v40, 4294901760
  %v2301 = vsub.f32 %v40, %v2300
  %2302 = vmatpush1.msra.mxu0 %v2301
  %2303 = vmatprep.subr.mxu0 0.0
  %v2304 = vand.u32 %v41, 4294901760
  %v2305 = vsub.f32 %v41, %v2304
  %2306 = vmatpush1.msra.mxu0 %v2305
  %2307 = vmatprep.subr.mxu0 0.0
  %v2308 = vand.u32 %v42, 4294901760
  %v2309 = vsub.f32 %v42, %v2308
  %2310 = vmatpush1.msra.mxu0 %v2309
  %2311 = vmatprep.subr.mxu0 0.0
  %v2312 = vand.u32 %v43, 4294901760
  %v2313 = vsub.f32 %v43, %v2312
  %2314 = vmatpush1.msra.mxu0 %v2313
  %2315 = vmatprep.subr.mxu0 0.0
  %v2316 = vand.u32 %v44, 4294901760
  %v2317 = vsub.f32 %v44, %v2316
  %2318 = vmatpush1.msra.mxu0 %v2317
  %2319 = vmatprep.subr.mxu0 0.0
  %v2320 = vand.u32 %v45, 4294901760
  %v2321 = vsub.f32 %v45, %v2320
  %2322 = vmatpush1.msra.mxu0 %v2321
  %2323 = vmatprep.subr.mxu0 0.0
  %v2324 = vand.u32 %v46, 4294901760
  %v2325 = vsub.f32 %v46, %v2324
  %2326 = vmatpush1.msra.mxu0 %v2325
  %2327 = vmatprep.subr.mxu0 0.0
  %v2328 = vand.u32 %v47, 4294901760
  %v2329 = vsub.f32 %v47, %v2328
  %2330 = vmatpush1.msra.mxu0 %v2329
  %2331 = vmatprep.subr.mxu0 0.0
  %v2332 = vand.u32 %v48, 4294901760
  %v2333 = vsub.f32 %v48, %v2332
  %2334 = vmatpush1.msra.mxu0 %v2333
  %2335 = vmatprep.subr.mxu0 0.0
  %2336 = vmatpush1.msra.mxu0 0.0
  %2337 = vmatprep.subr.mxu0 0.0
  %2338 = vmatpush1.msra.mxu0 0.0
  %2339 = vmatprep.subr.mxu0 0.0
  %2340 = vmatpush1.msra.mxu0 0.0
  %2341 = vmatprep.subr.mxu0 0.0
  %2342 = vmatpush1.msra.mxu0 0.0
  %2343 = vmatprep.subr.mxu0 0.0
  %2344 = vmatpush1.msra.mxu0 0.0
  %2345 = vmatprep.subr.mxu0 0.0
  %2346 = vmatpush1.msra.mxu0 0.0
  %2347 = vmatprep.subr.mxu0 0.0
  %2348 = vmatpush1.msra.mxu0 0.0
  %2349 = vmatprep.subr.mxu0 0.0
  %2350 = vmatpush1.msra.mxu0 0.0
  %2351 = vmatprep.subr.mxu0 0.0
  %2352 = vmatpush1.msra.mxu0 0.0
  %2353 = vmatprep.subr.mxu0 0.0
  %2354 = vmatpush1.msra.mxu0 0.0
  %2355 = vmatprep.subr.mxu0 0.0
  %2356 = vmatpush1.msra.mxu0 0.0
  %2357 = vmatprep.subr.mxu0 0.0
  %2358 = vmatpush1.msra.mxu0 0.0
  %2359 = vmatprep.subr.mxu0 0.0
  %2360 = vmatpush1.msra.mxu0 0.0
  %2361 = vmatprep.subr.mxu0 0.0
  %2362 = vmatpush1.msra.mxu0 0.0
  %2363 = vmatprep.subr.mxu0 0.0
  %2364 = vmatpush1.msra.mxu0 0.0
  %2365 = vmatprep.subr.mxu0 0.0
  %2366 = vmatpush1.msra.mxu0 0.0
  %2367 = vmatprep.mubr.f32.mxu0 0.0
  %v2368 = vand.u32 %v2028, 4294901760
  %v2369 = vsub.f32 %v2028, %v2368
  %2370 = vmatmul.mubr.f32.gmra.mrb[0].mxu0 %v2369
  %v2371 = vpop.f32.mrb[0].mxu0
  %v2372 = vadd.f32 %v2268, %v2371
  %v2373 = vpop.f32.mrb[0].mxu0
  %2374 = vdwg.mxu0
  %2375 = vmatprep.subr.mxu0 0.0
  %v2376 = vand.u32 %v33, 4294901760
  %2377 = vmatpush1.msra.mxu0 %v2376
  %2378 = vmatprep.subr.mxu0 0.0
  %v2379 = vand.u32 %v34, 4294901760
  %2380 = vmatpush1.msra.mxu0 %v2379
  %2381 = vmatprep.subr.mxu0 0.0
  %v2382 = vand.u32 %v35, 4294901760
  %2383 = vmatpush1.msra.mxu0 %v2382
  %2384 = vmatprep.subr.mxu0 0.0
  %v2385 = vand.u32 %v36, 4294901760
  %2386 = vmatpush1.msra.mxu0 %v2385
  %2387 = vmatprep.subr.mxu0 0.0
  %v2388 = vand.u32 %v37, 4294901760
  %2389 = vmatpush1.msra.mxu0 %v2388
  %2390 = vmatprep.subr.mxu0 0.0
  %v2391 = vand.u32 %v38, 4294901760
  %2392 = vmatpush1.msra.mxu0 %v2391
  %2393 = vmatprep.subr.mxu0 0.0
  %v2394 = vand.u32 %v39, 4294901760
  %2395 = vmatpush1.msra.mxu0 %v2394
  %2396 = vmatprep.subr.mxu0 0.0
  %v2397 = vand.u32 %v40, 4294901760
  %2398 = vmatpush1.msra.mxu0 %v2397
  %2399 = vmatprep.subr.mxu0 0.0
  %v2400 = vand.u32 %v41, 4294901760
  %2401 = vmatpush1.msra.mxu0 %v2400
  %2402 = vmatprep.subr.mxu0 0.0
  %v2403 = vand.u32 %v42, 4294901760
  %2404 = vmatpush1.msra.mxu0 %v2403
  %2405 = vmatprep.subr.mxu0 0.0
  %v2406 = vand.u32 %v43, 4294901760
  %2407 = vmatpush1.msra.mxu0 %v2406
  %2408 = vmatprep.subr.mxu0 0.0
  %v2409 = vand.u32 %v44, 4294901760
  %2410 = vmatpush1.msra.mxu0 %v2409
  %2411 = vmatprep.subr.mxu0 0.0
  %v2412 = vand.u32 %v45, 4294901760
  %2413 = vmatpush1.msra.mxu0 %v2412
  %2414 = vmatprep.subr.mxu0 0.0
  %v2415 = vand.u32 %v46, 4294901760
  %2416 = vmatpush1.msra.mxu0 %v2415
  %2417 = vmatprep.subr.mxu0 0.0
  %v2418 = vand.u32 %v47, 4294901760
  %2419 = vmatpush1.msra.mxu0 %v2418
  %2420 = vmatprep.subr.mxu0 0.0
  %v2421 = vand.u32 %v48, 4294901760
  %2422 = vmatpush1.msra.mxu0 %v2421
  %2423 = vmatprep.subr.mxu0 0.0
  %2424 = vmatpush1.msra.mxu0 0.0
  %2425 = vmatprep.subr.mxu0 0.0
  %2426 = vmatpush1.msra.mxu0 0.0
  %2427 = vmatprep.subr.mxu0 0.0
  %2428 = vmatpush1.msra.mxu0 0.0
  %2429 = vmatprep.subr.mxu0 0.0
  %2430 = vmatpush1.msra.mxu0 0.0
  %2431 = vmatprep.subr.mxu0 0.0
  %2432 = vmatpush1.msra.mxu0 0.0
  %2433 = vmatprep.subr.mxu0 0.0
  %2434 = vmatpush1.msra.mxu0 0.0
  %2435 = vmatprep.subr.mxu0 0.0
  %2436 = vmatpush1.msra.mxu0 0.0
  %2437 = vmatprep.subr.mxu0 0.0
  %2438 = vmatpush1.msra.mxu0 0.0
  %2439 = vmatprep.subr.mxu0 0.0
  %2440 = vmatpush1.msra.mxu0 0.0
  %2441 = vmatprep.subr.mxu0 0.0
  %2442 = vmatpush1.msra.mxu0 0.0
  %2443 = vmatprep.subr.mxu0 0.0
  %2444 = vmatpush1.msra.mxu0 0.0
  %2445 = vmatprep.subr.mxu0 0.0
  %2446 = vmatpush1.msra.mxu0 0.0
  %2447 = vmatprep.subr.mxu0 0.0
  %2448 = vmatpush1.msra.mxu0 0.0
  %2449 = vmatprep.subr.mxu0 0.0
  %2450 = vmatpush1.msra.mxu0 0.0
  %2451 = vmatprep.subr.mxu0 0.0
  %2452 = vmatpush1.msra.mxu0 0.0
  %2453 = vmatprep.subr.mxu0 0.0
  %2454 = vmatpush1.msra.mxu0 0.0
  %2455 = vmatprep.mubr.f32.mxu0 0.0
  %v2456 = vand.u32 %v2028, 4294901760
  %v2457 = vsub.f32 %v2028, %v2456
  %v2458 = vand.u32 %v2457, 4294901760
  %2459 = vmatmul.mubr.f32.gmra.mrb[0].mxu0 %v2458
  %v2460 = vpop.f32.mrb[0].mxu0
  %v2461 = vadd.f32 %v2372, %v2460
  %v2462 = vpop.f32.mrb[0].mxu0
  %2463 = vdwg.mxu0
  %2464 = vmatprep.subr.mxu0 0.0
  %v2465 = vand.u32 %v33, 4294901760
  %v2466 = vsub.f32 %v33, %v2465
  %v2467 = vand.u32 %v2466, 4294901760
  %2468 = vmatpush1.msra.mxu0 %v2467
  %2469 = vmatprep.subr.mxu0 0.0
  %v2470 = vand.u32 %v34, 4294901760
  %v2471 = vsub.f32 %v34, %v2470
  %v2472 = vand.u32 %v2471, 4294901760
  %2473 = vmatpush1.msra.mxu0 %v2472
  %2474 = vmatprep.subr.mxu0 0.0
  %v2475 = vand.u32 %v35, 4294901760
  %v2476 = vsub.f32 %v35, %v2475
  %v2477 = vand.u32 %v2476, 4294901760
  %2478 = vmatpush1.msra.mxu0 %v2477
  %2479 = vmatprep.subr.mxu0 0.0
  %v2480 = vand.u32 %v36, 4294901760
  %v2481 = vsub.f32 %v36, %v2480
  %v2482 = vand.u32 %v2481, 4294901760
  %2483 = vmatpush1.msra.mxu0 %v2482
  %2484 = vmatprep.subr.mxu0 0.0
  %v2485 = vand.u32 %v37, 4294901760
  %v2486 = vsub.f32 %v37, %v2485
  %v2487 = vand.u32 %v2486, 4294901760
  %2488 = vmatpush1.msra.mxu0 %v2487
  %2489 = vmatprep.subr.mxu0 0.0
  %v2490 = vand.u32 %v38, 4294901760
  %v2491 = vsub.f32 %v38, %v2490
  %v2492 = vand.u32 %v2491, 4294901760
  %2493 = vmatpush1.msra.mxu0 %v2492
  %2494 = vmatprep.subr.mxu0 0.0
  %v2495 = vand.u32 %v39, 4294901760
  %v2496 = vsub.f32 %v39, %v2495
  %v2497 = vand.u32 %v2496, 4294901760
  %2498 = vmatpush1.msra.mxu0 %v2497
  %2499 = vmatprep.subr.mxu0 0.0
  %v2500 = vand.u32 %v40, 4294901760
  %v2501 = vsub.f32 %v40, %v2500
  %v2502 = vand.u32 %v2501, 4294901760
  %2503 = vmatpush1.msra.mxu0 %v2502
  %2504 = vmatprep.subr.mxu0 0.0
  %v2505 = vand.u32 %v41, 4294901760
  %v2506 = vsub.f32 %v41, %v2505
  %v2507 = vand.u32 %v2506, 4294901760
  %2508 = vmatpush1.msra.mxu0 %v2507
  %2509 = vmatprep.subr.mxu0 0.0
  %v2510 = vand.u32 %v42, 4294901760
  %v2511 = vsub.f32 %v42, %v2510
  %v2512 = vand.u32 %v2511, 4294901760
  %2513 = vmatpush1.msra.mxu0 %v2512
  %2514 = vmatprep.subr.mxu0 0.0
  %v2515 = vand.u32 %v43, 4294901760
  %v2516 = vsub.f32 %v43, %v2515
  %v2517 = vand.u32 %v2516, 4294901760
  %2518 = vmatpush1.msra.mxu0 %v2517
  %2519 = vmatprep.subr.mxu0 0.0
  %v2520 = vand.u32 %v44, 4294901760
  %v2521 = vsub.f32 %v44, %v2520
  %v2522 = vand.u32 %v2521, 4294901760
  %2523 = vmatpush1.msra.mxu0 %v2522
  %2524 = vmatprep.subr.mxu0 0.0
  %v2525 = vand.u32 %v45, 4294901760
  %v2526 = vsub.f32 %v45, %v2525
  %v2527 = vand.u32 %v2526, 4294901760
  %2528 = vmatpush1.msra.mxu0 %v2527
  %2529 = vmatprep.subr.mxu0 0.0
  %v2530 = vand.u32 %v46, 4294901760
  %v2531 = vsub.f32 %v46, %v2530
  %v2532 = vand.u32 %v2531, 4294901760
  %2533 = vmatpush1.msra.mxu0 %v2532
  %2534 = vmatprep.subr.mxu0 0.0
  %v2535 = vand.u32 %v47, 4294901760
  %v2536 = vsub.f32 %v47, %v2535
  %v2537 = vand.u32 %v2536, 4294901760
  %2538 = vmatpush1.msra.mxu0 %v2537
  %2539 = vmatprep.subr.mxu0 0.0
  %v2540 = vand.u32 %v48, 4294901760
  %v2541 = vsub.f32 %v48, %v2540
  %v2542 = vand.u32 %v2541, 4294901760
  %2543 = vmatpush1.msra.mxu0 %v2542
  %2544 = vmatprep.subr.mxu0 0.0
  %2545 = vmatpush1.msra.mxu0 0.0
  %2546 = vmatprep.subr.mxu0 0.0
  %2547 = vmatpush1.msra.mxu0 0.0
  %2548 = vmatprep.subr.mxu0 0.0
  %2549 = vmatpush1.msra.mxu0 0.0
  %2550 = vmatprep.subr.mxu0 0.0
  %2551 = vmatpush1.msra.mxu0 0.0
  %2552 = vmatprep.subr.mxu0 0.0
  %2553 = vmatpush1.msra.mxu0 0.0
  %2554 = vmatprep.subr.mxu0 0.0
  %2555 = vmatpush1.msra.mxu0 0.0
  %2556 = vmatprep.subr.mxu0 0.0
  %2557 = vmatpush1.msra.mxu0 0.0
  %2558 = vmatprep.subr.mxu0 0.0
  %2559 = vmatpush1.msra.mxu0 0.0
  %2560 = vmatprep.subr.mxu0 0.0
  %2561 = vmatpush1.msra.mxu0 0.0
  %2562 = vmatprep.subr.mxu0 0.0
  %2563 = vmatpush1.msra.mxu0 0.0
  %2564 = vmatprep.subr.mxu0 0.0
  %2565 = vmatpush1.msra.mxu0 0.0
  %2566 = vmatprep.subr.mxu0 0.0
  %2567 = vmatpush1.msra.mxu0 0.0
  %2568 = vmatprep.subr.mxu0 0.0
  %2569 = vmatpush1.msra.mxu0 0.0
  %2570 = vmatprep.subr.mxu0 0.0
  %2571 = vmatpush1.msra.mxu0 0.0
  %2572 = vmatprep.subr.mxu0 0.0
  %2573 = vmatpush1.msra.mxu0 0.0
  %2574 = vmatprep.subr.mxu0 0.0
  %2575 = vmatpush1.msra.mxu0 0.0
  %2576 = vmatprep.mubr.f32.mxu0 0.0
  %v2577 = vand.u32 %v2028, 4294901760
  %2578 = vmatmul.mubr.f32.gmra.mrb[0].mxu0 %v2577
  %v2579 = vpop.f32.mrb[0].mxu0
  %v2580 = vadd.f32 %v2461, %v2579
  %v2581 = vpop.f32.mrb[0].mxu0
  %2582 = vdwg.mxu0
  %2583 = vmatprep.subr.mxu0 0.0
  %v2584 = vand.u32 %v33, 4294901760
  %2585 = vmatpush1.msra.mxu0 %v2584
  %2586 = vmatprep.subr.mxu0 0.0
  %v2587 = vand.u32 %v34, 4294901760
  %2588 = vmatpush1.msra.mxu0 %v2587
  %2589 = vmatprep.subr.mxu0 0.0
  %v2590 = vand.u32 %v35, 4294901760
  %2591 = vmatpush1.msra.mxu0 %v2590
  %2592 = vmatprep.subr.mxu0 0.0
  %v2593 = vand.u32 %v36, 4294901760
  %2594 = vmatpush1.msra.mxu0 %v2593
  %2595 = vmatprep.subr.mxu0 0.0
  %v2596 = vand.u32 %v37, 4294901760
  %2597 = vmatpush1.msra.mxu0 %v2596
  %2598 = vmatprep.subr.mxu0 0.0
  %v2599 = vand.u32 %v38, 4294901760
  %2600 = vmatpush1.msra.mxu0 %v2599
  %2601 = vmatprep.subr.mxu0 0.0
  %v2602 = vand.u32 %v39, 4294901760
  %2603 = vmatpush1.msra.mxu0 %v2602
  %2604 = vmatprep.subr.mxu0 0.0
  %v2605 = vand.u32 %v40, 4294901760
  %2606 = vmatpush1.msra.mxu0 %v2605
  %2607 = vmatprep.subr.mxu0 0.0
  %v2608 = vand.u32 %v41, 4294901760
  %2609 = vmatpush1.msra.mxu0 %v2608
  %2610 = vmatprep.subr.mxu0 0.0
  %v2611 = vand.u32 %v42, 4294901760
  %2612 = vmatpush1.msra.mxu0 %v2611
  %2613 = vmatprep.subr.mxu0 0.0
  %v2614 = vand.u32 %v43, 4294901760
  %2615 = vmatpush1.msra.mxu0 %v2614
  %2616 = vmatprep.subr.mxu0 0.0
  %v2617 = vand.u32 %v44, 4294901760
  %2618 = vmatpush1.msra.mxu0 %v2617
  %2619 = vmatprep.subr.mxu0 0.0
  %v2620 = vand.u32 %v45, 4294901760
  %2621 = vmatpush1.msra.mxu0 %v2620
  %2622 = vmatprep.subr.mxu0 0.0
  %v2623 = vand.u32 %v46, 4294901760
  %2624 = vmatpush1.msra.mxu0 %v2623
  %2625 = vmatprep.subr.mxu0 0.0
  %v2626 = vand.u32 %v47, 4294901760
  %2627 = vmatpush1.msra.mxu0 %v2626
  %2628 = vmatprep.subr.mxu0 0.0
  %v2629 = vand.u32 %v48, 4294901760
  %2630 = vmatpush1.msra.mxu0 %v2629
  %2631 = vmatprep.subr.mxu0 0.0
  %2632 = vmatpush1.msra.mxu0 0.0
  %2633 = vmatprep.subr.mxu0 0.0
  %2634 = vmatpush1.msra.mxu0 0.0
  %2635 = vmatprep.subr.mxu0 0.0
  %2636 = vmatpush1.msra.mxu0 0.0
  %2637 = vmatprep.subr.mxu0 0.0
  %2638 = vmatpush1.msra.mxu0 0.0
  %2639 = vmatprep.subr.mxu0 0.0
  %2640 = vmatpush1.msra.mxu0 0.0
  %2641 = vmatprep.subr.mxu0 0.0
  %2642 = vmatpush1.msra.mxu0 0.0
  %2643 = vmatprep.subr.mxu0 0.0
  %2644 = vmatpush1.msra.mxu0 0.0
  %2645 = vmatprep.subr.mxu0 0.0
  %2646 = vmatpush1.msra.mxu0 0.0
  %2647 = vmatprep.subr.mxu0 0.0
  %2648 = vmatpush1.msra.mxu0 0.0
  %2649 = vmatprep.subr.mxu0 0.0
  %2650 = vmatpush1.msra.mxu0 0.0
  %2651 = vmatprep.subr.mxu0 0.0
  %2652 = vmatpush1.msra.mxu0 0.0
  %2653 = vmatprep.subr.mxu0 0.0
  %2654 = vmatpush1.msra.mxu0 0.0
  %2655 = vmatprep.subr.mxu0 0.0
  %2656 = vmatpush1.msra.mxu0 0.0
  %2657 = vmatprep.subr.mxu0 0.0
  %2658 = vmatpush1.msra.mxu0 0.0
  %2659 = vmatprep.subr.mxu0 0.0
  %2660 = vmatpush1.msra.mxu0 0.0
  %2661 = vmatprep.subr.mxu0 0.0
  %2662 = vmatpush1.msra.mxu0 0.0
  %2663 = vmatprep.mubr.f32.mxu0 0.0
  %v2664 = vand.u32 %v2028, 4294901760
  %2665 = vmatmul.mubr.f32.gmra.mrb[0].mxu0 %v2664
  %v2666 = vpop.f32.mrb[0].mxu0
  %v2667 = vadd.f32 %v2580, %v2666
  %v2668 = vpop.f32.mrb[0].mxu0
  %2669 = vdwg.mxu0
  %v2670 = vmul.f32 %v2667, 0.001953125
  %v2671 = vmul.f32 %v2670, %v2670
  %v2673 = vrot.slane %v2671, 7
  %v2675 = vsub.f32 %v2670, %v2673
  %v2676 = vmax.f32 %v2675, 0.0
  %v2677 = vadd.f32 %v2676, 1e-05
  %v2678 = vrsqrt.pop %v2677
  %v2681 = vunpack.c.l.s4 1966171168
  %v2682 = vunpack.c.0.s8 %v2681
  %v2683 = vlaneseq
  %v2684 = vshrl.u32 %v2683, 7
  %v2685 = vsub.s32 %v2682, %v2684
  %v2686 = vrot.slane %v2678, %v2685
  %v2687 = vcombine.high %v2686, %v2686
  %v2689 = vunpack.c.l.s4 1966171168
  %v2690 = vunpack.c.0.s8 %v2689
  %v2691 = vlaneseq
  %v2692 = vshrl.u32 %v2691, 7
  %v2693 = vsub.s32 %v2690, %v2692
  %v2694 = vrot.slane %v2687, %v2693
  %v2696 = vmul.f32 %v2004, %v2694
  %v2697 = vmul.f32 %v2670, %v2696
  %v2698 = vsub.f32 %v2005, %v2697
  %v2700 = vlaneseq
  %v2701 = vshrl.u32 %v2700, 7
  %v2702 = vsub.s32 0, %v2701
  %v2703 = vrot.slane %v2698, %v2702
  %v2705 = vsel %vm411, %v2696, %v2703
  %v2707 = vsel %vm1151, %v2705, 0
  %2709 = vmatprep.subr.mxu0 0.0
  %v2710 = vand.u32 %v49, 4294901760
  %2711 = vmatpush1.msra.mxu0 %v2710
  %2712 = vmatprep.subr.mxu0 0.0
  %2713 = vmatpush1.msra.mxu0 0.0
  %2714 = vmatprep.subr.mxu0 0.0
  %2715 = vmatpush1.msra.mxu0 0.0
  %2716 = vmatprep.subr.mxu0 0.0
  %2717 = vmatpush1.msra.mxu0 0.0
  %2718 = vmatprep.subr.mxu0 0.0
  %2719 = vmatpush1.msra.mxu0 0.0
  %2720 = vmatprep.subr.mxu0 0.0
  %2721 = vmatpush1.msra.mxu0 0.0
  %2722 = vmatprep.subr.mxu0 0.0
  %2723 = vmatpush1.msra.mxu0 0.0
  %2724 = vmatprep.subr.mxu0 0.0
  %2725 = vmatpush1.msra.mxu0 0.0
  %2726 = vmatprep.subr.mxu0 0.0
  %2727 = vmatpush1.msra.mxu0 0.0
  %2728 = vmatprep.subr.mxu0 0.0
  %2729 = vmatpush1.msra.mxu0 0.0
  %2730 = vmatprep.subr.mxu0 0.0
  %2731 = vmatpush1.msra.mxu0 0.0
  %2732 = vmatprep.subr.mxu0 0.0
  %2733 = vmatpush1.msra.mxu0 0.0
  %2734 = vmatprep.subr.mxu0 0.0
  %2735 = vmatpush1.msra.mxu0 0.0
  %2736 = vmatprep.subr.mxu0 0.0
  %2737 = vmatpush1.msra.mxu0 0.0
  %2738 = vmatprep.subr.mxu0 0.0
  %2739 = vmatpush1.msra.mxu0 0.0
  %2740 = vmatprep.subr.mxu0 0.0
  %2741 = vmatpush1.msra.mxu0 0.0
  %2742 = vmatprep.subr.mxu0 0.0
  %2743 = vmatpush1.msra.mxu0 0.0
  %2744 = vmatprep.subr.mxu0 0.0
  %2745 = vmatpush1.msra.mxu0 0.0
  %2746 = vmatprep.subr.mxu0 0.0
  %2747 = vmatpush1.msra.mxu0 0.0
  %2748 = vmatprep.subr.mxu0 0.0
  %2749 = vmatpush1.msra.mxu0 0.0
  %2750 = vmatprep.subr.mxu0 0.0
  %2751 = vmatpush1.msra.mxu0 0.0
  %2752 = vmatprep.subr.mxu0 0.0
  %2753 = vmatpush1.msra.mxu0 0.0
  %2754 = vmatprep.subr.mxu0 0.0
  %2755 = vmatpush1.msra.mxu0 0.0
  %2756 = vmatprep.subr.mxu0 0.0
  %2757 = vmatpush1.msra.mxu0 0.0
  %2758 = vmatprep.subr.mxu0 0.0
  %2759 = vmatpush1.msra.mxu0 0.0
  %2760 = vmatprep.subr.mxu0 0.0
  %2761 = vmatpush1.msra.mxu0 0.0
  %2762 = vmatprep.subr.mxu0 0.0
  %2763 = vmatpush1.msra.mxu0 0.0
  %2764 = vmatprep.subr.mxu0 0.0
  %2765 = vmatpush1.msra.mxu0 0.0
  %2766 = vmatprep.subr.mxu0 0.0
  %2767 = vmatpush1.msra.mxu0 0.0
  %2768 = vmatprep.subr.mxu0 0.0
  %2769 = vmatpush1.msra.mxu0 0.0
  %2770 = vmatprep.subr.mxu0 0.0
  %2771 = vmatpush1.msra.mxu0 0.0
  %2772 = vmatprep.subr.mxu0 0.0
  %2773 = vmatpush1.msra.mxu0 0.0
  %2774 = vmatprep.mubr.f32.mxu0 0.0
  %v2775 = vand.u32 %v2707, 4294901760
  %v2776 = vsub.f32 %v2707, %v2775
  %v2777 = vand.u32 %v2776, 4294901760
  %v2778 = vsub.f32 %v2776, %v2777
  %v2779 = vand.u32 %v2778, 4294901760
  %2780 = vmatmul.mubr.f32.gmra.mrb[0].mxu0 %v2779
  %v2781 = vpop.f32.mrb[0].mxu0
  %v2782 = vadd.f32 0.0, %v2781
  %v2783 = vpop.f32.mrb[0].mxu0
  %2784 = vdwg.mxu0
  %2785 = vmatprep.subr.mxu0 0.0
  %v2786 = vand.u32 %v49, 4294901760
  %v2787 = vsub.f32 %v49, %v2786
  %v2788 = vand.u32 %v2787, 4294901760
  %v2789 = vsub.f32 %v2787, %v2788
  %v2790 = vand.u32 %v2789, 4294901760
  %2791 = vmatpush1.msra.mxu0 %v2790
  %2792 = vmatprep.subr.mxu0 0.0
  %2793 = vmatpush1.msra.mxu0 0.0
  %2794 = vmatprep.subr.mxu0 0.0
  %2795 = vmatpush1.msra.mxu0 0.0
  %2796 = vmatprep.subr.mxu0 0.0
  %2797 = vmatpush1.msra.mxu0 0.0
  %2798 = vmatprep.subr.mxu0 0.0
  %2799 = vmatpush1.msra.mxu0 0.0
  %2800 = vmatprep.subr.mxu0 0.0
  %2801 = vmatpush1.msra.mxu0 0.0
  %2802 = vmatprep.subr.mxu0 0.0
  %2803 = vmatpush1.msra.mxu0 0.0
  %2804 = vmatprep.subr.mxu0 0.0
  %2805 = vmatpush1.msra.mxu0 0.0
  %2806 = vmatprep.subr.mxu0 0.0
  %2807 = vmatpush1.msra.mxu0 0.0
  %2808 = vmatprep.subr.mxu0 0.0
  %2809 = vmatpush1.msra.mxu0 0.0
  %2810 = vmatprep.subr.mxu0 0.0
  %2811 = vmatpush1.msra.mxu0 0.0
  %2812 = vmatprep.subr.mxu0 0.0
  %2813 = vmatpush1.msra.mxu0 0.0
  %2814 = vmatprep.subr.mxu0 0.0
  %2815 = vmatpush1.msra.mxu0 0.0
  %2816 = vmatprep.subr.mxu0 0.0
  %2817 = vmatpush1.msra.mxu0 0.0
  %2818 = vmatprep.subr.mxu0 0.0
  %2819 = vmatpush1.msra.mxu0 0.0
  %2820 = vmatprep.subr.mxu0 0.0
  %2821 = vmatpush1.msra.mxu0 0.0
  %2822 = vmatprep.subr.mxu0 0.0
  %2823 = vmatpush1.msra.mxu0 0.0
  %2824 = vmatprep.subr.mxu0 0.0
  %2825 = vmatpush1.msra.mxu0 0.0
  %2826 = vmatprep.subr.mxu0 0.0
  %2827 = vmatpush1.msra.mxu0 0.0
  %2828 = vmatprep.subr.mxu0 0.0
  %2829 = vmatpush1.msra.mxu0 0.0
  %2830 = vmatprep.subr.mxu0 0.0
  %2831 = vmatpush1.msra.mxu0 0.0
  %2832 = vmatprep.subr.mxu0 0.0
  %2833 = vmatpush1.msra.mxu0 0.0
  %2834 = vmatprep.subr.mxu0 0.0
  %2835 = vmatpush1.msra.mxu0 0.0
  %2836 = vmatprep.subr.mxu0 0.0
  %2837 = vmatpush1.msra.mxu0 0.0
  %2838 = vmatprep.subr.mxu0 0.0
  %2839 = vmatpush1.msra.mxu0 0.0
  %2840 = vmatprep.subr.mxu0 0.0
  %2841 = vmatpush1.msra.mxu0 0.0
  %2842 = vmatprep.subr.mxu0 0.0
  %2843 = vmatpush1.msra.mxu0 0.0
  %2844 = vmatprep.subr.mxu0 0.0
  %2845 = vmatpush1.msra.mxu0 0.0
  %2846 = vmatprep.subr.mxu0 0.0
  %2847 = vmatpush1.msra.mxu0 0.0
  %2848 = vmatprep.subr.mxu0 0.0
  %2849 = vmatpush1.msra.mxu0 0.0
  %2850 = vmatprep.subr.mxu0 0.0
  %2851 = vmatpush1.msra.mxu0 0.0
  %2852 = vmatprep.subr.mxu0 0.0
  %2853 = vmatpush1.msra.mxu0 0.0
  %2854 = vmatprep.mubr.f32.mxu0 0.0
  %v2855 = vand.u32 %v2707, 4294901760
  %2856 = vmatmul.mubr.f32.gmra.mrb[0].mxu0 %v2855
  %v2857 = vpop.f32.mrb[0].mxu0
  %v2858 = vadd.f32 %v2782, %v2857
  %v2859 = vpop.f32.mrb[0].mxu0
  %2860 = vdwg.mxu0
  %2861 = vmatprep.subr.mxu0 0.0
  %v2862 = vand.u32 %v49, 4294901760
  %v2863 = vsub.f32 %v49, %v2862
  %2864 = vmatpush1.msra.mxu0 %v2863
  %2865 = vmatprep.subr.mxu0 0.0
  %2866 = vmatpush1.msra.mxu0 0.0
  %2867 = vmatprep.subr.mxu0 0.0
  %2868 = vmatpush1.msra.mxu0 0.0
  %2869 = vmatprep.subr.mxu0 0.0
  %2870 = vmatpush1.msra.mxu0 0.0
  %2871 = vmatprep.subr.mxu0 0.0
  %2872 = vmatpush1.msra.mxu0 0.0
  %2873 = vmatprep.subr.mxu0 0.0
  %2874 = vmatpush1.msra.mxu0 0.0
  %2875 = vmatprep.subr.mxu0 0.0
  %2876 = vmatpush1.msra.mxu0 0.0
  %2877 = vmatprep.subr.mxu0 0.0
  %2878 = vmatpush1.msra.mxu0 0.0
  %2879 = vmatprep.subr.mxu0 0.0
  %2880 = vmatpush1.msra.mxu0 0.0
  %2881 = vmatprep.subr.mxu0 0.0
  %2882 = vmatpush1.msra.mxu0 0.0
  %2883 = vmatprep.subr.mxu0 0.0
  %2884 = vmatpush1.msra.mxu0 0.0
  %2885 = vmatprep.subr.mxu0 0.0
  %2886 = vmatpush1.msra.mxu0 0.0
  %2887 = vmatprep.subr.mxu0 0.0
  %2888 = vmatpush1.msra.mxu0 0.0
  %2889 = vmatprep.subr.mxu0 0.0
  %2890 = vmatpush1.msra.mxu0 0.0
  %2891 = vmatprep.subr.mxu0 0.0
  %2892 = vmatpush1.msra.mxu0 0.0
  %2893 = vmatprep.subr.mxu0 0.0
  %2894 = vmatpush1.msra.mxu0 0.0
  %2895 = vmatprep.subr.mxu0 0.0
  %2896 = vmatpush1.msra.mxu0 0.0
  %2897 = vmatprep.subr.mxu0 0.0
  %2898 = vmatpush1.msra.mxu0 0.0
  %2899 = vmatprep.subr.mxu0 0.0
  %2900 = vmatpush1.msra.mxu0 0.0
  %2901 = vmatprep.subr.mxu0 0.0
  %2902 = vmatpush1.msra.mxu0 0.0
  %2903 = vmatprep.subr.mxu0 0.0
  %2904 = vmatpush1.msra.mxu0 0.0
  %2905 = vmatprep.subr.mxu0 0.0
  %2906 = vmatpush1.msra.mxu0 0.0
  %2907 = vmatprep.subr.mxu0 0.0
  %2908 = vmatpush1.msra.mxu0 0.0
  %2909 = vmatprep.subr.mxu0 0.0
  %2910 = vmatpush1.msra.mxu0 0.0
  %2911 = vmatprep.subr.mxu0 0.0
  %2912 = vmatpush1.msra.mxu0 0.0
  %2913 = vmatprep.subr.mxu0 0.0
  %2914 = vmatpush1.msra.mxu0 0.0
  %2915 = vmatprep.subr.mxu0 0.0
  %2916 = vmatpush1.msra.mxu0 0.0
  %2917 = vmatprep.subr.mxu0 0.0
  %2918 = vmatpush1.msra.mxu0 0.0
  %2919 = vmatprep.subr.mxu0 0.0
  %2920 = vmatpush1.msra.mxu0 0.0
  %2921 = vmatprep.subr.mxu0 0.0
  %2922 = vmatpush1.msra.mxu0 0.0
  %2923 = vmatprep.subr.mxu0 0.0
  %2924 = vmatpush1.msra.mxu0 0.0
  %2925 = vmatprep.subr.mxu0 0.0
  %2926 = vmatpush1.msra.mxu0 0.0
  %2927 = vmatprep.mubr.f32.mxu0 0.0
  %v2928 = vand.u32 %v2707, 4294901760
  %v2929 = vsub.f32 %v2707, %v2928
  %2930 = vmatmul.mubr.f32.gmra.mrb[0].mxu0 %v2929
  %v2931 = vpop.f32.mrb[0].mxu0
  %v2932 = vadd.f32 %v2858, %v2931
  %v2933 = vpop.f32.mrb[0].mxu0
  %2934 = vdwg.mxu0
  %2935 = vmatprep.subr.mxu0 0.0
  %v2936 = vand.u32 %v49, 4294901760
  %2937 = vmatpush1.msra.mxu0 %v2936
  %2938 = vmatprep.subr.mxu0 0.0
  %2939 = vmatpush1.msra.mxu0 0.0
  %2940 = vmatprep.subr.mxu0 0.0
  %2941 = vmatpush1.msra.mxu0 0.0
  %2942 = vmatprep.subr.mxu0 0.0
  %2943 = vmatpush1.msra.mxu0 0.0
  %2944 = vmatprep.subr.mxu0 0.0
  %2945 = vmatpush1.msra.mxu0 0.0
  %2946 = vmatprep.subr.mxu0 0.0
  %2947 = vmatpush1.msra.mxu0 0.0
  %2948 = vmatprep.subr.mxu0 0.0
  %2949 = vmatpush1.msra.mxu0 0.0
  %2950 = vmatprep.subr.mxu0 0.0
  %2951 = vmatpush1.msra.mxu0 0.0
  %2952 = vmatprep.subr.mxu0 0.0
  %2953 = vmatpush1.msra.mxu0 0.0
  %2954 = vmatprep.subr.mxu0 0.0
  %2955 = vmatpush1.msra.mxu0 0.0
  %2956 = vmatprep.subr.mxu0 0.0
  %2957 = vmatpush1.msra.mxu0 0.0
  %2958 = vmatprep.subr.mxu0 0.0
  %2959 = vmatpush1.msra.mxu0 0.0
  %2960 = vmatprep.subr.mxu0 0.0
  %2961 = vmatpush1.msra.mxu0 0.0
  %2962 = vmatprep.subr.mxu0 0.0
  %2963 = vmatpush1.msra.mxu0 0.0
  %2964 = vmatprep.subr.mxu0 0.0
  %2965 = vmatpush1.msra.mxu0 0.0
  %2966 = vmatprep.subr.mxu0 0.0
  %2967 = vmatpush1.msra.mxu0 0.0
  %2968 = vmatprep.subr.mxu0 0.0
  %2969 = vmatpush1.msra.mxu0 0.0
  %2970 = vmatprep.subr.mxu0 0.0
  %2971 = vmatpush1.msra.mxu0 0.0
  %2972 = vmatprep.subr.mxu0 0.0
  %2973 = vmatpush1.msra.mxu0 0.0
  %2974 = vmatprep.subr.mxu0 0.0
  %2975 = vmatpush1.msra.mxu0 0.0
  %2976 = vmatprep.subr.mxu0 0.0
  %2977 = vmatpush1.msra.mxu0 0.0
  %2978 = vmatprep.subr.mxu0 0.0
  %2979 = vmatpush1.msra.mxu0 0.0
  %2980 = vmatprep.subr.mxu0 0.0
  %2981 = vmatpush1.msra.mxu0 0.0
  %2982 = vmatprep.subr.mxu0 0.0
  %2983 = vmatpush1.msra.mxu0 0.0
  %2984 = vmatprep.subr.mxu0 0.0
  %2985 = vmatpush1.msra.mxu0 0.0
  %2986 = vmatprep.subr.mxu0 0.0
  %2987 = vmatpush1.msra.mxu0 0.0
  %2988 = vmatprep.subr.mxu0 0.0
  %2989 = vmatpush1.msra.mxu0 0.0
  %2990 = vmatprep.subr.mxu0 0.0
  %2991 = vmatpush1.msra.mxu0 0.0
  %2992 = vmatprep.subr.mxu0 0.0
  %2993 = vmatpush1.msra.mxu0 0.0
  %2994 = vmatprep.subr.mxu0 0.0
  %2995 = vmatpush1.msra.mxu0 0.0
  %2996 = vmatprep.subr.mxu0 0.0
  %2997 = vmatpush1.msra.mxu0 0.0
  %2998 = vmatprep.subr.mxu0 0.0
  %2999 = vmatpush1.msra.mxu0 0.0
  %3000 = vmatprep.mubr.f32.mxu0 0.0
  %v3001 = vand.u32 %v2707, 4294901760
  %v3002 = vsub.f32 %v2707, %v3001
  %v3003 = vand.u32 %v3002, 4294901760
  %3004 = vmatmul.mubr.f32.gmra.mrb[0].mxu0 %v3003
  %v3005 = vpop.f32.mrb[0].mxu0
  %v3006 = vadd.f32 %v2932, %v3005
  %v3007 = vpop.f32.mrb[0].mxu0
  %3008 = vdwg.mxu0
  %3009 = vmatprep.subr.mxu0 0.0
  %v3010 = vand.u32 %v49, 4294901760
  %v3011 = vsub.f32 %v49, %v3010
  %v3012 = vand.u32 %v3011, 4294901760
  %3013 = vmatpush1.msra.mxu0 %v3012
  %3014 = vmatprep.subr.mxu0 0.0
  %3015 = vmatpush1.msra.mxu0 0.0
  %3016 = vmatprep.subr.mxu0 0.0
  %3017 = vmatpush1.msra.mxu0 0.0
  %3018 = vmatprep.subr.mxu0 0.0
  %3019 = vmatpush1.msra.mxu0 0.0
  %3020 = vmatprep.subr.mxu0 0.0
  %3021 = vmatpush1.msra.mxu0 0.0
  %3022 = vmatprep.subr.mxu0 0.0
  %3023 = vmatpush1.msra.mxu0 0.0
  %3024 = vmatprep.subr.mxu0 0.0
  %3025 = vmatpush1.msra.mxu0 0.0
  %3026 = vmatprep.subr.mxu0 0.0
  %3027 = vmatpush1.msra.mxu0 0.0
  %3028 = vmatprep.subr.mxu0 0.0
  %3029 = vmatpush1.msra.mxu0 0.0
  %3030 = vmatprep.subr.mxu0 0.0
  %3031 = vmatpush1.msra.mxu0 0.0
  %3032 = vmatprep.subr.mxu0 0.0
  %3033 = vmatpush1.msra.mxu0 0.0
  %3034 = vmatprep.subr.mxu0 0.0
  %3035 = vmatpush1.msra.mxu0 0.0
  %3036 = vmatprep.subr.mxu0 0.0
  %3037 = vmatpush1.msra.mxu0 0.0
  %3038 = vmatprep.subr.mxu0 0.0
  %3039 = vmatpush1.msra.mxu0 0.0
  %3040 = vmatprep.subr.mxu0 0.0
  %3041 = vmatpush1.msra.mxu0 0.0
  %3042 = vmatprep.subr.mxu0 0.0
  %3043 = vmatpush1.msra.mxu0 0.0
  %3044 = vmatprep.subr.mxu0 0.0
  %3045 = vmatpush1.msra.mxu0 0.0
  %3046 = vmatprep.subr.mxu0 0.0
  %3047 = vmatpush1.msra.mxu0 0.0
  %3048 = vmatprep.subr.mxu0 0.0
  %3049 = vmatpush1.msra.mxu0 0.0
  %3050 = vmatprep.subr.mxu0 0.0
  %3051 = vmatpush1.msra.mxu0 0.0
  %3052 = vmatprep.subr.mxu0 0.0
  %3053 = vmatpush1.msra.mxu0 0.0
  %3054 = vmatprep.subr.mxu0 0.0
  %3055 = vmatpush1.msra.mxu0 0.0
  %3056 = vmatprep.subr.mxu0 0.0
  %3057 = vmatpush1.msra.mxu0 0.0
  %3058 = vmatprep.subr.mxu0 0.0
  %3059 = vmatpush1.msra.mxu0 0.0
  %3060 = vmatprep.subr.mxu0 0.0
  %3061 = vmatpush1.msra.mxu0 0.0
  %3062 = vmatprep.subr.mxu0 0.0
  %3063 = vmatpush1.msra.mxu0 0.0
  %3064 = vmatprep.subr.mxu0 0.0
  %3065 = vmatpush1.msra.mxu0 0.0
  %3066 = vmatprep.subr.mxu0 0.0
  %3067 = vmatpush1.msra.mxu0 0.0
  %3068 = vmatprep.subr.mxu0 0.0
  %3069 = vmatpush1.msra.mxu0 0.0
  %3070 = vmatprep.subr.mxu0 0.0
  %3071 = vmatpush1.msra.mxu0 0.0
  %3072 = vmatprep.subr.mxu0 0.0
  %3073 = vmatpush1.msra.mxu0 0.0
  %3074 = vmatprep.subr.mxu0 0.0
  %3075 = vmatpush1.msra.mxu0 0.0
  %3076 = vmatprep.mubr.f32.mxu0 0.0
  %v3077 = vand.u32 %v2707, 4294901760
  %3078 = vmatmul.mubr.f32.gmra.mrb[0].mxu0 %v3077
  %v3079 = vpop.f32.mrb[0].mxu0
  %v3080 = vadd.f32 %v3006, %v3079
  %v3081 = vpop.f32.mrb[0].mxu0
  %3082 = vdwg.mxu0
  %3083 = vmatprep.subr.mxu0 0.0
  %v3084 = vand.u32 %v49, 4294901760
  %3085 = vmatpush1.msra.mxu0 %v3084
  %3086 = vmatprep.subr.mxu0 0.0
  %3087 = vmatpush1.msra.mxu0 0.0
  %3088 = vmatprep.subr.mxu0 0.0
  %3089 = vmatpush1.msra.mxu0 0.0
  %3090 = vmatprep.subr.mxu0 0.0
  %3091 = vmatpush1.msra.mxu0 0.0
  %3092 = vmatprep.subr.mxu0 0.0
  %3093 = vmatpush1.msra.mxu0 0.0
  %3094 = vmatprep.subr.mxu0 0.0
  %3095 = vmatpush1.msra.mxu0 0.0
  %3096 = vmatprep.subr.mxu0 0.0
  %3097 = vmatpush1.msra.mxu0 0.0
  %3098 = vmatprep.subr.mxu0 0.0
  %3099 = vmatpush1.msra.mxu0 0.0
  %3100 = vmatprep.subr.mxu0 0.0
  %3101 = vmatpush1.msra.mxu0 0.0
  %3102 = vmatprep.subr.mxu0 0.0
  %3103 = vmatpush1.msra.mxu0 0.0
  %3104 = vmatprep.subr.mxu0 0.0
  %3105 = vmatpush1.msra.mxu0 0.0
  %3106 = vmatprep.subr.mxu0 0.0
  %3107 = vmatpush1.msra.mxu0 0.0
  %3108 = vmatprep.subr.mxu0 0.0
  %3109 = vmatpush1.msra.mxu0 0.0
  %3110 = vmatprep.subr.mxu0 0.0
  %3111 = vmatpush1.msra.mxu0 0.0
  %3112 = vmatprep.subr.mxu0 0.0
  %3113 = vmatpush1.msra.mxu0 0.0
  %3114 = vmatprep.subr.mxu0 0.0
  %3115 = vmatpush1.msra.mxu0 0.0
  %3116 = vmatprep.subr.mxu0 0.0
  %3117 = vmatpush1.msra.mxu0 0.0
  %3118 = vmatprep.subr.mxu0 0.0
  %3119 = vmatpush1.msra.mxu0 0.0
  %3120 = vmatprep.subr.mxu0 0.0
  %3121 = vmatpush1.msra.mxu0 0.0
  %3122 = vmatprep.subr.mxu0 0.0
  %3123 = vmatpush1.msra.mxu0 0.0
  %3124 = vmatprep.subr.mxu0 0.0
  %3125 = vmatpush1.msra.mxu0 0.0
  %3126 = vmatprep.subr.mxu0 0.0
  %3127 = vmatpush1.msra.mxu0 0.0
  %3128 = vmatprep.subr.mxu0 0.0
  %3129 = vmatpush1.msra.mxu0 0.0
  %3130 = vmatprep.subr.mxu0 0.0
  %3131 = vmatpush1.msra.mxu0 0.0
  %3132 = vmatprep.subr.mxu0 0.0
  %3133 = vmatpush1.msra.mxu0 0.0
  %3134 = vmatprep.subr.mxu0 0.0
  %3135 = vmatpush1.msra.mxu0 0.0
  %3136 = vmatprep.subr.mxu0 0.0
  %3137 = vmatpush1.msra.mxu0 0.0
  %3138 = vmatprep.subr.mxu0 0.0
  %3139 = vmatpush1.msra.mxu0 0.0
  %3140 = vmatprep.subr.mxu0 0.0
  %3141 = vmatpush1.msra.mxu0 0.0
  %3142 = vmatprep.subr.mxu0 0.0
  %3143 = vmatpush1.msra.mxu0 0.0
  %3144 = vmatprep.subr.mxu0 0.0
  %3145 = vmatpush1.msra.mxu0 0.0
  %3146 = vmatprep.subr.mxu0 0.0
  %3147 = vmatpush1.msra.mxu0 0.0
  %3148 = vmatprep.mubr.f32.mxu0 0.0
  %v3149 = vand.u32 %v2707, 4294901760
  %3150 = vmatmul.mubr.f32.gmra.mrb[0].mxu0 %v3149
  %v3151 = vpop.f32.mrb[0].mxu0
  %v3152 = vadd.f32 %v3080, %v3151
  %v3153 = vpop.f32.mrb[0].mxu0
  %3154 = vdwg.mxu0
  %v3155 = vlaneseq
  %v3156 = vshrl.u32 %v3155, 7
  %v3157 = vsub.s32 0, %v3156
  %v3158 = vrot.slane %v3152, %v3157
  %v3159 = vmul.f32 %v2000, %v3158
  %v3160 = vmul.f32 %v2001, %v3158
  %v3161 = vmul.f32 %v2002, %v3158
  %v3162 = vmul.f32 %v2003, %v3158
  %v3163 = vlaneseq
  %v3164 = vshrl.u32 %v3163, 7
  %v3165 = vsub.s32 1, %v3164
  %v3166 = vrot.slane %v3152, %v3165
  %v3167 = vadd.f32 %v3159, %v3166
  %v3168 = vadd.f32 %v3160, %v3166
  %v3169 = vadd.f32 %v3161, %v3166
  %v3170 = vadd.f32 %v3162, %v3166
  %v3171 = vmax.f32 %v3167, 0.0
  %v3172 = vmax.f32 %v3168, 0.0
  %v3173 = vmax.f32 %v3169, 0.0
  %v3174 = vmax.f32 %v3170, 0.0
  %3175 = vst [vmem:[%s9] sm:$0xff] %v3171
  %3176 = vst [vmem:[%s9 + $0x8] sm:$0xff] %v3172
  %3177 = vst [vmem:[%s9 + $0x10] sm:$0xff] %v3173
  %3178 = vst [vmem:[%s9 + $0x18] sm:$0xff] %v3174
  // Predicated region
  $region38: #{lastconv_forward.1} parent=0 // pred_check
    _
  $region39: #{lastconv_forward.1} parent=0 // pred_check_branch
    %3180 = sbr.rel (0) target = $region41
  $region40: #{lastconv_forward.1} parent=0 // pred_region
    _
  $region41: #{lastconv_forward.1} parent=0 // pred_fallthru
    _
  // Predicated region
  $region42: #{lastconv_forward.1} parent=0 // pred_check
    _
  $region43: #{lastconv_forward.1} parent=0 // pred_check_branch
    %3182 = sbr.rel (0) target = $region45
  $region44: #{lastconv_forward.1} parent=0 // pred_region
    _
  $region45: #{lastconv_forward.1} parent=0 // pred_fallthru
    _

</llo_original>
